<compile_context>
chip_gen: v6e
topology: v6e:2x2x1
jax: 0.10.0
libtpu: 0.0.40
codegen_flags: <defaults>
</compile_context>

<pallas_src>
import jax
import jax.numpy as jnp
from jax import lax
from jax.experimental import pallas as pl
from jax.experimental.pallas import tpu as pltpu


def neural_ode_kernel(dt_ref, dt3_ref, dt8_ref,     # scalar-prefetch (SMEM): dt, dt/3, dt/8
                      y0_ref,                       # (B, H)   initial state (f32)
                      w1_ref, b1_ref,               # (H, H) bf16, (1, H) f32   ODEFunc layer 1
                      w2_ref, b2_ref,               # (H, H) bf16, (1, H) f32   ODEFunc layer 2
                      wo_ref, bo_ref,               # (H, O) f32,  (1, O) f32   linear_out
                      out_ref):                     # (B, O)   output
    B, H = y0_ref.shape

    # Hoist weight loads and bias broadcasts out of the RK4 stages.
    w1 = w1_ref[...]                                # already bf16
    w2 = w2_ref[...]                                # already bf16
    b1 = jnp.broadcast_to(b1_ref[...], (B, H))      # f32
    b2 = jnp.broadcast_to(b2_ref[...], (B, H))      # f32

    def f(y):
        # bf16 MXU matmuls with f32 accumulation; everything else stays f32.
        h = jnp.tanh(
            jnp.dot(y.astype(jnp.bfloat16), w1, preferred_element_type=jnp.float32) + b1
        )
        return jnp.dot(h.astype(jnp.bfloat16), w2, preferred_element_type=jnp.float32) + b2

    n_steps = dt_ref.shape[0]                       # static (T - 1)

    def rk38_step(i, y):
        # Single SMEM scalar load per precomputed step quantity.
        dt = dt_ref[i]
        dt3 = dt3_ref[i]                            # dt / 3
        dt8 = dt8_ref[i]                            # dt / 8
        # torchdiffeq rk4_alt_step_func (3/8 rule):
        k1 = f(y)
        k2 = f(y + dt3 * k1)
        k3 = f(y + dt * k2 - dt3 * k1)
        k4 = f(y + dt * (k1 - k2 + k3))
        return y + dt8 * (k1 + 3.0 * (k2 + k3) + k4)

    # Whole time integration inside one kernel invocation; y lives in vregs.
    # Full unroll for small step counts (LLO scheduling), bounded unroll for long grids.
    unroll = True if n_steps <= 16 else 4
    y_final = lax.fori_loop(0, n_steps, rk38_step, y0_ref[...], unroll=unroll)

    # solution[-1] == y_final ; apply linear_out in f32.
    out_ref[...] = (
        jnp.dot(y_final, wo_ref[...], preferred_element_type=jnp.float32) + bo_ref[...]
    ).astype(out_ref.dtype)


def neural_ode_forward(x, params):
    """x: (B, T, F) float32. Returns (B, out_features) float32."""
    w1, b1, w2, b2, wo, bo = params
    B, T, F = x.shape
    H = F - 1
    O = wo.shape[1]
    assert w1.shape == (H, H) and w2.shape == (H, H) and wo.shape[0] == H
    # odeint needs at least two time points to take a step.
    assert T >= 2, "NeuralODEModel forward requires seq_len >= 2"

    # Tiny host-side preprocessing (fuses into one small XLA op): time grid of batch
    # row 0 (matches PyTorch t[0]), step sizes and their precomputed multiples.
    t = x[0, :, 0].astype(jnp.float32)
    dt = t[1:] - t[:-1]                      # (T-1,)
    dt3 = dt * jnp.float32(1.0 / 3.0)        # dt / 3
    dt8 = dt * jnp.float32(0.125)            # dt / 8
    y0 = x[:, -1, 1:].astype(jnp.float32)    # (B, H)

    b1r = b1.reshape(1, H).astype(jnp.float32)
    b2r = b2.reshape(1, H).astype(jnp.float32)
    bor = bo.reshape(1, O).astype(jnp.float32)

    # Every array is one full-array block; index_maps get (grid_i, *prefetch_refs).
    full = lambda i, d0, d1, d2: (0, 0)

    out = pl.pallas_call(
        neural_ode_kernel,
        out_shape=jax.ShapeDtypeStruct((B, O), jnp.float32),
        grid_spec=pltpu.PrefetchScalarGridSpec(
            num_scalar_prefetch=3,           # dt, dt/3, dt/8 -> SMEM
            grid=(1,),                       # single invocation; time loop is in-kernel
            in_specs=[
                pl.BlockSpec((B, H), full),  # y0
                pl.BlockSpec((H, H), full),  # w1 (bf16)
                pl.BlockSpec((1, H), full),  # b1
                pl.BlockSpec((H, H), full),  # w2 (bf16)
                pl.BlockSpec((1, H), full),  # b2
                pl.BlockSpec((H, O), full),  # wo
                pl.BlockSpec((1, O), full),  # bo
            ],
            out_specs=pl.BlockSpec((B, O), full),
        ),
        compiler_params=pltpu.CompilerParams(
            dimension_semantics=("arbitrary",),
        ),
    )(dt, dt3, dt8, y0,
      w1.astype(jnp.bfloat16), b1r, w2.astype(jnp.bfloat16), b2r,
      wo.astype(jnp.float32), bor)
    return out


def neural_ode_reference(x, params):
    """Pure-JAX f32 reference (same 3/8-rule RK4 as torchdiffeq's 'rk4')."""
    w1, b1, w2, b2, wo, bo = params
    t = x[0, :, 0]
    y = x[:, -1, 1:]

    def f(y):
        return jnp.tanh(y @ w1 + b1) @ w2 + b2

    for i in range(t.shape[0] - 1):
        dt = t[i + 1] - t[i]
        k1 = f(y)
        k2 = f(y + dt / 3.0 * k1)
        k3 = f(y + dt * (k2 - k1 / 3.0))
        k4 = f(y + dt * (k1 - k2 + k3))
        y = y + dt / 8.0 * (k1 + 3.0 * (k2 + k3) + k4)
    return y @ wo + bo


if __name__ == "__main__":
    # Small shapes consistent with the module: in_features = 33 so that the ODE state
    # dim (in_features - 1) equals hidden_size = 32 (required for linear_out to apply).
    B, T, H, O = 4, 8, 32, 8
    F = H + 1  # in_features

    key = jax.random.PRNGKey(0)
    kx, k1, k2, k3, k4, k5, k6 = jax.random.split(key, 7)

    # Deterministic synthetic parameters (module __init__ shapes).
    w1 = jax.random.normal(k1, (H, H), jnp.float32) * 0.1
    b1 = jax.random.normal(k2, (H,), jnp.float32) * 0.1
    w2 = jax.random.normal(k3, (H, H), jnp.float32) * 0.1
    b2 = jax.random.normal(k4, (H,), jnp.float32) * 0.1
    wo = jax.random.normal(k5, (H, O), jnp.float32) * 0.1
    bo = jax.random.normal(k6, (O,), jnp.float32) * 0.1
    params = (w1, b1, w2, b2, wo, bo)

    # Input: (B, T, F); channel 0 is a monotone time grid shared across the batch.
    x = jax.random.normal(kx, (B, T, F), jnp.float32) * 0.5
    time_grid = jnp.linspace(0.0, 1.0, T, dtype=jnp.float32)
    x = x.at[:, :, 0].set(jnp.broadcast_to(time_grid, (B, T)))

    out = neural_ode_forward(x, params)
    out = jax.block_until_ready(out)

    ref = neural_ode_reference(x, params)
    assert out.shape == (B, O)
    # bf16 matmul inputs + f32 accumulation: well within 1e-2 at these shapes/scales.
    assert jnp.allclose(out, ref, rtol=1e-2, atol=1e-2), (out, ref)

    print("KERNEL_OK")
</pallas_src>

<mosaic_0001>
module attributes {stable_mosaic.version = 11 : i64} {
  func.func @neural_ode_kernel(%arg0: i32, %arg1: memref<7xf32, #tpu.memory_space<smem>>, %arg2: memref<7xf32, #tpu.memory_space<smem>>, %arg3: memref<7xf32, #tpu.memory_space<smem>>, %arg4: memref<4x32xf32, #tpu.memory_space<vmem>>, %arg5: memref<32x32xbf16, #tpu.memory_space<vmem>>, %arg6: memref<1x32xf32, #tpu.memory_space<vmem>>, %arg7: memref<32x32xbf16, #tpu.memory_space<vmem>>, %arg8: memref<1x32xf32, #tpu.memory_space<vmem>>, %arg9: memref<32x8xf32, #tpu.memory_space<vmem>>, %arg10: memref<1x8xf32, #tpu.memory_space<vmem>>, %arg11: memref<4x8xf32, #tpu.memory_space<vmem>>) attributes {dimension_semantics = [#tpu.dimension_semantics<arbitrary>], iteration_bounds = array<i64: 1>, scalar_prefetch = 3 : i64, scratch_operands = 0 : i64, tpu.core_type = #tpu.core_type<tc>, window_params = [{pipeline_mode = #tpu.pipeline_mode<synchronous>, transform_indices = @transform_0, window_bounds = array<i64: 4, 32>}, {pipeline_mode = #tpu.pipeline_mode<synchronous>, transform_indices = @transform_1, window_bounds = array<i64: 32, 32>}, {pipeline_mode = #tpu.pipeline_mode<synchronous>, transform_indices = @transform_2, window_bounds = array<i64: 1, 32>}, {pipeline_mode = #tpu.pipeline_mode<synchronous>, transform_indices = @transform_3, window_bounds = array<i64: 32, 32>}, {pipeline_mode = #tpu.pipeline_mode<synchronous>, transform_indices = @transform_4, window_bounds = array<i64: 1, 32>}, {pipeline_mode = #tpu.pipeline_mode<synchronous>, transform_indices = @transform_5, window_bounds = array<i64: 32, 8>}, {pipeline_mode = #tpu.pipeline_mode<synchronous>, transform_indices = @transform_6, window_bounds = array<i64: 1, 8>}, {pipeline_mode = #tpu.pipeline_mode<synchronous>, transform_indices = @transform_7, window_bounds = array<i64: 4, 8>}]} {
    %c0 = arith.constant 0 : index
    %c0_0 = arith.constant 0 : index
    %0 = vector.load %arg5[%c0, %c0_0] : memref<32x32xbf16, #tpu.memory_space<vmem>>, vector<32x32xbf16>
    %c0_1 = arith.constant 0 : index
    %c0_2 = arith.constant 0 : index
    %1 = vector.load %arg7[%c0_1, %c0_2] : memref<32x32xbf16, #tpu.memory_space<vmem>>, vector<32x32xbf16>
    %c0_3 = arith.constant 0 : index
    %c0_4 = arith.constant 0 : index
    %2 = vector.load %arg6[%c0_3, %c0_4] : memref<1x32xf32, #tpu.memory_space<vmem>>, vector<1x32xf32>
    %3 = vector.shape_cast %2 : vector<1x32xf32> to vector<1x32xf32>
    %4 = vector.broadcast %3 : vector<1x32xf32> to vector<4x32xf32>
    %c0_5 = arith.constant 0 : index
    %c0_6 = arith.constant 0 : index
    %5 = vector.load %arg8[%c0_5, %c0_6] : memref<1x32xf32, #tpu.memory_space<vmem>>, vector<1x32xf32>
    %6 = vector.shape_cast %5 : vector<1x32xf32> to vector<1x32xf32>
    %7 = vector.broadcast %6 : vector<1x32xf32> to vector<4x32xf32>
    %c0_7 = arith.constant 0 : index
    %c0_8 = arith.constant 0 : index
    %8 = vector.load %arg4[%c0_7, %c0_8] : memref<4x32xf32, #tpu.memory_space<vmem>>, vector<4x32xf32>
    %c0_i32 = arith.constant 0 : i32
    %9 = arith.index_cast %c0_i32 : i32 to index
    %10 = memref.load %arg1[%9] : memref<7xf32, #tpu.memory_space<smem>>
    %11 = arith.index_cast %c0_i32 : i32 to index
    %12 = memref.load %arg2[%11] : memref<7xf32, #tpu.memory_space<smem>>
    %13 = arith.index_cast %c0_i32 : i32 to index
    %14 = memref.load %arg3[%13] : memref<7xf32, #tpu.memory_space<smem>>
    %15 = arith.truncf %8 : vector<4x32xf32> to vector<4x32xbf16>
    %cst = arith.constant dense<0.000000e+00> : vector<4x32xf32>
    %16 = tpu.matmul %15, %0, %cst {dimension_numbers = #tpu.dot_dimension_numbers<[1], [0], [0], [1], [0, 0, 1, 1], [], []>} : vector<4x32xbf16>, vector<32x32xbf16>, vector<4x32xf32> -> vector<4x32xf32>
    %17 = arith.addf %16, %4 : vector<4x32xf32>
    %18 = math.tanh %17 : vector<4x32xf32>
    %19 = arith.truncf %18 : vector<4x32xf32> to vector<4x32xbf16>
    %cst_9 = arith.constant dense<0.000000e+00> : vector<4x32xf32>
    %20 = tpu.matmul %19, %1, %cst_9 {dimension_numbers = #tpu.dot_dimension_numbers<[1], [0], [0], [1], [0, 0, 1, 1], [], []>} : vector<4x32xbf16>, vector<32x32xbf16>, vector<4x32xf32> -> vector<4x32xf32>
    %21 = arith.addf %20, %7 : vector<4x32xf32>
    %22 = vector.broadcast %12 : f32 to vector<4x32xf32>
    %23 = arith.mulf %22, %21 : vector<4x32xf32>
    %24 = arith.addf %8, %23 : vector<4x32xf32>
    %25 = arith.truncf %24 : vector<4x32xf32> to vector<4x32xbf16>
    %cst_10 = arith.constant dense<0.000000e+00> : vector<4x32xf32>
    %26 = tpu.matmul %25, %0, %cst_10 {dimension_numbers = #tpu.dot_dimension_numbers<[1], [0], [0], [1], [0, 0, 1, 1], [], []>} : vector<4x32xbf16>, vector<32x32xbf16>, vector<4x32xf32> -> vector<4x32xf32>
    %27 = arith.addf %26, %4 : vector<4x32xf32>
    %28 = math.tanh %27 : vector<4x32xf32>
    %29 = arith.truncf %28 : vector<4x32xf32> to vector<4x32xbf16>
    %cst_11 = arith.constant dense<0.000000e+00> : vector<4x32xf32>
    %30 = tpu.matmul %29, %1, %cst_11 {dimension_numbers = #tpu.dot_dimension_numbers<[1], [0], [0], [1], [0, 0, 1, 1], [], []>} : vector<4x32xbf16>, vector<32x32xbf16>, vector<4x32xf32> -> vector<4x32xf32>
    %31 = arith.addf %30, %7 : vector<4x32xf32>
    %32 = vector.broadcast %10 : f32 to vector<4x32xf32>
    %33 = arith.mulf %32, %31 : vector<4x32xf32>
    %34 = arith.addf %8, %33 : vector<4x32xf32>
    %35 = vector.broadcast %12 : f32 to vector<4x32xf32>
    %36 = arith.mulf %35, %21 : vector<4x32xf32>
    %37 = arith.subf %34, %36 : vector<4x32xf32>
    %38 = arith.truncf %37 : vector<4x32xf32> to vector<4x32xbf16>
    %cst_12 = arith.constant dense<0.000000e+00> : vector<4x32xf32>
    %39 = tpu.matmul %38, %0, %cst_12 {dimension_numbers = #tpu.dot_dimension_numbers<[1], [0], [0], [1], [0, 0, 1, 1], [], []>} : vector<4x32xbf16>, vector<32x32xbf16>, vector<4x32xf32> -> vector<4x32xf32>
    %40 = arith.addf %39, %4 : vector<4x32xf32>
    %41 = math.tanh %40 : vector<4x32xf32>
    %42 = arith.truncf %41 : vector<4x32xf32> to vector<4x32xbf16>
    %cst_13 = arith.constant dense<0.000000e+00> : vector<4x32xf32>
    %43 = tpu.matmul %42, %1, %cst_13 {dimension_numbers = #tpu.dot_dimension_numbers<[1], [0], [0], [1], [0, 0, 1, 1], [], []>} : vector<4x32xbf16>, vector<32x32xbf16>, vector<4x32xf32> -> vector<4x32xf32>
    %44 = arith.addf %43, %7 : vector<4x32xf32>
    %45 = arith.subf %21, %31 : vector<4x32xf32>
    %46 = arith.addf %45, %44 : vector<4x32xf32>
    %47 = vector.broadcast %10 : f32 to vector<4x32xf32>
    %48 = arith.mulf %47, %46 : vector<4x32xf32>
    %49 = arith.addf %8, %48 : vector<4x32xf32>
    %50 = arith.truncf %49 : vector<4x32xf32> to vector<4x32xbf16>
    %cst_14 = arith.constant dense<0.000000e+00> : vector<4x32xf32>
    %51 = tpu.matmul %50, %0, %cst_14 {dimension_numbers = #tpu.dot_dimension_numbers<[1], [0], [0], [1], [0, 0, 1, 1], [], []>} : vector<4x32xbf16>, vector<32x32xbf16>, vector<4x32xf32> -> vector<4x32xf32>
    %52 = arith.addf %51, %4 : vector<4x32xf32>
    %53 = math.tanh %52 : vector<4x32xf32>
    %54 = arith.truncf %53 : vector<4x32xf32> to vector<4x32xbf16>
    %cst_15 = arith.constant dense<0.000000e+00> : vector<4x32xf32>
    %55 = tpu.matmul %54, %1, %cst_15 {dimension_numbers = #tpu.dot_dimension_numbers<[1], [0], [0], [1], [0, 0, 1, 1], [], []>} : vector<4x32xbf16>, vector<32x32xbf16>, vector<4x32xf32> -> vector<4x32xf32>
    %56 = arith.addf %55, %7 : vector<4x32xf32>
    %57 = arith.addf %31, %44 : vector<4x32xf32>
    %cst_16 = arith.constant 3.000000e+00 : f32
    %58 = vector.broadcast %cst_16 : f32 to vector<4x32xf32>
    %59 = arith.mulf %58, %57 : vector<4x32xf32>
    %60 = arith.addf %21, %59 : vector<4x32xf32>
    %61 = arith.addf %60, %56 : vector<4x32xf32>
    %62 = vector.broadcast %14 : f32 to vector<4x32xf32>
    %63 = arith.mulf %62, %61 : vector<4x32xf32>
    %64 = arith.addf %8, %63 : vector<4x32xf32>
    %c1_i32 = arith.constant 1 : i32
    %65 = arith.index_cast %c1_i32 : i32 to index
    %66 = memref.load %arg1[%65] : memref<7xf32, #tpu.memory_space<smem>>
    %67 = arith.index_cast %c1_i32 : i32 to index
    %68 = memref.load %arg2[%67] : memref<7xf32, #tpu.memory_space<smem>>
    %69 = arith.index_cast %c1_i32 : i32 to index
    %70 = memref.load %arg3[%69] : memref<7xf32, #tpu.memory_space<smem>>
    %71 = arith.truncf %64 : vector<4x32xf32> to vector<4x32xbf16>
    %cst_17 = arith.constant dense<0.000000e+00> : vector<4x32xf32>
    %72 = tpu.matmul %71, %0, %cst_17 {dimension_numbers = #tpu.dot_dimension_numbers<[1], [0], [0], [1], [0, 0, 1, 1], [], []>} : vector<4x32xbf16>, vector<32x32xbf16>, vector<4x32xf32> -> vector<4x32xf32>
    %73 = arith.addf %72, %4 : vector<4x32xf32>
    %74 = math.tanh %73 : vector<4x32xf32>
    %75 = arith.truncf %74 : vector<4x32xf32> to vector<4x32xbf16>
    %cst_18 = arith.constant dense<0.000000e+00> : vector<4x32xf32>
    %76 = tpu.matmul %75, %1, %cst_18 {dimension_numbers = #tpu.dot_dimension_numbers<[1], [0], [0], [1], [0, 0, 1, 1], [], []>} : vector<4x32xbf16>, vector<32x32xbf16>, vector<4x32xf32> -> vector<4x32xf32>
    %77 = arith.addf %76, %7 : vector<4x32xf32>
    %78 = vector.broadcast %68 : f32 to vector<4x32xf32>
    %79 = arith.mulf %78, %77 : vector<4x32xf32>
    %80 = arith.addf %64, %79 : vector<4x32xf32>
    %81 = arith.truncf %80 : vector<4x32xf32> to vector<4x32xbf16>
    %cst_19 = arith.constant dense<0.000000e+00> : vector<4x32xf32>
    %82 = tpu.matmul %81, %0, %cst_19 {dimension_numbers = #tpu.dot_dimension_numbers<[1], [0], [0], [1], [0, 0, 1, 1], [], []>} : vector<4x32xbf16>, vector<32x32xbf16>, vector<4x32xf32> -> vector<4x32xf32>
    %83 = arith.addf %82, %4 : vector<4x32xf32>
    %84 = math.tanh %83 : vector<4x32xf32>
    %85 = arith.truncf %84 : vector<4x32xf32> to vector<4x32xbf16>
    %cst_20 = arith.constant dense<0.000000e+00> : vector<4x32xf32>
    %86 = tpu.matmul %85, %1, %cst_20 {dimension_numbers = #tpu.dot_dimension_numbers<[1], [0], [0], [1], [0, 0, 1, 1], [], []>} : vector<4x32xbf16>, vector<32x32xbf16>, vector<4x32xf32> -> vector<4x32xf32>
    %87 = arith.addf %86, %7 : vector<4x32xf32>
    %88 = vector.broadcast %66 : f32 to vector<4x32xf32>
    %89 = arith.mulf %88, %87 : vector<4x32xf32>
    %90 = arith.addf %64, %89 : vector<4x32xf32>
    %91 = vector.broadcast %68 : f32 to vector<4x32xf32>
    %92 = arith.mulf %91, %77 : vector<4x32xf32>
    %93 = arith.subf %90, %92 : vector<4x32xf32>
    %94 = arith.truncf %93 : vector<4x32xf32> to vector<4x32xbf16>
    %cst_21 = arith.constant dense<0.000000e+00> : vector<4x32xf32>
    %95 = tpu.matmul %94, %0, %cst_21 {dimension_numbers = #tpu.dot_dimension_numbers<[1], [0], [0], [1], [0, 0, 1, 1], [], []>} : vector<4x32xbf16>, vector<32x32xbf16>, vector<4x32xf32> -> vector<4x32xf32>
    %96 = arith.addf %95, %4 : vector<4x32xf32>
    %97 = math.tanh %96 : vector<4x32xf32>
    %98 = arith.truncf %97 : vector<4x32xf32> to vector<4x32xbf16>
    %cst_22 = arith.constant dense<0.000000e+00> : vector<4x32xf32>
    %99 = tpu.matmul %98, %1, %cst_22 {dimension_numbers = #tpu.dot_dimension_numbers<[1], [0], [0], [1], [0, 0, 1, 1], [], []>} : vector<4x32xbf16>, vector<32x32xbf16>, vector<4x32xf32> -> vector<4x32xf32>
    %100 = arith.addf %99, %7 : vector<4x32xf32>
    %101 = arith.subf %77, %87 : vector<4x32xf32>
    %102 = arith.addf %101, %100 : vector<4x32xf32>
    %103 = vector.broadcast %66 : f32 to vector<4x32xf32>
    %104 = arith.mulf %103, %102 : vector<4x32xf32>
    %105 = arith.addf %64, %104 : vector<4x32xf32>
    %106 = arith.truncf %105 : vector<4x32xf32> to vector<4x32xbf16>
    %cst_23 = arith.constant dense<0.000000e+00> : vector<4x32xf32>
    %107 = tpu.matmul %106, %0, %cst_23 {dimension_numbers = #tpu.dot_dimension_numbers<[1], [0], [0], [1], [0, 0, 1, 1], [], []>} : vector<4x32xbf16>, vector<32x32xbf16>, vector<4x32xf32> -> vector<4x32xf32>
    %108 = arith.addf %107, %4 : vector<4x32xf32>
    %109 = math.tanh %108 : vector<4x32xf32>
    %110 = arith.truncf %109 : vector<4x32xf32> to vector<4x32xbf16>
    %cst_24 = arith.constant dense<0.000000e+00> : vector<4x32xf32>
    %111 = tpu.matmul %110, %1, %cst_24 {dimension_numbers = #tpu.dot_dimension_numbers<[1], [0], [0], [1], [0, 0, 1, 1], [], []>} : vector<4x32xbf16>, vector<32x32xbf16>, vector<4x32xf32> -> vector<4x32xf32>
    %112 = arith.addf %111, %7 : vector<4x32xf32>
    %113 = arith.addf %87, %100 : vector<4x32xf32>
    %cst_25 = arith.constant 3.000000e+00 : f32
    %114 = vector.broadcast %cst_25 : f32 to vector<4x32xf32>
    %115 = arith.mulf %114, %113 : vector<4x32xf32>
    %116 = arith.addf %77, %115 : vector<4x32xf32>
    %117 = arith.addf %116, %112 : vector<4x32xf32>
    %118 = vector.broadcast %70 : f32 to vector<4x32xf32>
    %119 = arith.mulf %118, %117 : vector<4x32xf32>
    %120 = arith.addf %64, %119 : vector<4x32xf32>
    %c2_i32 = arith.constant 2 : i32
    %121 = arith.index_cast %c2_i32 : i32 to index
    %122 = memref.load %arg1[%121] : memref<7xf32, #tpu.memory_space<smem>>
    %123 = arith.index_cast %c2_i32 : i32 to index
    %124 = memref.load %arg2[%123] : memref<7xf32, #tpu.memory_space<smem>>
    %125 = arith.index_cast %c2_i32 : i32 to index
    %126 = memref.load %arg3[%125] : memref<7xf32, #tpu.memory_space<smem>>
    %127 = arith.truncf %120 : vector<4x32xf32> to vector<4x32xbf16>
    %cst_26 = arith.constant dense<0.000000e+00> : vector<4x32xf32>
    %128 = tpu.matmul %127, %0, %cst_26 {dimension_numbers = #tpu.dot_dimension_numbers<[1], [0], [0], [1], [0, 0, 1, 1], [], []>} : vector<4x32xbf16>, vector<32x32xbf16>, vector<4x32xf32> -> vector<4x32xf32>
    %129 = arith.addf %128, %4 : vector<4x32xf32>
    %130 = math.tanh %129 : vector<4x32xf32>
    %131 = arith.truncf %130 : vector<4x32xf32> to vector<4x32xbf16>
    %cst_27 = arith.constant dense<0.000000e+00> : vector<4x32xf32>
    %132 = tpu.matmul %131, %1, %cst_27 {dimension_numbers = #tpu.dot_dimension_numbers<[1], [0], [0], [1], [0, 0, 1, 1], [], []>} : vector<4x32xbf16>, vector<32x32xbf16>, vector<4x32xf32> -> vector<4x32xf32>
    %133 = arith.addf %132, %7 : vector<4x32xf32>
    %134 = vector.broadcast %124 : f32 to vector<4x32xf32>
    %135 = arith.mulf %134, %133 : vector<4x32xf32>
    %136 = arith.addf %120, %135 : vector<4x32xf32>
    %137 = arith.truncf %136 : vector<4x32xf32> to vector<4x32xbf16>
    %cst_28 = arith.constant dense<0.000000e+00> : vector<4x32xf32>
    %138 = tpu.matmul %137, %0, %cst_28 {dimension_numbers = #tpu.dot_dimension_numbers<[1], [0], [0], [1], [0, 0, 1, 1], [], []>} : vector<4x32xbf16>, vector<32x32xbf16>, vector<4x32xf32> -> vector<4x32xf32>
    %139 = arith.addf %138, %4 : vector<4x32xf32>
    %140 = math.tanh %139 : vector<4x32xf32>
    %141 = arith.truncf %140 : vector<4x32xf32> to vector<4x32xbf16>
    %cst_29 = arith.constant dense<0.000000e+00> : vector<4x32xf32>
    %142 = tpu.matmul %141, %1, %cst_29 {dimension_numbers = #tpu.dot_dimension_numbers<[1], [0], [0], [1], [0, 0, 1, 1], [], []>} : vector<4x32xbf16>, vector<32x32xbf16>, vector<4x32xf32> -> vector<4x32xf32>
    %143 = arith.addf %142, %7 : vector<4x32xf32>
    %144 = vector.broadcast %122 : f32 to vector<4x32xf32>
    %145 = arith.mulf %144, %143 : vector<4x32xf32>
    %146 = arith.addf %120, %145 : vector<4x32xf32>
    %147 = vector.broadcast %124 : f32 to vector<4x32xf32>
    %148 = arith.mulf %147, %133 : vector<4x32xf32>
    %149 = arith.subf %146, %148 : vector<4x32xf32>
    %150 = arith.truncf %149 : vector<4x32xf32> to vector<4x32xbf16>
    %cst_30 = arith.constant dense<0.000000e+00> : vector<4x32xf32>
    %151 = tpu.matmul %150, %0, %cst_30 {dimension_numbers = #tpu.dot_dimension_numbers<[1], [0], [0], [1], [0, 0, 1, 1], [], []>} : vector<4x32xbf16>, vector<32x32xbf16>, vector<4x32xf32> -> vector<4x32xf32>
    %152 = arith.addf %151, %4 : vector<4x32xf32>
    %153 = math.tanh %152 : vector<4x32xf32>
    %154 = arith.truncf %153 : vector<4x32xf32> to vector<4x32xbf16>
    %cst_31 = arith.constant dense<0.000000e+00> : vector<4x32xf32>
    %155 = tpu.matmul %154, %1, %cst_31 {dimension_numbers = #tpu.dot_dimension_numbers<[1], [0], [0], [1], [0, 0, 1, 1], [], []>} : vector<4x32xbf16>, vector<32x32xbf16>, vector<4x32xf32> -> vector<4x32xf32>
    %156 = arith.addf %155, %7 : vector<4x32xf32>
    %157 = arith.subf %133, %143 : vector<4x32xf32>
    %158 = arith.addf %157, %156 : vector<4x32xf32>
    %159 = vector.broadcast %122 : f32 to vector<4x32xf32>
    %160 = arith.mulf %159, %158 : vector<4x32xf32>
    %161 = arith.addf %120, %160 : vector<4x32xf32>
    %162 = arith.truncf %161 : vector<4x32xf32> to vector<4x32xbf16>
    %cst_32 = arith.constant dense<0.000000e+00> : vector<4x32xf32>
    %163 = tpu.matmul %162, %0, %cst_32 {dimension_numbers = #tpu.dot_dimension_numbers<[1], [0], [0], [1], [0, 0, 1, 1], [], []>} : vector<4x32xbf16>, vector<32x32xbf16>, vector<4x32xf32> -> vector<4x32xf32>
    %164 = arith.addf %163, %4 : vector<4x32xf32>
    %165 = math.tanh %164 : vector<4x32xf32>
    %166 = arith.truncf %165 : vector<4x32xf32> to vector<4x32xbf16>
    %cst_33 = arith.constant dense<0.000000e+00> : vector<4x32xf32>
    %167 = tpu.matmul %166, %1, %cst_33 {dimension_numbers = #tpu.dot_dimension_numbers<[1], [0], [0], [1], [0, 0, 1, 1], [], []>} : vector<4x32xbf16>, vector<32x32xbf16>, vector<4x32xf32> -> vector<4x32xf32>
    %168 = arith.addf %167, %7 : vector<4x32xf32>
    %169 = arith.addf %143, %156 : vector<4x32xf32>
    %cst_34 = arith.constant 3.000000e+00 : f32
    %170 = vector.broadcast %cst_34 : f32 to vector<4x32xf32>
    %171 = arith.mulf %170, %169 : vector<4x32xf32>
    %172 = arith.addf %133, %171 : vector<4x32xf32>
    %173 = arith.addf %172, %168 : vector<4x32xf32>
    %174 = vector.broadcast %126 : f32 to vector<4x32xf32>
    %175 = arith.mulf %174, %173 : vector<4x32xf32>
    %176 = arith.addf %120, %175 : vector<4x32xf32>
    %c3_i32 = arith.constant 3 : i32
    %177 = arith.index_cast %c3_i32 : i32 to index
    %178 = memref.load %arg1[%177] : memref<7xf32, #tpu.memory_space<smem>>
    %179 = arith.index_cast %c3_i32 : i32 to index
    %180 = memref.load %arg2[%179] : memref<7xf32, #tpu.memory_space<smem>>
    %181 = arith.index_cast %c3_i32 : i32 to index
    %182 = memref.load %arg3[%181] : memref<7xf32, #tpu.memory_space<smem>>
    %183 = arith.truncf %176 : vector<4x32xf32> to vector<4x32xbf16>
    %cst_35 = arith.constant dense<0.000000e+00> : vector<4x32xf32>
    %184 = tpu.matmul %183, %0, %cst_35 {dimension_numbers = #tpu.dot_dimension_numbers<[1], [0], [0], [1], [0, 0, 1, 1], [], []>} : vector<4x32xbf16>, vector<32x32xbf16>, vector<4x32xf32> -> vector<4x32xf32>
    %185 = arith.addf %184, %4 : vector<4x32xf32>
    %186 = math.tanh %185 : vector<4x32xf32>
    %187 = arith.truncf %186 : vector<4x32xf32> to vector<4x32xbf16>
    %cst_36 = arith.constant dense<0.000000e+00> : vector<4x32xf32>
    %188 = tpu.matmul %187, %1, %cst_36 {dimension_numbers = #tpu.dot_dimension_numbers<[1], [0], [0], [1], [0, 0, 1, 1], [], []>} : vector<4x32xbf16>, vector<32x32xbf16>, vector<4x32xf32> -> vector<4x32xf32>
    %189 = arith.addf %188, %7 : vector<4x32xf32>
    %190 = vector.broadcast %180 : f32 to vector<4x32xf32>
    %191 = arith.mulf %190, %189 : vector<4x32xf32>
    %192 = arith.addf %176, %191 : vector<4x32xf32>
    %193 = arith.truncf %192 : vector<4x32xf32> to vector<4x32xbf16>
    %cst_37 = arith.constant dense<0.000000e+00> : vector<4x32xf32>
    %194 = tpu.matmul %193, %0, %cst_37 {dimension_numbers = #tpu.dot_dimension_numbers<[1], [0], [0], [1], [0, 0, 1, 1], [], []>} : vector<4x32xbf16>, vector<32x32xbf16>, vector<4x32xf32> -> vector<4x32xf32>
    %195 = arith.addf %194, %4 : vector<4x32xf32>
    %196 = math.tanh %195 : vector<4x32xf32>
    %197 = arith.truncf %196 : vector<4x32xf32> to vector<4x32xbf16>
    %cst_38 = arith.constant dense<0.000000e+00> : vector<4x32xf32>
    %198 = tpu.matmul %197, %1, %cst_38 {dimension_numbers = #tpu.dot_dimension_numbers<[1], [0], [0], [1], [0, 0, 1, 1], [], []>} : vector<4x32xbf16>, vector<32x32xbf16>, vector<4x32xf32> -> vector<4x32xf32>
    %199 = arith.addf %198, %7 : vector<4x32xf32>
    %200 = vector.broadcast %178 : f32 to vector<4x32xf32>
    %201 = arith.mulf %200, %199 : vector<4x32xf32>
    %202 = arith.addf %176, %201 : vector<4x32xf32>
    %203 = vector.broadcast %180 : f32 to vector<4x32xf32>
    %204 = arith.mulf %203, %189 : vector<4x32xf32>
    %205 = arith.subf %202, %204 : vector<4x32xf32>
    %206 = arith.truncf %205 : vector<4x32xf32> to vector<4x32xbf16>
    %cst_39 = arith.constant dense<0.000000e+00> : vector<4x32xf32>
    %207 = tpu.matmul %206, %0, %cst_39 {dimension_numbers = #tpu.dot_dimension_numbers<[1], [0], [0], [1], [0, 0, 1, 1], [], []>} : vector<4x32xbf16>, vector<32x32xbf16>, vector<4x32xf32> -> vector<4x32xf32>
    %208 = arith.addf %207, %4 : vector<4x32xf32>
    %209 = math.tanh %208 : vector<4x32xf32>
    %210 = arith.truncf %209 : vector<4x32xf32> to vector<4x32xbf16>
    %cst_40 = arith.constant dense<0.000000e+00> : vector<4x32xf32>
    %211 = tpu.matmul %210, %1, %cst_40 {dimension_numbers = #tpu.dot_dimension_numbers<[1], [0], [0], [1], [0, 0, 1, 1], [], []>} : vector<4x32xbf16>, vector<32x32xbf16>, vector<4x32xf32> -> vector<4x32xf32>
    %212 = arith.addf %211, %7 : vector<4x32xf32>
    %213 = arith.subf %189, %199 : vector<4x32xf32>
    %214 = arith.addf %213, %212 : vector<4x32xf32>
    %215 = vector.broadcast %178 : f32 to vector<4x32xf32>
    %216 = arith.mulf %215, %214 : vector<4x32xf32>
    %217 = arith.addf %176, %216 : vector<4x32xf32>
    %218 = arith.truncf %217 : vector<4x32xf32> to vector<4x32xbf16>
    %cst_41 = arith.constant dense<0.000000e+00> : vector<4x32xf32>
    %219 = tpu.matmul %218, %0, %cst_41 {dimension_numbers = #tpu.dot_dimension_numbers<[1], [0], [0], [1], [0, 0, 1, 1], [], []>} : vector<4x32xbf16>, vector<32x32xbf16>, vector<4x32xf32> -> vector<4x32xf32>
    %220 = arith.addf %219, %4 : vector<4x32xf32>
    %221 = math.tanh %220 : vector<4x32xf32>
    %222 = arith.truncf %221 : vector<4x32xf32> to vector<4x32xbf16>
    %cst_42 = arith.constant dense<0.000000e+00> : vector<4x32xf32>
    %223 = tpu.matmul %222, %1, %cst_42 {dimension_numbers = #tpu.dot_dimension_numbers<[1], [0], [0], [1], [0, 0, 1, 1], [], []>} : vector<4x32xbf16>, vector<32x32xbf16>, vector<4x32xf32> -> vector<4x32xf32>
    %224 = arith.addf %223, %7 : vector<4x32xf32>
    %225 = arith.addf %199, %212 : vector<4x32xf32>
    %cst_43 = arith.constant 3.000000e+00 : f32
    %226 = vector.broadcast %cst_43 : f32 to vector<4x32xf32>
    %227 = arith.mulf %226, %225 : vector<4x32xf32>
    %228 = arith.addf %189, %227 : vector<4x32xf32>
    %229 = arith.addf %228, %224 : vector<4x32xf32>
    %230 = vector.broadcast %182 : f32 to vector<4x32xf32>
    %231 = arith.mulf %230, %229 : vector<4x32xf32>
    %232 = arith.addf %176, %231 : vector<4x32xf32>
    %c4_i32 = arith.constant 4 : i32
    %233 = arith.index_cast %c4_i32 : i32 to index
    %234 = memref.load %arg1[%233] : memref<7xf32, #tpu.memory_space<smem>>
    %235 = arith.index_cast %c4_i32 : i32 to index
    %236 = memref.load %arg2[%235] : memref<7xf32, #tpu.memory_space<smem>>
    %237 = arith.index_cast %c4_i32 : i32 to index
    %238 = memref.load %arg3[%237] : memref<7xf32, #tpu.memory_space<smem>>
    %239 = arith.truncf %232 : vector<4x32xf32> to vector<4x32xbf16>
    %cst_44 = arith.constant dense<0.000000e+00> : vector<4x32xf32>
    %240 = tpu.matmul %239, %0, %cst_44 {dimension_numbers = #tpu.dot_dimension_numbers<[1], [0], [0], [1], [0, 0, 1, 1], [], []>} : vector<4x32xbf16>, vector<32x32xbf16>, vector<4x32xf32> -> vector<4x32xf32>
    %241 = arith.addf %240, %4 : vector<4x32xf32>
    %242 = math.tanh %241 : vector<4x32xf32>
    %243 = arith.truncf %242 : vector<4x32xf32> to vector<4x32xbf16>
    %cst_45 = arith.constant dense<0.000000e+00> : vector<4x32xf32>
    %244 = tpu.matmul %243, %1, %cst_45 {dimension_numbers = #tpu.dot_dimension_numbers<[1], [0], [0], [1], [0, 0, 1, 1], [], []>} : vector<4x32xbf16>, vector<32x32xbf16>, vector<4x32xf32> -> vector<4x32xf32>
    %245 = arith.addf %244, %7 : vector<4x32xf32>
    %246 = vector.broadcast %236 : f32 to vector<4x32xf32>
    %247 = arith.mulf %246, %245 : vector<4x32xf32>
    %248 = arith.addf %232, %247 : vector<4x32xf32>
    %249 = arith.truncf %248 : vector<4x32xf32> to vector<4x32xbf16>
    %cst_46 = arith.constant dense<0.000000e+00> : vector<4x32xf32>
    %250 = tpu.matmul %249, %0, %cst_46 {dimension_numbers = #tpu.dot_dimension_numbers<[1], [0], [0], [1], [0, 0, 1, 1], [], []>} : vector<4x32xbf16>, vector<32x32xbf16>, vector<4x32xf32> -> vector<4x32xf32>
    %251 = arith.addf %250, %4 : vector<4x32xf32>
    %252 = math.tanh %251 : vector<4x32xf32>
    %253 = arith.truncf %252 : vector<4x32xf32> to vector<4x32xbf16>
    %cst_47 = arith.constant dense<0.000000e+00> : vector<4x32xf32>
    %254 = tpu.matmul %253, %1, %cst_47 {dimension_numbers = #tpu.dot_dimension_numbers<[1], [0], [0], [1], [0, 0, 1, 1], [], []>} : vector<4x32xbf16>, vector<32x32xbf16>, vector<4x32xf32> -> vector<4x32xf32>
    %255 = arith.addf %254, %7 : vector<4x32xf32>
    %256 = vector.broadcast %234 : f32 to vector<4x32xf32>
    %257 = arith.mulf %256, %255 : vector<4x32xf32>
    %258 = arith.addf %232, %257 : vector<4x32xf32>
    %259 = vector.broadcast %236 : f32 to vector<4x32xf32>
    %260 = arith.mulf %259, %245 : vector<4x32xf32>
    %261 = arith.subf %258, %260 : vector<4x32xf32>
    %262 = arith.truncf %261 : vector<4x32xf32> to vector<4x32xbf16>
    %cst_48 = arith.constant dense<0.000000e+00> : vector<4x32xf32>
    %263 = tpu.matmul %262, %0, %cst_48 {dimension_numbers = #tpu.dot_dimension_numbers<[1], [0], [0], [1], [0, 0, 1, 1], [], []>} : vector<4x32xbf16>, vector<32x32xbf16>, vector<4x32xf32> -> vector<4x32xf32>
    %264 = arith.addf %263, %4 : vector<4x32xf32>
    %265 = math.tanh %264 : vector<4x32xf32>
    %266 = arith.truncf %265 : vector<4x32xf32> to vector<4x32xbf16>
    %cst_49 = arith.constant dense<0.000000e+00> : vector<4x32xf32>
    %267 = tpu.matmul %266, %1, %cst_49 {dimension_numbers = #tpu.dot_dimension_numbers<[1], [0], [0], [1], [0, 0, 1, 1], [], []>} : vector<4x32xbf16>, vector<32x32xbf16>, vector<4x32xf32> -> vector<4x32xf32>
    %268 = arith.addf %267, %7 : vector<4x32xf32>
    %269 = arith.subf %245, %255 : vector<4x32xf32>
    %270 = arith.addf %269, %268 : vector<4x32xf32>
    %271 = vector.broadcast %234 : f32 to vector<4x32xf32>
    %272 = arith.mulf %271, %270 : vector<4x32xf32>
    %273 = arith.addf %232, %272 : vector<4x32xf32>
    %274 = arith.truncf %273 : vector<4x32xf32> to vector<4x32xbf16>
    %cst_50 = arith.constant dense<0.000000e+00> : vector<4x32xf32>
    %275 = tpu.matmul %274, %0, %cst_50 {dimension_numbers = #tpu.dot_dimension_numbers<[1], [0], [0], [1], [0, 0, 1, 1], [], []>} : vector<4x32xbf16>, vector<32x32xbf16>, vector<4x32xf32> -> vector<4x32xf32>
    %276 = arith.addf %275, %4 : vector<4x32xf32>
    %277 = math.tanh %276 : vector<4x32xf32>
    %278 = arith.truncf %277 : vector<4x32xf32> to vector<4x32xbf16>
    %cst_51 = arith.constant dense<0.000000e+00> : vector<4x32xf32>
    %279 = tpu.matmul %278, %1, %cst_51 {dimension_numbers = #tpu.dot_dimension_numbers<[1], [0], [0], [1], [0, 0, 1, 1], [], []>} : vector<4x32xbf16>, vector<32x32xbf16>, vector<4x32xf32> -> vector<4x32xf32>
    %280 = arith.addf %279, %7 : vector<4x32xf32>
    %281 = arith.addf %255, %268 : vector<4x32xf32>
    %cst_52 = arith.constant 3.000000e+00 : f32
    %282 = vector.broadcast %cst_52 : f32 to vector<4x32xf32>
    %283 = arith.mulf %282, %281 : vector<4x32xf32>
    %284 = arith.addf %245, %283 : vector<4x32xf32>
    %285 = arith.addf %284, %280 : vector<4x32xf32>
    %286 = vector.broadcast %238 : f32 to vector<4x32xf32>
    %287 = arith.mulf %286, %285 : vector<4x32xf32>
    %288 = arith.addf %232, %287 : vector<4x32xf32>
    %c5_i32 = arith.constant 5 : i32
    %289 = arith.index_cast %c5_i32 : i32 to index
    %290 = memref.load %arg1[%289] : memref<7xf32, #tpu.memory_space<smem>>
    %291 = arith.index_cast %c5_i32 : i32 to index
    %292 = memref.load %arg2[%291] : memref<7xf32, #tpu.memory_space<smem>>
    %293 = arith.index_cast %c5_i32 : i32 to index
    %294 = memref.load %arg3[%293] : memref<7xf32, #tpu.memory_space<smem>>
    %295 = arith.truncf %288 : vector<4x32xf32> to vector<4x32xbf16>
    %cst_53 = arith.constant dense<0.000000e+00> : vector<4x32xf32>
    %296 = tpu.matmul %295, %0, %cst_53 {dimension_numbers = #tpu.dot_dimension_numbers<[1], [0], [0], [1], [0, 0, 1, 1], [], []>} : vector<4x32xbf16>, vector<32x32xbf16>, vector<4x32xf32> -> vector<4x32xf32>
    %297 = arith.addf %296, %4 : vector<4x32xf32>
    %298 = math.tanh %297 : vector<4x32xf32>
    %299 = arith.truncf %298 : vector<4x32xf32> to vector<4x32xbf16>
    %cst_54 = arith.constant dense<0.000000e+00> : vector<4x32xf32>
    %300 = tpu.matmul %299, %1, %cst_54 {dimension_numbers = #tpu.dot_dimension_numbers<[1], [0], [0], [1], [0, 0, 1, 1], [], []>} : vector<4x32xbf16>, vector<32x32xbf16>, vector<4x32xf32> -> vector<4x32xf32>
    %301 = arith.addf %300, %7 : vector<4x32xf32>
    %302 = vector.broadcast %292 : f32 to vector<4x32xf32>
    %303 = arith.mulf %302, %301 : vector<4x32xf32>
    %304 = arith.addf %288, %303 : vector<4x32xf32>
    %305 = arith.truncf %304 : vector<4x32xf32> to vector<4x32xbf16>
    %cst_55 = arith.constant dense<0.000000e+00> : vector<4x32xf32>
    %306 = tpu.matmul %305, %0, %cst_55 {dimension_numbers = #tpu.dot_dimension_numbers<[1], [0], [0], [1], [0, 0, 1, 1], [], []>} : vector<4x32xbf16>, vector<32x32xbf16>, vector<4x32xf32> -> vector<4x32xf32>
    %307 = arith.addf %306, %4 : vector<4x32xf32>
    %308 = math.tanh %307 : vector<4x32xf32>
    %309 = arith.truncf %308 : vector<4x32xf32> to vector<4x32xbf16>
    %cst_56 = arith.constant dense<0.000000e+00> : vector<4x32xf32>
    %310 = tpu.matmul %309, %1, %cst_56 {dimension_numbers = #tpu.dot_dimension_numbers<[1], [0], [0], [1], [0, 0, 1, 1], [], []>} : vector<4x32xbf16>, vector<32x32xbf16>, vector<4x32xf32> -> vector<4x32xf32>
    %311 = arith.addf %310, %7 : vector<4x32xf32>
    %312 = vector.broadcast %290 : f32 to vector<4x32xf32>
    %313 = arith.mulf %312, %311 : vector<4x32xf32>
    %314 = arith.addf %288, %313 : vector<4x32xf32>
    %315 = vector.broadcast %292 : f32 to vector<4x32xf32>
    %316 = arith.mulf %315, %301 : vector<4x32xf32>
    %317 = arith.subf %314, %316 : vector<4x32xf32>
    %318 = arith.truncf %317 : vector<4x32xf32> to vector<4x32xbf16>
    %cst_57 = arith.constant dense<0.000000e+00> : vector<4x32xf32>
    %319 = tpu.matmul %318, %0, %cst_57 {dimension_numbers = #tpu.dot_dimension_numbers<[1], [0], [0], [1], [0, 0, 1, 1], [], []>} : vector<4x32xbf16>, vector<32x32xbf16>, vector<4x32xf32> -> vector<4x32xf32>
    %320 = arith.addf %319, %4 : vector<4x32xf32>
    %321 = math.tanh %320 : vector<4x32xf32>
    %322 = arith.truncf %321 : vector<4x32xf32> to vector<4x32xbf16>
    %cst_58 = arith.constant dense<0.000000e+00> : vector<4x32xf32>
    %323 = tpu.matmul %322, %1, %cst_58 {dimension_numbers = #tpu.dot_dimension_numbers<[1], [0], [0], [1], [0, 0, 1, 1], [], []>} : vector<4x32xbf16>, vector<32x32xbf16>, vector<4x32xf32> -> vector<4x32xf32>
    %324 = arith.addf %323, %7 : vector<4x32xf32>
    %325 = arith.subf %301, %311 : vector<4x32xf32>
    %326 = arith.addf %325, %324 : vector<4x32xf32>
    %327 = vector.broadcast %290 : f32 to vector<4x32xf32>
    %328 = arith.mulf %327, %326 : vector<4x32xf32>
    %329 = arith.addf %288, %328 : vector<4x32xf32>
    %330 = arith.truncf %329 : vector<4x32xf32> to vector<4x32xbf16>
    %cst_59 = arith.constant dense<0.000000e+00> : vector<4x32xf32>
    %331 = tpu.matmul %330, %0, %cst_59 {dimension_numbers = #tpu.dot_dimension_numbers<[1], [0], [0], [1], [0, 0, 1, 1], [], []>} : vector<4x32xbf16>, vector<32x32xbf16>, vector<4x32xf32> -> vector<4x32xf32>
    %332 = arith.addf %331, %4 : vector<4x32xf32>
    %333 = math.tanh %332 : vector<4x32xf32>
    %334 = arith.truncf %333 : vector<4x32xf32> to vector<4x32xbf16>
    %cst_60 = arith.constant dense<0.000000e+00> : vector<4x32xf32>
    %335 = tpu.matmul %334, %1, %cst_60 {dimension_numbers = #tpu.dot_dimension_numbers<[1], [0], [0], [1], [0, 0, 1, 1], [], []>} : vector<4x32xbf16>, vector<32x32xbf16>, vector<4x32xf32> -> vector<4x32xf32>
    %336 = arith.addf %335, %7 : vector<4x32xf32>
    %337 = arith.addf %311, %324 : vector<4x32xf32>
    %cst_61 = arith.constant 3.000000e+00 : f32
    %338 = vector.broadcast %cst_61 : f32 to vector<4x32xf32>
    %339 = arith.mulf %338, %337 : vector<4x32xf32>
    %340 = arith.addf %301, %339 : vector<4x32xf32>
    %341 = arith.addf %340, %336 : vector<4x32xf32>
    %342 = vector.broadcast %294 : f32 to vector<4x32xf32>
    %343 = arith.mulf %342, %341 : vector<4x32xf32>
    %344 = arith.addf %288, %343 : vector<4x32xf32>
    %c6_i32 = arith.constant 6 : i32
    %345 = arith.index_cast %c6_i32 : i32 to index
    %346 = memref.load %arg1[%345] : memref<7xf32, #tpu.memory_space<smem>>
    %347 = arith.index_cast %c6_i32 : i32 to index
    %348 = memref.load %arg2[%347] : memref<7xf32, #tpu.memory_space<smem>>
    %349 = arith.index_cast %c6_i32 : i32 to index
    %350 = memref.load %arg3[%349] : memref<7xf32, #tpu.memory_space<smem>>
    %351 = arith.truncf %344 : vector<4x32xf32> to vector<4x32xbf16>
    %cst_62 = arith.constant dense<0.000000e+00> : vector<4x32xf32>
    %352 = tpu.matmul %351, %0, %cst_62 {dimension_numbers = #tpu.dot_dimension_numbers<[1], [0], [0], [1], [0, 0, 1, 1], [], []>} : vector<4x32xbf16>, vector<32x32xbf16>, vector<4x32xf32> -> vector<4x32xf32>
    %353 = arith.addf %352, %4 : vector<4x32xf32>
    %354 = math.tanh %353 : vector<4x32xf32>
    %355 = arith.truncf %354 : vector<4x32xf32> to vector<4x32xbf16>
    %cst_63 = arith.constant dense<0.000000e+00> : vector<4x32xf32>
    %356 = tpu.matmul %355, %1, %cst_63 {dimension_numbers = #tpu.dot_dimension_numbers<[1], [0], [0], [1], [0, 0, 1, 1], [], []>} : vector<4x32xbf16>, vector<32x32xbf16>, vector<4x32xf32> -> vector<4x32xf32>
    %357 = arith.addf %356, %7 : vector<4x32xf32>
    %358 = vector.broadcast %348 : f32 to vector<4x32xf32>
    %359 = arith.mulf %358, %357 : vector<4x32xf32>
    %360 = arith.addf %344, %359 : vector<4x32xf32>
    %361 = arith.truncf %360 : vector<4x32xf32> to vector<4x32xbf16>
    %cst_64 = arith.constant dense<0.000000e+00> : vector<4x32xf32>
    %362 = tpu.matmul %361, %0, %cst_64 {dimension_numbers = #tpu.dot_dimension_numbers<[1], [0], [0], [1], [0, 0, 1, 1], [], []>} : vector<4x32xbf16>, vector<32x32xbf16>, vector<4x32xf32> -> vector<4x32xf32>
    %363 = arith.addf %362, %4 : vector<4x32xf32>
    %364 = math.tanh %363 : vector<4x32xf32>
    %365 = arith.truncf %364 : vector<4x32xf32> to vector<4x32xbf16>
    %cst_65 = arith.constant dense<0.000000e+00> : vector<4x32xf32>
    %366 = tpu.matmul %365, %1, %cst_65 {dimension_numbers = #tpu.dot_dimension_numbers<[1], [0], [0], [1], [0, 0, 1, 1], [], []>} : vector<4x32xbf16>, vector<32x32xbf16>, vector<4x32xf32> -> vector<4x32xf32>
    %367 = arith.addf %366, %7 : vector<4x32xf32>
    %368 = vector.broadcast %346 : f32 to vector<4x32xf32>
    %369 = arith.mulf %368, %367 : vector<4x32xf32>
    %370 = arith.addf %344, %369 : vector<4x32xf32>
    %371 = vector.broadcast %348 : f32 to vector<4x32xf32>
    %372 = arith.mulf %371, %357 : vector<4x32xf32>
    %373 = arith.subf %370, %372 : vector<4x32xf32>
    %374 = arith.truncf %373 : vector<4x32xf32> to vector<4x32xbf16>
    %cst_66 = arith.constant dense<0.000000e+00> : vector<4x32xf32>
    %375 = tpu.matmul %374, %0, %cst_66 {dimension_numbers = #tpu.dot_dimension_numbers<[1], [0], [0], [1], [0, 0, 1, 1], [], []>} : vector<4x32xbf16>, vector<32x32xbf16>, vector<4x32xf32> -> vector<4x32xf32>
    %376 = arith.addf %375, %4 : vector<4x32xf32>
    %377 = math.tanh %376 : vector<4x32xf32>
    %378 = arith.truncf %377 : vector<4x32xf32> to vector<4x32xbf16>
    %cst_67 = arith.constant dense<0.000000e+00> : vector<4x32xf32>
    %379 = tpu.matmul %378, %1, %cst_67 {dimension_numbers = #tpu.dot_dimension_numbers<[1], [0], [0], [1], [0, 0, 1, 1], [], []>} : vector<4x32xbf16>, vector<32x32xbf16>, vector<4x32xf32> -> vector<4x32xf32>
    %380 = arith.addf %379, %7 : vector<4x32xf32>
    %381 = arith.subf %357, %367 : vector<4x32xf32>
    %382 = arith.addf %381, %380 : vector<4x32xf32>
    %383 = vector.broadcast %346 : f32 to vector<4x32xf32>
    %384 = arith.mulf %383, %382 : vector<4x32xf32>
    %385 = arith.addf %344, %384 : vector<4x32xf32>
    %386 = arith.truncf %385 : vector<4x32xf32> to vector<4x32xbf16>
    %cst_68 = arith.constant dense<0.000000e+00> : vector<4x32xf32>
    %387 = tpu.matmul %386, %0, %cst_68 {dimension_numbers = #tpu.dot_dimension_numbers<[1], [0], [0], [1], [0, 0, 1, 1], [], []>} : vector<4x32xbf16>, vector<32x32xbf16>, vector<4x32xf32> -> vector<4x32xf32>
    %388 = arith.addf %387, %4 : vector<4x32xf32>
    %389 = math.tanh %388 : vector<4x32xf32>
    %390 = arith.truncf %389 : vector<4x32xf32> to vector<4x32xbf16>
    %cst_69 = arith.constant dense<0.000000e+00> : vector<4x32xf32>
    %391 = tpu.matmul %390, %1, %cst_69 {dimension_numbers = #tpu.dot_dimension_numbers<[1], [0], [0], [1], [0, 0, 1, 1], [], []>} : vector<4x32xbf16>, vector<32x32xbf16>, vector<4x32xf32> -> vector<4x32xf32>
    %392 = arith.addf %391, %7 : vector<4x32xf32>
    %393 = arith.addf %367, %380 : vector<4x32xf32>
    %cst_70 = arith.constant 3.000000e+00 : f32
    %394 = vector.broadcast %cst_70 : f32 to vector<4x32xf32>
    %395 = arith.mulf %394, %393 : vector<4x32xf32>
    %396 = arith.addf %357, %395 : vector<4x32xf32>
    %397 = arith.addf %396, %392 : vector<4x32xf32>
    %398 = vector.broadcast %350 : f32 to vector<4x32xf32>
    %399 = arith.mulf %398, %397 : vector<4x32xf32>
    %400 = arith.addf %344, %399 : vector<4x32xf32>
    %c7_i32 = arith.constant 7 : i32
    %c0_71 = arith.constant 0 : index
    %c0_72 = arith.constant 0 : index
    %401 = vector.load %arg9[%c0_71, %c0_72] : memref<32x8xf32, #tpu.memory_space<vmem>>, vector<32x8xf32>
    %cst_73 = arith.constant dense<0.000000e+00> : vector<4x8xf32>
    %402 = tpu.matmul %400, %401, %cst_73 {dimension_numbers = #tpu.dot_dimension_numbers<[1], [0], [0], [1], [0, 0, 1, 1], [], []>} : vector<4x32xf32>, vector<32x8xf32>, vector<4x8xf32> -> vector<4x8xf32>
    %c0_74 = arith.constant 0 : index
    %c0_75 = arith.constant 0 : index
    %403 = vector.load %arg10[%c0_74, %c0_75] : memref<1x8xf32, #tpu.memory_space<vmem>>, vector<1x8xf32>
    %404 = vector.broadcast %403 : vector<1x8xf32> to vector<4x8xf32>
    %405 = arith.addf %402, %404 : vector<4x8xf32>
    %c0_76 = arith.constant 0 : index
    %c0_77 = arith.constant 0 : index
    %406 = vector.load %arg11[%c0_76, %c0_77] : memref<4x8xf32, #tpu.memory_space<vmem>>, vector<4x8xf32>
    tpu.vector_store %arg11[%c0_76, %c0_77], %405 {strides = array<i32>} : memref<4x8xf32, #tpu.memory_space<vmem>>, vector<4x8xf32>,
    return
  }
  func.func @transform_0(%arg0: i32, %arg1: memref<7xf32, #tpu.memory_space<smem>>, %arg2: memref<7xf32, #tpu.memory_space<smem>>, %arg3: memref<7xf32, #tpu.memory_space<smem>>) -> (i32, i32) {
    %c0_i32 = arith.constant 0 : i32
    %c0_i32_0 = arith.constant 0 : i32
    %c0_i32_1 = arith.constant 0 : i32
    return %c0_i32, %c0_i32_0 : i32, i32
  }
  func.func @transform_1(%arg0: i32, %arg1: memref<7xf32, #tpu.memory_space<smem>>, %arg2: memref<7xf32, #tpu.memory_space<smem>>, %arg3: memref<7xf32, #tpu.memory_space<smem>>) -> (i32, i32) {
    %c0_i32 = arith.constant 0 : i32
    %c0_i32_0 = arith.constant 0 : i32
    %c0_i32_1 = arith.constant 0 : i32
    return %c0_i32, %c0_i32_0 : i32, i32
  }
  func.func @transform_2(%arg0: i32, %arg1: memref<7xf32, #tpu.memory_space<smem>>, %arg2: memref<7xf32, #tpu.memory_space<smem>>, %arg3: memref<7xf32, #tpu.memory_space<smem>>) -> (i32, i32) {
    %c0_i32 = arith.constant 0 : i32
    %c0_i32_0 = arith.constant 0 : i32
    %c0_i32_1 = arith.constant 0 : i32
    return %c0_i32, %c0_i32_0 : i32, i32
  }
  func.func @transform_3(%arg0: i32, %arg1: memref<7xf32, #tpu.memory_space<smem>>, %arg2: memref<7xf32, #tpu.memory_space<smem>>, %arg3: memref<7xf32, #tpu.memory_space<smem>>) -> (i32, i32) {
    %c0_i32 = arith.constant 0 : i32
    %c0_i32_0 = arith.constant 0 : i32
    %c0_i32_1 = arith.constant 0 : i32
    return %c0_i32, %c0_i32_0 : i32, i32
  }
  func.func @transform_4(%arg0: i32, %arg1: memref<7xf32, #tpu.memory_space<smem>>, %arg2: memref<7xf32, #tpu.memory_space<smem>>, %arg3: memref<7xf32, #tpu.memory_space<smem>>) -> (i32, i32) {
    %c0_i32 = arith.constant 0 : i32
    %c0_i32_0 = arith.constant 0 : i32
    %c0_i32_1 = arith.constant 0 : i32
    return %c0_i32, %c0_i32_0 : i32, i32
  }
  func.func @transform_5(%arg0: i32, %arg1: memref<7xf32, #tpu.memory_space<smem>>, %arg2: memref<7xf32, #tpu.memory_space<smem>>, %arg3: memref<7xf32, #tpu.memory_space<smem>>) -> (i32, i32) {
    %c0_i32 = arith.constant 0 : i32
    %c0_i32_0 = arith.constant 0 : i32
    %c0_i32_1 = arith.constant 0 : i32
    return %c0_i32, %c0_i32_0 : i32, i32
  }
  func.func @transform_6(%arg0: i32, %arg1: memref<7xf32, #tpu.memory_space<smem>>, %arg2: memref<7xf32, #tpu.memory_space<smem>>, %arg3: memref<7xf32, #tpu.memory_space<smem>>) -> (i32, i32) {
    %c0_i32 = arith.constant 0 : i32
    %c0_i32_0 = arith.constant 0 : i32
    %c0_i32_1 = arith.constant 0 : i32
    return %c0_i32, %c0_i32_0 : i32, i32
  }
  func.func @transform_7(%arg0: i32, %arg1: memref<7xf32, #tpu.memory_space<smem>>, %arg2: memref<7xf32, #tpu.memory_space<smem>>, %arg3: memref<7xf32, #tpu.memory_space<smem>>) -> (i32, i32) {
    %c0_i32 = arith.constant 0 : i32
    %c0_i32_0 = arith.constant 0 : i32
    %c0_i32_1 = arith.constant 0 : i32
    return %c0_i32, %c0_i32_0 : i32, i32
  }
}

</mosaic_0001>

<llo_original>
// kernel: tpu_custom_call.1
$region0: #{tpu_custom_call.1}
  #allocation0 [shape = 'u32[]', space=smem, size = 0x4, offset = 0x4, fixed_abs, tag = 'smem constant byte address 0x4 - core index']
  #allocation1 [shape = 'u32[144,128]{1,0:T(1,128)}', space=vmem, size = 0x12000, scoped, tag = 'internal scratch']
  #allocation2 [shape = 's32[1]{0}', space=sflag, size = 0x4, scoped, tag = 'scoped memory for tpu_custom_call.1']
  #allocation3 [shape = 'u8[512]{0}', space=smem, size = 0x200, scoped, tag = 'prefetched SMEM operand 0']
  #allocation4 [shape = 'u8[512]{0}', space=smem, size = 0x200, scoped, tag = 'prefetched SMEM operand 1']
  #allocation5 [shape = 'u8[512]{0}', space=smem, size = 0x200, scoped, tag = 'prefetched SMEM operand 2']
  %s0 = inlined_call_operand.vmem [shape: f32[7], index: 0, kind: input, shape index: {}]
  %s1 = inlined_call_operand.vmem [shape: f32[7], index: 1, kind: input, shape index: {}]
  %s2 = inlined_call_operand.vmem [shape: f32[7], index: 2, kind: input, shape index: {}]
  %s3 = inlined_call_operand.vmem [shape: f32[4,32], index: 3, kind: input, shape index: {}]
  %s4 = inlined_call_operand.vmem [shape: bf16[32,32], index: 4, kind: input, shape index: {}]
  %s5 = inlined_call_operand.vmem [shape: f32[1,32], index: 5, kind: input, shape index: {}]
  %s6 = inlined_call_operand.vmem [shape: bf16[32,32], index: 6, kind: input, shape index: {}]
  %s7 = inlined_call_operand.vmem [shape: f32[1,32], index: 7, kind: input, shape index: {}]
  %s8 = inlined_call_operand.vmem [shape: f32[32,8], index: 8, kind: input, shape index: {}]
  %s9 = inlined_call_operand.vmem [shape: f32[1,8], index: 9, kind: input, shape index: {}]
  %s10 = inlined_call_operand.hbm [shape: f32[4,8], index: 10, kind: output, shape index: {}]
  %s11 = sld [smem:[#allocation0]]
  $region38: #{tpu_custom_call.1} parent=0
    _
  %s13 = ssub.s32 1, %s11
  %s14 = scalar_select 0, %s13, %s11
  %s15 = sshll.u32 %s0, 4
  %s16 = int_to_ptr.vmem [resolvable:$true] %s15
  %18 = dma.vmem_to_smem %s16, 16, [#allocation3], [#allocation2]
  %s19 = sshll.u32 %s1, 4
  %s20 = int_to_ptr.vmem [resolvable:$true] %s19
  %22 = dma.vmem_to_smem %s20, 16, [#allocation4], [#allocation2]
  %s23 = sshll.u32 %s2, 4
  %s24 = int_to_ptr.vmem [resolvable:$true] %s23
  %26 = dma.vmem_to_smem %s24, 16, [#allocation5], [#allocation2]
  %27 = dma.done [#allocation2], 48
  %28 = sfence
  $region1: #{tpu_custom_call.1} parent=0
    #allocation6 [shape = 'u8[2048]{0}', space=vmem, size = 0x800, scoped, tag = 'output window, operand 0, single buffered']
    #allocation7 [shape = 's32[1]{0}', space=sflag, size = 0x4, scoped, tag = 'scoped memory for tpu_custom_call.1']
    %29 = vsyncpa [#allocation7], 0
    // Predicated region
    $region2: #{tpu_custom_call.1} parent=1 // pred_check
      _
    $region3: #{tpu_custom_call.1} parent=1 // pred_check_branch
      %31 = sbr.rel (0) target = $region5
    $region4: #{tpu_custom_call.1} parent=1 // pred_region
      _
    $region5: #{tpu_custom_call.1} parent=1 // pred_fallthru
      _
    // Predicated region
    $region6: #{tpu_custom_call.1} parent=1 // pred_check
      _
    $region7: #{tpu_custom_call.1} parent=1 // pred_check_branch
      %33 = sbr.rel (0) target = $region9
    $region8: #{tpu_custom_call.1} parent=1 // pred_region
      _
    $region9: #{tpu_custom_call.1} parent=1 // pred_fallthru
      _
    // Predicated region
    $region10: #{tpu_custom_call.1} parent=1 // pred_check
      _
    $region11: #{tpu_custom_call.1} parent=1 // pred_check_branch
      %35 = sbr.rel (0) target = $region13
    $region12: #{tpu_custom_call.1} parent=1 // pred_region
      _
    $region13: #{tpu_custom_call.1} parent=1 // pred_fallthru
      _
    // Predicated region
    $region14: #{tpu_custom_call.1} parent=1 // pred_check
      _
    $region15: #{tpu_custom_call.1} parent=1 // pred_check_branch
      %37 = sbr.rel (0) target = $region17
    $region16: #{tpu_custom_call.1} parent=1 // pred_region
      _
    $region17: #{tpu_custom_call.1} parent=1 // pred_fallthru
      _
    // Predicated region
    $region18: #{tpu_custom_call.1} parent=1 // pred_check
      _
    $region19: #{tpu_custom_call.1} parent=1 // pred_check_branch
      %39 = sbr.rel (0) target = $region21
    $region20: #{tpu_custom_call.1} parent=1 // pred_region
      _
    $region21: #{tpu_custom_call.1} parent=1 // pred_fallthru
      _
    // Predicated region
    $region22: #{tpu_custom_call.1} parent=1 // pred_check
      _
    $region23: #{tpu_custom_call.1} parent=1 // pred_check_branch
      %41 = sbr.rel (0) target = $region25
    $region24: #{tpu_custom_call.1} parent=1 // pred_region
      _
    $region25: #{tpu_custom_call.1} parent=1 // pred_fallthru
      _
    // Predicated region
    $region26: #{tpu_custom_call.1} parent=1 // pred_check
      _
    $region27: #{tpu_custom_call.1} parent=1 // pred_check_branch
      %43 = sbr.rel (0) target = $region29
    $region28: #{tpu_custom_call.1} parent=1 // pred_region
      _
    $region29: #{tpu_custom_call.1} parent=1 // pred_fallthru
      _
    %v45 = vld [vmem:[%s4] sm:$0xf]
    %v46 = vld [vmem:[%s4 + $0x4] sm:$0xf]
    %v47 = vld [vmem:[%s4 + $0x8] sm:$0xf]
    %v48 = vld [vmem:[%s4 + $0xc] sm:$0xf]
    %v49 = vld [vmem:[%s6] sm:$0xf]
    %v50 = vld [vmem:[%s6 + $0x4] sm:$0xf]
    %v51 = vld [vmem:[%s6 + $0x8] sm:$0xf]
    %v52 = vld [vmem:[%s6 + $0xc] sm:$0xf]
    %v53 = vld [vmem:[%s5] sm:$0x1]
    %v55 = vlaneseq
    %v56 = vshrl.u32 %v55, 7
    %v57 = vsub.s32 0, %v56
    %v58 = vrot.slane %v53, %v57
    %v60 = vld [vmem:[%s7] sm:$0x1]
    %v62 = vlaneseq
    %v63 = vshrl.u32 %v62, 7
    %v64 = vsub.s32 0, %v63
    %v65 = vrot.slane %v60, %v64
    %v67 = vld [vmem:[%s3] sm:$0xf]
    %s68 = sld [smem:[#allocation3]]
    %s69 = sld [smem:[#allocation4]]
    %s70 = sld [smem:[#allocation5]]
    %v71 = vpack.c.bf16 %v67, %v67
    %v76 = vunpack.c.l.b16 %v45
    %v77 = vunpack.c.l.b16 %v46
    %v78 = vunpack.c.l.b16 %v47
    %v79 = vunpack.c.l.b16 %v48
    %v80 = vpack.c.b16 %v77, %v76
    %v81 = vpack.c.b16 %v79, %v78
    %vm84 = vcmask 261120
    %v86 = vsel %vm84, %v71, 0
    %88 = vmatprep.subr.bf16.mxu0 0
    %89 = vmatpush1.bf16.msra.mxu0 0
    %90 = vmatprep.subr.bf16.mxu0 0
    %91 = vmatpush1.bf16.msra.mxu0 0
    %92 = vmatprep.subr.bf16.mxu0 0
    %93 = vmatpush1.bf16.msra.mxu0 0
    %94 = vmatprep.subr.bf16.mxu0 0
    %95 = vmatpush1.bf16.msra.mxu0 0
    %96 = vmatprep.subr.bf16.mxu0 0
    %97 = vmatpush1.bf16.msra.mxu0 0
    %98 = vmatprep.subr.bf16.mxu0 0
    %99 = vmatpush1.bf16.msra.mxu0 0
    %100 = vmatprep.subr.bf16.mxu0 0
    %101 = vmatpush1.bf16.msra.mxu0 %v81
    %102 = vmatprep.subr.bf16.mxu0 0
    %103 = vmatpush1.bf16.msra.mxu0 %v80
    %104 = vmatprep.subr.bf16.mxu0 0
    %105 = vmatpush2.bf16.msra.mxu0 0
    %106 = vmatprep.subr.bf16.mxu0 0
    %107 = vmatpush2.bf16.msra.mxu0 0
    %108 = vmatprep.subr.bf16.mxu0 0
    %109 = vmatpush2.bf16.msra.mxu0 0
    %110 = vmatprep.subr.bf16.mxu0 0
    %111 = vmatpush2.bf16.msra.mxu0 0
    %112 = vmatprep.subr.bf16.mxu0 0
    %113 = vmatpush2.bf16.msra.mxu0 0
    %114 = vmatprep.subr.bf16.mxu0 0
    %115 = vmatpush2.bf16.msra.mxu0 0
    %116 = vmatprep.subr.bf16.mxu0 0
    %117 = vmatpush2.bf16.msra.mxu0 0
    %118 = vmatprep.subr.bf16.mxu0 0
    %119 = vmatpush2.bf16.msra.mxu0 0
    %120 = vmatprep.mubr.bf16.mxu0 0
    %121 = vmatmul.mubr.bf16.gmra.mxu0 %v86
    %v122 = vpop.f32.mrf.mxu0
    %v123 = vadd.f32 %v58, %v122
    %v124 = vpop.f32.mrf.mxu0
    %v125 = vpop.f32.mrf.mxu0
    %v126 = vpop.f32.mrf.mxu0
    %127 = vdwg.mxu0
    %v128 = vtanh.pop %v123
    %v129 = vpack.c.bf16 %v128, %v128
    %v134 = vunpack.c.l.b16 %v49
    %v135 = vunpack.c.l.b16 %v50
    %v136 = vunpack.c.l.b16 %v51
    %v137 = vunpack.c.l.b16 %v52
    %v138 = vpack.c.b16 %v135, %v134
    %v139 = vpack.c.b16 %v137, %v136
    %v143 = vsel %vm84, %v129, 0
    %145 = vmatprep.subr.bf16.mxu0 0
    %146 = vmatpush1.bf16.msra.mxu0 0
    %147 = vmatprep.subr.bf16.mxu0 0
    %148 = vmatpush1.bf16.msra.mxu0 0
    %149 = vmatprep.subr.bf16.mxu0 0
    %150 = vmatpush1.bf16.msra.mxu0 0
    %151 = vmatprep.subr.bf16.mxu0 0
    %152 = vmatpush1.bf16.msra.mxu0 0
    %153 = vmatprep.subr.bf16.mxu0 0
    %154 = vmatpush1.bf16.msra.mxu0 0
    %155 = vmatprep.subr.bf16.mxu0 0
    %156 = vmatpush1.bf16.msra.mxu0 0
    %157 = vmatprep.subr.bf16.mxu0 0
    %158 = vmatpush1.bf16.msra.mxu0 %v139
    %159 = vmatprep.subr.bf16.mxu0 0
    %160 = vmatpush1.bf16.msra.mxu0 %v138
    %161 = vmatprep.subr.bf16.mxu0 0
    %162 = vmatpush2.bf16.msra.mxu0 0
    %163 = vmatprep.subr.bf16.mxu0 0
    %164 = vmatpush2.bf16.msra.mxu0 0
    %165 = vmatprep.subr.bf16.mxu0 0
    %166 = vmatpush2.bf16.msra.mxu0 0
    %167 = vmatprep.subr.bf16.mxu0 0
    %168 = vmatpush2.bf16.msra.mxu0 0
    %169 = vmatprep.subr.bf16.mxu0 0
    %170 = vmatpush2.bf16.msra.mxu0 0
    %171 = vmatprep.subr.bf16.mxu0 0
    %172 = vmatpush2.bf16.msra.mxu0 0
    %173 = vmatprep.subr.bf16.mxu0 0
    %174 = vmatpush2.bf16.msra.mxu0 0
    %175 = vmatprep.subr.bf16.mxu0 0
    %176 = vmatpush2.bf16.msra.mxu0 0
    %177 = vmatprep.mubr.bf16.mxu0 0
    %178 = vmatmul.mubr.bf16.gmra.mxu0 %v143
    %v179 = vpop.f32.mrf.mxu0
    %v180 = vadd.f32 %v65, %v179
    %v181 = vpop.f32.mrf.mxu0
    %v182 = vpop.f32.mrf.mxu0
    %v183 = vpop.f32.mrf.mxu0
    %184 = vdwg.mxu0
    %v185 = vstv %s69
    %v186 = vmul.f32 %v185, %v180
    %v187 = vadd.f32 %v67, %v186
    %v188 = vpack.c.bf16 %v187, %v187
    %v190 = vsel %vm84, %v188, 0
    %192 = vmatprep.subr.bf16.mxu0 0
    %193 = vmatpush1.bf16.msra.mxu0 0
    %194 = vmatprep.subr.bf16.mxu0 0
    %195 = vmatpush1.bf16.msra.mxu0 0
    %196 = vmatprep.subr.bf16.mxu0 0
    %197 = vmatpush1.bf16.msra.mxu0 0
    %198 = vmatprep.subr.bf16.mxu0 0
    %199 = vmatpush1.bf16.msra.mxu0 0
    %200 = vmatprep.subr.bf16.mxu0 0
    %201 = vmatpush1.bf16.msra.mxu0 0
    %202 = vmatprep.subr.bf16.mxu0 0
    %203 = vmatpush1.bf16.msra.mxu0 0
    %204 = vmatprep.subr.bf16.mxu0 0
    %205 = vmatpush1.bf16.msra.mxu0 %v81
    %206 = vmatprep.subr.bf16.mxu0 0
    %207 = vmatpush1.bf16.msra.mxu0 %v80
    %208 = vmatprep.subr.bf16.mxu0 0
    %209 = vmatpush2.bf16.msra.mxu0 0
    %210 = vmatprep.subr.bf16.mxu0 0
    %211 = vmatpush2.bf16.msra.mxu0 0
    %212 = vmatprep.subr.bf16.mxu0 0
    %213 = vmatpush2.bf16.msra.mxu0 0
    %214 = vmatprep.subr.bf16.mxu0 0
    %215 = vmatpush2.bf16.msra.mxu0 0
    %216 = vmatprep.subr.bf16.mxu0 0
    %217 = vmatpush2.bf16.msra.mxu0 0
    %218 = vmatprep.subr.bf16.mxu0 0
    %219 = vmatpush2.bf16.msra.mxu0 0
    %220 = vmatprep.subr.bf16.mxu0 0
    %221 = vmatpush2.bf16.msra.mxu0 0
    %222 = vmatprep.subr.bf16.mxu0 0
    %223 = vmatpush2.bf16.msra.mxu0 0
    %224 = vmatprep.mubr.bf16.mxu0 0
    %225 = vmatmul.mubr.bf16.gmra.mxu0 %v190
    %v226 = vpop.f32.mrf.mxu0
    %v227 = vadd.f32 %v58, %v226
    %v228 = vpop.f32.mrf.mxu0
    %v229 = vpop.f32.mrf.mxu0
    %v230 = vpop.f32.mrf.mxu0
    %231 = vdwg.mxu0
    %v232 = vtanh.pop %v227
    %v233 = vpack.c.bf16 %v232, %v232
    %v235 = vsel %vm84, %v233, 0
    %237 = vmatprep.subr.bf16.mxu0 0
    %238 = vmatpush1.bf16.msra.mxu0 0
    %239 = vmatprep.subr.bf16.mxu0 0
    %240 = vmatpush1.bf16.msra.mxu0 0
    %241 = vmatprep.subr.bf16.mxu0 0
    %242 = vmatpush1.bf16.msra.mxu0 0
    %243 = vmatprep.subr.bf16.mxu0 0
    %244 = vmatpush1.bf16.msra.mxu0 0
    %245 = vmatprep.subr.bf16.mxu0 0
    %246 = vmatpush1.bf16.msra.mxu0 0
    %247 = vmatprep.subr.bf16.mxu0 0
    %248 = vmatpush1.bf16.msra.mxu0 0
    %249 = vmatprep.subr.bf16.mxu0 0
    %250 = vmatpush1.bf16.msra.mxu0 %v139
    %251 = vmatprep.subr.bf16.mxu0 0
    %252 = vmatpush1.bf16.msra.mxu0 %v138
    %253 = vmatprep.subr.bf16.mxu0 0
    %254 = vmatpush2.bf16.msra.mxu0 0
    %255 = vmatprep.subr.bf16.mxu0 0
    %256 = vmatpush2.bf16.msra.mxu0 0
    %257 = vmatprep.subr.bf16.mxu0 0
    %258 = vmatpush2.bf16.msra.mxu0 0
    %259 = vmatprep.subr.bf16.mxu0 0
    %260 = vmatpush2.bf16.msra.mxu0 0
    %261 = vmatprep.subr.bf16.mxu0 0
    %262 = vmatpush2.bf16.msra.mxu0 0
    %263 = vmatprep.subr.bf16.mxu0 0
    %264 = vmatpush2.bf16.msra.mxu0 0
    %265 = vmatprep.subr.bf16.mxu0 0
    %266 = vmatpush2.bf16.msra.mxu0 0
    %267 = vmatprep.subr.bf16.mxu0 0
    %268 = vmatpush2.bf16.msra.mxu0 0
    %269 = vmatprep.mubr.bf16.mxu0 0
    %270 = vmatmul.mubr.bf16.gmra.mxu0 %v235
    %v271 = vpop.f32.mrf.mxu0
    %v272 = vadd.f32 %v65, %v271
    %v273 = vpop.f32.mrf.mxu0
    %v274 = vpop.f32.mrf.mxu0
    %v275 = vpop.f32.mrf.mxu0
    %276 = vdwg.mxu0
    %v277 = vstv %s68
    %v278 = vmul.f32 %v277, %v272
    %v279 = vadd.f32 %v67, %v278
    %v280 = vsub.f32 %v279, %v186
    %v281 = vpack.c.bf16 %v280, %v280
    %v283 = vsel %vm84, %v281, 0
    %285 = vmatprep.subr.bf16.mxu0 0
    %286 = vmatpush1.bf16.msra.mxu0 0
    %287 = vmatprep.subr.bf16.mxu0 0
    %288 = vmatpush1.bf16.msra.mxu0 0
    %289 = vmatprep.subr.bf16.mxu0 0
    %290 = vmatpush1.bf16.msra.mxu0 0
    %291 = vmatprep.subr.bf16.mxu0 0
    %292 = vmatpush1.bf16.msra.mxu0 0
    %293 = vmatprep.subr.bf16.mxu0 0
    %294 = vmatpush1.bf16.msra.mxu0 0
    %295 = vmatprep.subr.bf16.mxu0 0
    %296 = vmatpush1.bf16.msra.mxu0 0
    %297 = vmatprep.subr.bf16.mxu0 0
    %298 = vmatpush1.bf16.msra.mxu0 %v81
    %299 = vmatprep.subr.bf16.mxu0 0
    %300 = vmatpush1.bf16.msra.mxu0 %v80
    %301 = vmatprep.subr.bf16.mxu0 0
    %302 = vmatpush2.bf16.msra.mxu0 0
    %303 = vmatprep.subr.bf16.mxu0 0
    %304 = vmatpush2.bf16.msra.mxu0 0
    %305 = vmatprep.subr.bf16.mxu0 0
    %306 = vmatpush2.bf16.msra.mxu0 0
    %307 = vmatprep.subr.bf16.mxu0 0
    %308 = vmatpush2.bf16.msra.mxu0 0
    %309 = vmatprep.subr.bf16.mxu0 0
    %310 = vmatpush2.bf16.msra.mxu0 0
    %311 = vmatprep.subr.bf16.mxu0 0
    %312 = vmatpush2.bf16.msra.mxu0 0
    %313 = vmatprep.subr.bf16.mxu0 0
    %314 = vmatpush2.bf16.msra.mxu0 0
    %315 = vmatprep.subr.bf16.mxu0 0
    %316 = vmatpush2.bf16.msra.mxu0 0
    %317 = vmatprep.mubr.bf16.mxu0 0
    %318 = vmatmul.mubr.bf16.gmra.mxu0 %v283
    %v319 = vpop.f32.mrf.mxu0
    %v320 = vadd.f32 %v58, %v319
    %v321 = vpop.f32.mrf.mxu0
    %v322 = vpop.f32.mrf.mxu0
    %v323 = vpop.f32.mrf.mxu0
    %324 = vdwg.mxu0
    %v325 = vtanh.pop %v320
    %v326 = vpack.c.bf16 %v325, %v325
    %v328 = vsel %vm84, %v326, 0
    %330 = vmatprep.subr.bf16.mxu0 0
    %331 = vmatpush1.bf16.msra.mxu0 0
    %332 = vmatprep.subr.bf16.mxu0 0
    %333 = vmatpush1.bf16.msra.mxu0 0
    %334 = vmatprep.subr.bf16.mxu0 0
    %335 = vmatpush1.bf16.msra.mxu0 0
    %336 = vmatprep.subr.bf16.mxu0 0
    %337 = vmatpush1.bf16.msra.mxu0 0
    %338 = vmatprep.subr.bf16.mxu0 0
    %339 = vmatpush1.bf16.msra.mxu0 0
    %340 = vmatprep.subr.bf16.mxu0 0
    %341 = vmatpush1.bf16.msra.mxu0 0
    %342 = vmatprep.subr.bf16.mxu0 0
    %343 = vmatpush1.bf16.msra.mxu0 %v139
    %344 = vmatprep.subr.bf16.mxu0 0
    %345 = vmatpush1.bf16.msra.mxu0 %v138
    %346 = vmatprep.subr.bf16.mxu0 0
    %347 = vmatpush2.bf16.msra.mxu0 0
    %348 = vmatprep.subr.bf16.mxu0 0
    %349 = vmatpush2.bf16.msra.mxu0 0
    %350 = vmatprep.subr.bf16.mxu0 0
    %351 = vmatpush2.bf16.msra.mxu0 0
    %352 = vmatprep.subr.bf16.mxu0 0
    %353 = vmatpush2.bf16.msra.mxu0 0
    %354 = vmatprep.subr.bf16.mxu0 0
    %355 = vmatpush2.bf16.msra.mxu0 0
    %356 = vmatprep.subr.bf16.mxu0 0
    %357 = vmatpush2.bf16.msra.mxu0 0
    %358 = vmatprep.subr.bf16.mxu0 0
    %359 = vmatpush2.bf16.msra.mxu0 0
    %360 = vmatprep.subr.bf16.mxu0 0
    %361 = vmatpush2.bf16.msra.mxu0 0
    %362 = vmatprep.mubr.bf16.mxu0 0
    %363 = vmatmul.mubr.bf16.gmra.mxu0 %v328
    %v364 = vpop.f32.mrf.mxu0
    %v365 = vadd.f32 %v65, %v364
    %v366 = vpop.f32.mrf.mxu0
    %v367 = vpop.f32.mrf.mxu0
    %v368 = vpop.f32.mrf.mxu0
    %369 = vdwg.mxu0
    %v370 = vsub.f32 %v180, %v272
    %v371 = vadd.f32 %v370, %v365
    %v372 = vmul.f32 %v277, %v371
    %v373 = vadd.f32 %v67, %v372
    %v374 = vpack.c.bf16 %v373, %v373
    %v376 = vsel %vm84, %v374, 0
    %378 = vmatprep.subr.bf16.mxu0 0
    %379 = vmatpush1.bf16.msra.mxu0 0
    %380 = vmatprep.subr.bf16.mxu0 0
    %381 = vmatpush1.bf16.msra.mxu0 0
    %382 = vmatprep.subr.bf16.mxu0 0
    %383 = vmatpush1.bf16.msra.mxu0 0
    %384 = vmatprep.subr.bf16.mxu0 0
    %385 = vmatpush1.bf16.msra.mxu0 0
    %386 = vmatprep.subr.bf16.mxu0 0
    %387 = vmatpush1.bf16.msra.mxu0 0
    %388 = vmatprep.subr.bf16.mxu0 0
    %389 = vmatpush1.bf16.msra.mxu0 0
    %390 = vmatprep.subr.bf16.mxu0 0
    %391 = vmatpush1.bf16.msra.mxu0 %v81
    %392 = vmatprep.subr.bf16.mxu0 0
    %393 = vmatpush1.bf16.msra.mxu0 %v80
    %394 = vmatprep.subr.bf16.mxu0 0
    %395 = vmatpush2.bf16.msra.mxu0 0
    %396 = vmatprep.subr.bf16.mxu0 0
    %397 = vmatpush2.bf16.msra.mxu0 0
    %398 = vmatprep.subr.bf16.mxu0 0
    %399 = vmatpush2.bf16.msra.mxu0 0
    %400 = vmatprep.subr.bf16.mxu0 0
    %401 = vmatpush2.bf16.msra.mxu0 0
    %402 = vmatprep.subr.bf16.mxu0 0
    %403 = vmatpush2.bf16.msra.mxu0 0
    %404 = vmatprep.subr.bf16.mxu0 0
    %405 = vmatpush2.bf16.msra.mxu0 0
    %406 = vmatprep.subr.bf16.mxu0 0
    %407 = vmatpush2.bf16.msra.mxu0 0
    %408 = vmatprep.subr.bf16.mxu0 0
    %409 = vmatpush2.bf16.msra.mxu0 0
    %410 = vmatprep.mubr.bf16.mxu0 0
    %411 = vmatmul.mubr.bf16.gmra.mxu0 %v376
    %v412 = vpop.f32.mrf.mxu0
    %v413 = vadd.f32 %v58, %v412
    %v414 = vpop.f32.mrf.mxu0
    %v415 = vpop.f32.mrf.mxu0
    %v416 = vpop.f32.mrf.mxu0
    %417 = vdwg.mxu0
    %v418 = vtanh.pop %v413
    %v419 = vpack.c.bf16 %v418, %v418
    %v421 = vsel %vm84, %v419, 0
    %423 = vmatprep.subr.bf16.mxu0 0
    %424 = vmatpush1.bf16.msra.mxu0 0
    %425 = vmatprep.subr.bf16.mxu0 0
    %426 = vmatpush1.bf16.msra.mxu0 0
    %427 = vmatprep.subr.bf16.mxu0 0
    %428 = vmatpush1.bf16.msra.mxu0 0
    %429 = vmatprep.subr.bf16.mxu0 0
    %430 = vmatpush1.bf16.msra.mxu0 0
    %431 = vmatprep.subr.bf16.mxu0 0
    %432 = vmatpush1.bf16.msra.mxu0 0
    %433 = vmatprep.subr.bf16.mxu0 0
    %434 = vmatpush1.bf16.msra.mxu0 0
    %435 = vmatprep.subr.bf16.mxu0 0
    %436 = vmatpush1.bf16.msra.mxu0 %v139
    %437 = vmatprep.subr.bf16.mxu0 0
    %438 = vmatpush1.bf16.msra.mxu0 %v138
    %439 = vmatprep.subr.bf16.mxu0 0
    %440 = vmatpush2.bf16.msra.mxu0 0
    %441 = vmatprep.subr.bf16.mxu0 0
    %442 = vmatpush2.bf16.msra.mxu0 0
    %443 = vmatprep.subr.bf16.mxu0 0
    %444 = vmatpush2.bf16.msra.mxu0 0
    %445 = vmatprep.subr.bf16.mxu0 0
    %446 = vmatpush2.bf16.msra.mxu0 0
    %447 = vmatprep.subr.bf16.mxu0 0
    %448 = vmatpush2.bf16.msra.mxu0 0
    %449 = vmatprep.subr.bf16.mxu0 0
    %450 = vmatpush2.bf16.msra.mxu0 0
    %451 = vmatprep.subr.bf16.mxu0 0
    %452 = vmatpush2.bf16.msra.mxu0 0
    %453 = vmatprep.subr.bf16.mxu0 0
    %454 = vmatpush2.bf16.msra.mxu0 0
    %455 = vmatprep.mubr.bf16.mxu0 0
    %456 = vmatmul.mubr.bf16.gmra.mxu0 %v421
    %v457 = vpop.f32.mrf.mxu0
    %v458 = vadd.f32 %v65, %v457
    %v459 = vpop.f32.mrf.mxu0
    %v460 = vpop.f32.mrf.mxu0
    %v461 = vpop.f32.mrf.mxu0
    %462 = vdwg.mxu0
    %v463 = vadd.f32 %v272, %v365
    %v464 = vmul.f32 %v463, 3.0
    %v465 = vadd.f32 %v180, %v464
    %v466 = vadd.f32 %v465, %v458
    %v467 = vstv %s70
    %v468 = vmul.f32 %v467, %v466
    %v469 = vadd.f32 %v67, %v468
    %s470 = sld [smem:[#allocation3 + $0x1]]
    %s471 = sld [smem:[#allocation4 + $0x1]]
    %s472 = sld [smem:[#allocation5 + $0x1]]
    %v473 = vpack.c.bf16 %v469, %v469
    %v475 = vsel %vm84, %v473, 0
    %477 = vmatprep.subr.bf16.mxu0 0
    %478 = vmatpush1.bf16.msra.mxu0 0
    %479 = vmatprep.subr.bf16.mxu0 0
    %480 = vmatpush1.bf16.msra.mxu0 0
    %481 = vmatprep.subr.bf16.mxu0 0
    %482 = vmatpush1.bf16.msra.mxu0 0
    %483 = vmatprep.subr.bf16.mxu0 0
    %484 = vmatpush1.bf16.msra.mxu0 0
    %485 = vmatprep.subr.bf16.mxu0 0
    %486 = vmatpush1.bf16.msra.mxu0 0
    %487 = vmatprep.subr.bf16.mxu0 0
    %488 = vmatpush1.bf16.msra.mxu0 0
    %489 = vmatprep.subr.bf16.mxu0 0
    %490 = vmatpush1.bf16.msra.mxu0 %v81
    %491 = vmatprep.subr.bf16.mxu0 0
    %492 = vmatpush1.bf16.msra.mxu0 %v80
    %493 = vmatprep.subr.bf16.mxu0 0
    %494 = vmatpush2.bf16.msra.mxu0 0
    %495 = vmatprep.subr.bf16.mxu0 0
    %496 = vmatpush2.bf16.msra.mxu0 0
    %497 = vmatprep.subr.bf16.mxu0 0
    %498 = vmatpush2.bf16.msra.mxu0 0
    %499 = vmatprep.subr.bf16.mxu0 0
    %500 = vmatpush2.bf16.msra.mxu0 0
    %501 = vmatprep.subr.bf16.mxu0 0
    %502 = vmatpush2.bf16.msra.mxu0 0
    %503 = vmatprep.subr.bf16.mxu0 0
    %504 = vmatpush2.bf16.msra.mxu0 0
    %505 = vmatprep.subr.bf16.mxu0 0
    %506 = vmatpush2.bf16.msra.mxu0 0
    %507 = vmatprep.subr.bf16.mxu0 0
    %508 = vmatpush2.bf16.msra.mxu0 0
    %509 = vmatprep.mubr.bf16.mxu0 0
    %510 = vmatmul.mubr.bf16.gmra.mxu0 %v475
    %v511 = vpop.f32.mrf.mxu0
    %v512 = vadd.f32 %v58, %v511
    %v513 = vpop.f32.mrf.mxu0
    %v514 = vpop.f32.mrf.mxu0
    %v515 = vpop.f32.mrf.mxu0
    %516 = vdwg.mxu0
    %v517 = vtanh.pop %v512
    %v518 = vpack.c.bf16 %v517, %v517
    %v520 = vsel %vm84, %v518, 0
    %522 = vmatprep.subr.bf16.mxu0 0
    %523 = vmatpush1.bf16.msra.mxu0 0
    %524 = vmatprep.subr.bf16.mxu0 0
    %525 = vmatpush1.bf16.msra.mxu0 0
    %526 = vmatprep.subr.bf16.mxu0 0
    %527 = vmatpush1.bf16.msra.mxu0 0
    %528 = vmatprep.subr.bf16.mxu0 0
    %529 = vmatpush1.bf16.msra.mxu0 0
    %530 = vmatprep.subr.bf16.mxu0 0
    %531 = vmatpush1.bf16.msra.mxu0 0
    %532 = vmatprep.subr.bf16.mxu0 0
    %533 = vmatpush1.bf16.msra.mxu0 0
    %534 = vmatprep.subr.bf16.mxu0 0
    %535 = vmatpush1.bf16.msra.mxu0 %v139
    %536 = vmatprep.subr.bf16.mxu0 0
    %537 = vmatpush1.bf16.msra.mxu0 %v138
    %538 = vmatprep.subr.bf16.mxu0 0
    %539 = vmatpush2.bf16.msra.mxu0 0
    %540 = vmatprep.subr.bf16.mxu0 0
    %541 = vmatpush2.bf16.msra.mxu0 0
    %542 = vmatprep.subr.bf16.mxu0 0
    %543 = vmatpush2.bf16.msra.mxu0 0
    %544 = vmatprep.subr.bf16.mxu0 0
    %545 = vmatpush2.bf16.msra.mxu0 0
    %546 = vmatprep.subr.bf16.mxu0 0
    %547 = vmatpush2.bf16.msra.mxu0 0
    %548 = vmatprep.subr.bf16.mxu0 0
    %549 = vmatpush2.bf16.msra.mxu0 0
    %550 = vmatprep.subr.bf16.mxu0 0
    %551 = vmatpush2.bf16.msra.mxu0 0
    %552 = vmatprep.subr.bf16.mxu0 0
    %553 = vmatpush2.bf16.msra.mxu0 0
    %554 = vmatprep.mubr.bf16.mxu0 0
    %555 = vmatmul.mubr.bf16.gmra.mxu0 %v520
    %v556 = vpop.f32.mrf.mxu0
    %v557 = vadd.f32 %v65, %v556
    %v558 = vpop.f32.mrf.mxu0
    %v559 = vpop.f32.mrf.mxu0
    %v560 = vpop.f32.mrf.mxu0
    %561 = vdwg.mxu0
    %v562 = vstv %s471
    %v563 = vmul.f32 %v562, %v557
    %v564 = vadd.f32 %v469, %v563
    %v565 = vpack.c.bf16 %v564, %v564
    %v567 = vsel %vm84, %v565, 0
    %569 = vmatprep.subr.bf16.mxu0 0
    %570 = vmatpush1.bf16.msra.mxu0 0
    %571 = vmatprep.subr.bf16.mxu0 0
    %572 = vmatpush1.bf16.msra.mxu0 0
    %573 = vmatprep.subr.bf16.mxu0 0
    %574 = vmatpush1.bf16.msra.mxu0 0
    %575 = vmatprep.subr.bf16.mxu0 0
    %576 = vmatpush1.bf16.msra.mxu0 0
    %577 = vmatprep.subr.bf16.mxu0 0
    %578 = vmatpush1.bf16.msra.mxu0 0
    %579 = vmatprep.subr.bf16.mxu0 0
    %580 = vmatpush1.bf16.msra.mxu0 0
    %581 = vmatprep.subr.bf16.mxu0 0
    %582 = vmatpush1.bf16.msra.mxu0 %v81
    %583 = vmatprep.subr.bf16.mxu0 0
    %584 = vmatpush1.bf16.msra.mxu0 %v80
    %585 = vmatprep.subr.bf16.mxu0 0
    %586 = vmatpush2.bf16.msra.mxu0 0
    %587 = vmatprep.subr.bf16.mxu0 0
    %588 = vmatpush2.bf16.msra.mxu0 0
    %589 = vmatprep.subr.bf16.mxu0 0
    %590 = vmatpush2.bf16.msra.mxu0 0
    %591 = vmatprep.subr.bf16.mxu0 0
    %592 = vmatpush2.bf16.msra.mxu0 0
    %593 = vmatprep.subr.bf16.mxu0 0
    %594 = vmatpush2.bf16.msra.mxu0 0
    %595 = vmatprep.subr.bf16.mxu0 0
    %596 = vmatpush2.bf16.msra.mxu0 0
    %597 = vmatprep.subr.bf16.mxu0 0
    %598 = vmatpush2.bf16.msra.mxu0 0
    %599 = vmatprep.subr.bf16.mxu0 0
    %600 = vmatpush2.bf16.msra.mxu0 0
    %601 = vmatprep.mubr.bf16.mxu0 0
    %602 = vmatmul.mubr.bf16.gmra.mxu0 %v567
    %v603 = vpop.f32.mrf.mxu0
    %v604 = vadd.f32 %v58, %v603
    %v605 = vpop.f32.mrf.mxu0
    %v606 = vpop.f32.mrf.mxu0
    %v607 = vpop.f32.mrf.mxu0
    %608 = vdwg.mxu0
    %v609 = vtanh.pop %v604
    %v610 = vpack.c.bf16 %v609, %v609
    %v612 = vsel %vm84, %v610, 0
    %614 = vmatprep.subr.bf16.mxu0 0
    %615 = vmatpush1.bf16.msra.mxu0 0
    %616 = vmatprep.subr.bf16.mxu0 0
    %617 = vmatpush1.bf16.msra.mxu0 0
    %618 = vmatprep.subr.bf16.mxu0 0
    %619 = vmatpush1.bf16.msra.mxu0 0
    %620 = vmatprep.subr.bf16.mxu0 0
    %621 = vmatpush1.bf16.msra.mxu0 0
    %622 = vmatprep.subr.bf16.mxu0 0
    %623 = vmatpush1.bf16.msra.mxu0 0
    %624 = vmatprep.subr.bf16.mxu0 0
    %625 = vmatpush1.bf16.msra.mxu0 0
    %626 = vmatprep.subr.bf16.mxu0 0
    %627 = vmatpush1.bf16.msra.mxu0 %v139
    %628 = vmatprep.subr.bf16.mxu0 0
    %629 = vmatpush1.bf16.msra.mxu0 %v138
    %630 = vmatprep.subr.bf16.mxu0 0
    %631 = vmatpush2.bf16.msra.mxu0 0
    %632 = vmatprep.subr.bf16.mxu0 0
    %633 = vmatpush2.bf16.msra.mxu0 0
    %634 = vmatprep.subr.bf16.mxu0 0
    %635 = vmatpush2.bf16.msra.mxu0 0
    %636 = vmatprep.subr.bf16.mxu0 0
    %637 = vmatpush2.bf16.msra.mxu0 0
    %638 = vmatprep.subr.bf16.mxu0 0
    %639 = vmatpush2.bf16.msra.mxu0 0
    %640 = vmatprep.subr.bf16.mxu0 0
    %641 = vmatpush2.bf16.msra.mxu0 0
    %642 = vmatprep.subr.bf16.mxu0 0
    %643 = vmatpush2.bf16.msra.mxu0 0
    %644 = vmatprep.subr.bf16.mxu0 0
    %645 = vmatpush2.bf16.msra.mxu0 0
    %646 = vmatprep.mubr.bf16.mxu0 0
    %647 = vmatmul.mubr.bf16.gmra.mxu0 %v612
    %v648 = vpop.f32.mrf.mxu0
    %v649 = vadd.f32 %v65, %v648
    %v650 = vpop.f32.mrf.mxu0
    %v651 = vpop.f32.mrf.mxu0
    %v652 = vpop.f32.mrf.mxu0
    %653 = vdwg.mxu0
    %v654 = vstv %s470
    %v655 = vmul.f32 %v654, %v649
    %v656 = vadd.f32 %v469, %v655
    %v657 = vsub.f32 %v656, %v563
    %v658 = vpack.c.bf16 %v657, %v657
    %v660 = vsel %vm84, %v658, 0
    %662 = vmatprep.subr.bf16.mxu0 0
    %663 = vmatpush1.bf16.msra.mxu0 0
    %664 = vmatprep.subr.bf16.mxu0 0
    %665 = vmatpush1.bf16.msra.mxu0 0
    %666 = vmatprep.subr.bf16.mxu0 0
    %667 = vmatpush1.bf16.msra.mxu0 0
    %668 = vmatprep.subr.bf16.mxu0 0
    %669 = vmatpush1.bf16.msra.mxu0 0
    %670 = vmatprep.subr.bf16.mxu0 0
    %671 = vmatpush1.bf16.msra.mxu0 0
    %672 = vmatprep.subr.bf16.mxu0 0
    %673 = vmatpush1.bf16.msra.mxu0 0
    %674 = vmatprep.subr.bf16.mxu0 0
    %675 = vmatpush1.bf16.msra.mxu0 %v81
    %676 = vmatprep.subr.bf16.mxu0 0
    %677 = vmatpush1.bf16.msra.mxu0 %v80
    %678 = vmatprep.subr.bf16.mxu0 0
    %679 = vmatpush2.bf16.msra.mxu0 0
    %680 = vmatprep.subr.bf16.mxu0 0
    %681 = vmatpush2.bf16.msra.mxu0 0
    %682 = vmatprep.subr.bf16.mxu0 0
    %683 = vmatpush2.bf16.msra.mxu0 0
    %684 = vmatprep.subr.bf16.mxu0 0
    %685 = vmatpush2.bf16.msra.mxu0 0
    %686 = vmatprep.subr.bf16.mxu0 0
    %687 = vmatpush2.bf16.msra.mxu0 0
    %688 = vmatprep.subr.bf16.mxu0 0
    %689 = vmatpush2.bf16.msra.mxu0 0
    %690 = vmatprep.subr.bf16.mxu0 0
    %691 = vmatpush2.bf16.msra.mxu0 0
    %692 = vmatprep.subr.bf16.mxu0 0
    %693 = vmatpush2.bf16.msra.mxu0 0
    %694 = vmatprep.mubr.bf16.mxu0 0
    %695 = vmatmul.mubr.bf16.gmra.mxu0 %v660
    %v696 = vpop.f32.mrf.mxu0
    %v697 = vadd.f32 %v58, %v696
    %v698 = vpop.f32.mrf.mxu0
    %v699 = vpop.f32.mrf.mxu0
    %v700 = vpop.f32.mrf.mxu0
    %701 = vdwg.mxu0
    %v702 = vtanh.pop %v697
    %v703 = vpack.c.bf16 %v702, %v702
    %v705 = vsel %vm84, %v703, 0
    %707 = vmatprep.subr.bf16.mxu0 0
    %708 = vmatpush1.bf16.msra.mxu0 0
    %709 = vmatprep.subr.bf16.mxu0 0
    %710 = vmatpush1.bf16.msra.mxu0 0
    %711 = vmatprep.subr.bf16.mxu0 0
    %712 = vmatpush1.bf16.msra.mxu0 0
    %713 = vmatprep.subr.bf16.mxu0 0
    %714 = vmatpush1.bf16.msra.mxu0 0
    %715 = vmatprep.subr.bf16.mxu0 0
    %716 = vmatpush1.bf16.msra.mxu0 0
    %717 = vmatprep.subr.bf16.mxu0 0
    %718 = vmatpush1.bf16.msra.mxu0 0
    %719 = vmatprep.subr.bf16.mxu0 0
    %720 = vmatpush1.bf16.msra.mxu0 %v139
    %721 = vmatprep.subr.bf16.mxu0 0
    %722 = vmatpush1.bf16.msra.mxu0 %v138
    %723 = vmatprep.subr.bf16.mxu0 0
    %724 = vmatpush2.bf16.msra.mxu0 0
    %725 = vmatprep.subr.bf16.mxu0 0
    %726 = vmatpush2.bf16.msra.mxu0 0
    %727 = vmatprep.subr.bf16.mxu0 0
    %728 = vmatpush2.bf16.msra.mxu0 0
    %729 = vmatprep.subr.bf16.mxu0 0
    %730 = vmatpush2.bf16.msra.mxu0 0
    %731 = vmatprep.subr.bf16.mxu0 0
    %732 = vmatpush2.bf16.msra.mxu0 0
    %733 = vmatprep.subr.bf16.mxu0 0
    %734 = vmatpush2.bf16.msra.mxu0 0
    %735 = vmatprep.subr.bf16.mxu0 0
    %736 = vmatpush2.bf16.msra.mxu0 0
    %737 = vmatprep.subr.bf16.mxu0 0
    %738 = vmatpush2.bf16.msra.mxu0 0
    %739 = vmatprep.mubr.bf16.mxu0 0
    %740 = vmatmul.mubr.bf16.gmra.mxu0 %v705
    %v741 = vpop.f32.mrf.mxu0
    %v742 = vadd.f32 %v65, %v741
    %v743 = vpop.f32.mrf.mxu0
    %v744 = vpop.f32.mrf.mxu0
    %v745 = vpop.f32.mrf.mxu0
    %746 = vdwg.mxu0
    %v747 = vsub.f32 %v557, %v649
    %v748 = vadd.f32 %v747, %v742
    %v749 = vmul.f32 %v654, %v748
    %v750 = vadd.f32 %v469, %v749
    %v751 = vpack.c.bf16 %v750, %v750
    %v753 = vsel %vm84, %v751, 0
    %755 = vmatprep.subr.bf16.mxu0 0
    %756 = vmatpush1.bf16.msra.mxu0 0
    %757 = vmatprep.subr.bf16.mxu0 0
    %758 = vmatpush1.bf16.msra.mxu0 0
    %759 = vmatprep.subr.bf16.mxu0 0
    %760 = vmatpush1.bf16.msra.mxu0 0
    %761 = vmatprep.subr.bf16.mxu0 0
    %762 = vmatpush1.bf16.msra.mxu0 0
    %763 = vmatprep.subr.bf16.mxu0 0
    %764 = vmatpush1.bf16.msra.mxu0 0
    %765 = vmatprep.subr.bf16.mxu0 0
    %766 = vmatpush1.bf16.msra.mxu0 0
    %767 = vmatprep.subr.bf16.mxu0 0
    %768 = vmatpush1.bf16.msra.mxu0 %v81
    %769 = vmatprep.subr.bf16.mxu0 0
    %770 = vmatpush1.bf16.msra.mxu0 %v80
    %771 = vmatprep.subr.bf16.mxu0 0
    %772 = vmatpush2.bf16.msra.mxu0 0
    %773 = vmatprep.subr.bf16.mxu0 0
    %774 = vmatpush2.bf16.msra.mxu0 0
    %775 = vmatprep.subr.bf16.mxu0 0
    %776 = vmatpush2.bf16.msra.mxu0 0
    %777 = vmatprep.subr.bf16.mxu0 0
    %778 = vmatpush2.bf16.msra.mxu0 0
    %779 = vmatprep.subr.bf16.mxu0 0
    %780 = vmatpush2.bf16.msra.mxu0 0
    %781 = vmatprep.subr.bf16.mxu0 0
    %782 = vmatpush2.bf16.msra.mxu0 0
    %783 = vmatprep.subr.bf16.mxu0 0
    %784 = vmatpush2.bf16.msra.mxu0 0
    %785 = vmatprep.subr.bf16.mxu0 0
    %786 = vmatpush2.bf16.msra.mxu0 0
    %787 = vmatprep.mubr.bf16.mxu0 0
    %788 = vmatmul.mubr.bf16.gmra.mxu0 %v753
    %v789 = vpop.f32.mrf.mxu0
    %v790 = vadd.f32 %v58, %v789
    %v791 = vpop.f32.mrf.mxu0
    %v792 = vpop.f32.mrf.mxu0
    %v793 = vpop.f32.mrf.mxu0
    %794 = vdwg.mxu0
    %v795 = vtanh.pop %v790
    %v796 = vpack.c.bf16 %v795, %v795
    %v798 = vsel %vm84, %v796, 0
    %800 = vmatprep.subr.bf16.mxu0 0
    %801 = vmatpush1.bf16.msra.mxu0 0
    %802 = vmatprep.subr.bf16.mxu0 0
    %803 = vmatpush1.bf16.msra.mxu0 0
    %804 = vmatprep.subr.bf16.mxu0 0
    %805 = vmatpush1.bf16.msra.mxu0 0
    %806 = vmatprep.subr.bf16.mxu0 0
    %807 = vmatpush1.bf16.msra.mxu0 0
    %808 = vmatprep.subr.bf16.mxu0 0
    %809 = vmatpush1.bf16.msra.mxu0 0
    %810 = vmatprep.subr.bf16.mxu0 0
    %811 = vmatpush1.bf16.msra.mxu0 0
    %812 = vmatprep.subr.bf16.mxu0 0
    %813 = vmatpush1.bf16.msra.mxu0 %v139
    %814 = vmatprep.subr.bf16.mxu0 0
    %815 = vmatpush1.bf16.msra.mxu0 %v138
    %816 = vmatprep.subr.bf16.mxu0 0
    %817 = vmatpush2.bf16.msra.mxu0 0
    %818 = vmatprep.subr.bf16.mxu0 0
    %819 = vmatpush2.bf16.msra.mxu0 0
    %820 = vmatprep.subr.bf16.mxu0 0
    %821 = vmatpush2.bf16.msra.mxu0 0
    %822 = vmatprep.subr.bf16.mxu0 0
    %823 = vmatpush2.bf16.msra.mxu0 0
    %824 = vmatprep.subr.bf16.mxu0 0
    %825 = vmatpush2.bf16.msra.mxu0 0
    %826 = vmatprep.subr.bf16.mxu0 0
    %827 = vmatpush2.bf16.msra.mxu0 0
    %828 = vmatprep.subr.bf16.mxu0 0
    %829 = vmatpush2.bf16.msra.mxu0 0
    %830 = vmatprep.subr.bf16.mxu0 0
    %831 = vmatpush2.bf16.msra.mxu0 0
    %832 = vmatprep.mubr.bf16.mxu0 0
    %833 = vmatmul.mubr.bf16.gmra.mxu0 %v798
    %v834 = vpop.f32.mrf.mxu0
    %v835 = vadd.f32 %v65, %v834
    %v836 = vpop.f32.mrf.mxu0
    %v837 = vpop.f32.mrf.mxu0
    %v838 = vpop.f32.mrf.mxu0
    %839 = vdwg.mxu0
    %v840 = vadd.f32 %v649, %v742
    %v841 = vmul.f32 %v840, 3.0
    %v842 = vadd.f32 %v557, %v841
    %v843 = vadd.f32 %v842, %v835
    %v844 = vstv %s472
    %v845 = vmul.f32 %v844, %v843
    %v846 = vadd.f32 %v469, %v845
    %s847 = sld [smem:[#allocation3 + $0x2]]
    %s848 = sld [smem:[#allocation4 + $0x2]]
    %s849 = sld [smem:[#allocation5 + $0x2]]
    %v850 = vpack.c.bf16 %v846, %v846
    %v852 = vsel %vm84, %v850, 0
    %854 = vmatprep.subr.bf16.mxu0 0
    %855 = vmatpush1.bf16.msra.mxu0 0
    %856 = vmatprep.subr.bf16.mxu0 0
    %857 = vmatpush1.bf16.msra.mxu0 0
    %858 = vmatprep.subr.bf16.mxu0 0
    %859 = vmatpush1.bf16.msra.mxu0 0
    %860 = vmatprep.subr.bf16.mxu0 0
    %861 = vmatpush1.bf16.msra.mxu0 0
    %862 = vmatprep.subr.bf16.mxu0 0
    %863 = vmatpush1.bf16.msra.mxu0 0
    %864 = vmatprep.subr.bf16.mxu0 0
    %865 = vmatpush1.bf16.msra.mxu0 0
    %866 = vmatprep.subr.bf16.mxu0 0
    %867 = vmatpush1.bf16.msra.mxu0 %v81
    %868 = vmatprep.subr.bf16.mxu0 0
    %869 = vmatpush1.bf16.msra.mxu0 %v80
    %870 = vmatprep.subr.bf16.mxu0 0
    %871 = vmatpush2.bf16.msra.mxu0 0
    %872 = vmatprep.subr.bf16.mxu0 0
    %873 = vmatpush2.bf16.msra.mxu0 0
    %874 = vmatprep.subr.bf16.mxu0 0
    %875 = vmatpush2.bf16.msra.mxu0 0
    %876 = vmatprep.subr.bf16.mxu0 0
    %877 = vmatpush2.bf16.msra.mxu0 0
    %878 = vmatprep.subr.bf16.mxu0 0
    %879 = vmatpush2.bf16.msra.mxu0 0
    %880 = vmatprep.subr.bf16.mxu0 0
    %881 = vmatpush2.bf16.msra.mxu0 0
    %882 = vmatprep.subr.bf16.mxu0 0
    %883 = vmatpush2.bf16.msra.mxu0 0
    %884 = vmatprep.subr.bf16.mxu0 0
    %885 = vmatpush2.bf16.msra.mxu0 0
    %886 = vmatprep.mubr.bf16.mxu0 0
    %887 = vmatmul.mubr.bf16.gmra.mxu0 %v852
    %v888 = vpop.f32.mrf.mxu0
    %v889 = vadd.f32 %v58, %v888
    %v890 = vpop.f32.mrf.mxu0
    %v891 = vpop.f32.mrf.mxu0
    %v892 = vpop.f32.mrf.mxu0
    %893 = vdwg.mxu0
    %v894 = vtanh.pop %v889
    %v895 = vpack.c.bf16 %v894, %v894
    %v897 = vsel %vm84, %v895, 0
    %899 = vmatprep.subr.bf16.mxu0 0
    %900 = vmatpush1.bf16.msra.mxu0 0
    %901 = vmatprep.subr.bf16.mxu0 0
    %902 = vmatpush1.bf16.msra.mxu0 0
    %903 = vmatprep.subr.bf16.mxu0 0
    %904 = vmatpush1.bf16.msra.mxu0 0
    %905 = vmatprep.subr.bf16.mxu0 0
    %906 = vmatpush1.bf16.msra.mxu0 0
    %907 = vmatprep.subr.bf16.mxu0 0
    %908 = vmatpush1.bf16.msra.mxu0 0
    %909 = vmatprep.subr.bf16.mxu0 0
    %910 = vmatpush1.bf16.msra.mxu0 0
    %911 = vmatprep.subr.bf16.mxu0 0
    %912 = vmatpush1.bf16.msra.mxu0 %v139
    %913 = vmatprep.subr.bf16.mxu0 0
    %914 = vmatpush1.bf16.msra.mxu0 %v138
    %915 = vmatprep.subr.bf16.mxu0 0
    %916 = vmatpush2.bf16.msra.mxu0 0
    %917 = vmatprep.subr.bf16.mxu0 0
    %918 = vmatpush2.bf16.msra.mxu0 0
    %919 = vmatprep.subr.bf16.mxu0 0
    %920 = vmatpush2.bf16.msra.mxu0 0
    %921 = vmatprep.subr.bf16.mxu0 0
    %922 = vmatpush2.bf16.msra.mxu0 0
    %923 = vmatprep.subr.bf16.mxu0 0
    %924 = vmatpush2.bf16.msra.mxu0 0
    %925 = vmatprep.subr.bf16.mxu0 0
    %926 = vmatpush2.bf16.msra.mxu0 0
    %927 = vmatprep.subr.bf16.mxu0 0
    %928 = vmatpush2.bf16.msra.mxu0 0
    %929 = vmatprep.subr.bf16.mxu0 0
    %930 = vmatpush2.bf16.msra.mxu0 0
    %931 = vmatprep.mubr.bf16.mxu0 0
    %932 = vmatmul.mubr.bf16.gmra.mxu0 %v897
    %v933 = vpop.f32.mrf.mxu0
    %v934 = vadd.f32 %v65, %v933
    %v935 = vpop.f32.mrf.mxu0
    %v936 = vpop.f32.mrf.mxu0
    %v937 = vpop.f32.mrf.mxu0
    %938 = vdwg.mxu0
    %v939 = vstv %s848
    %v940 = vmul.f32 %v939, %v934
    %v941 = vadd.f32 %v846, %v940
    %v942 = vpack.c.bf16 %v941, %v941
    %v944 = vsel %vm84, %v942, 0
    %946 = vmatprep.subr.bf16.mxu0 0
    %947 = vmatpush1.bf16.msra.mxu0 0
    %948 = vmatprep.subr.bf16.mxu0 0
    %949 = vmatpush1.bf16.msra.mxu0 0
    %950 = vmatprep.subr.bf16.mxu0 0
    %951 = vmatpush1.bf16.msra.mxu0 0
    %952 = vmatprep.subr.bf16.mxu0 0
    %953 = vmatpush1.bf16.msra.mxu0 0
    %954 = vmatprep.subr.bf16.mxu0 0
    %955 = vmatpush1.bf16.msra.mxu0 0
    %956 = vmatprep.subr.bf16.mxu0 0
    %957 = vmatpush1.bf16.msra.mxu0 0
    %958 = vmatprep.subr.bf16.mxu0 0
    %959 = vmatpush1.bf16.msra.mxu0 %v81
    %960 = vmatprep.subr.bf16.mxu0 0
    %961 = vmatpush1.bf16.msra.mxu0 %v80
    %962 = vmatprep.subr.bf16.mxu0 0
    %963 = vmatpush2.bf16.msra.mxu0 0
    %964 = vmatprep.subr.bf16.mxu0 0
    %965 = vmatpush2.bf16.msra.mxu0 0
    %966 = vmatprep.subr.bf16.mxu0 0
    %967 = vmatpush2.bf16.msra.mxu0 0
    %968 = vmatprep.subr.bf16.mxu0 0
    %969 = vmatpush2.bf16.msra.mxu0 0
    %970 = vmatprep.subr.bf16.mxu0 0
    %971 = vmatpush2.bf16.msra.mxu0 0
    %972 = vmatprep.subr.bf16.mxu0 0
    %973 = vmatpush2.bf16.msra.mxu0 0
    %974 = vmatprep.subr.bf16.mxu0 0
    %975 = vmatpush2.bf16.msra.mxu0 0
    %976 = vmatprep.subr.bf16.mxu0 0
    %977 = vmatpush2.bf16.msra.mxu0 0
    %978 = vmatprep.mubr.bf16.mxu0 0
    %979 = vmatmul.mubr.bf16.gmra.mxu0 %v944
    %v980 = vpop.f32.mrf.mxu0
    %v981 = vadd.f32 %v58, %v980
    %v982 = vpop.f32.mrf.mxu0
    %v983 = vpop.f32.mrf.mxu0
    %v984 = vpop.f32.mrf.mxu0
    %985 = vdwg.mxu0
    %v986 = vtanh.pop %v981
    %v987 = vpack.c.bf16 %v986, %v986
    %v989 = vsel %vm84, %v987, 0
    %991 = vmatprep.subr.bf16.mxu0 0
    %992 = vmatpush1.bf16.msra.mxu0 0
    %993 = vmatprep.subr.bf16.mxu0 0
    %994 = vmatpush1.bf16.msra.mxu0 0
    %995 = vmatprep.subr.bf16.mxu0 0
    %996 = vmatpush1.bf16.msra.mxu0 0
    %997 = vmatprep.subr.bf16.mxu0 0
    %998 = vmatpush1.bf16.msra.mxu0 0
    %999 = vmatprep.subr.bf16.mxu0 0
    %1000 = vmatpush1.bf16.msra.mxu0 0
    %1001 = vmatprep.subr.bf16.mxu0 0
    %1002 = vmatpush1.bf16.msra.mxu0 0
    %1003 = vmatprep.subr.bf16.mxu0 0
    %1004 = vmatpush1.bf16.msra.mxu0 %v139
    %1005 = vmatprep.subr.bf16.mxu0 0
    %1006 = vmatpush1.bf16.msra.mxu0 %v138
    %1007 = vmatprep.subr.bf16.mxu0 0
    %1008 = vmatpush2.bf16.msra.mxu0 0
    %1009 = vmatprep.subr.bf16.mxu0 0
    %1010 = vmatpush2.bf16.msra.mxu0 0
    %1011 = vmatprep.subr.bf16.mxu0 0
    %1012 = vmatpush2.bf16.msra.mxu0 0
    %1013 = vmatprep.subr.bf16.mxu0 0
    %1014 = vmatpush2.bf16.msra.mxu0 0
    %1015 = vmatprep.subr.bf16.mxu0 0
    %1016 = vmatpush2.bf16.msra.mxu0 0
    %1017 = vmatprep.subr.bf16.mxu0 0
    %1018 = vmatpush2.bf16.msra.mxu0 0
    %1019 = vmatprep.subr.bf16.mxu0 0
    %1020 = vmatpush2.bf16.msra.mxu0 0
    %1021 = vmatprep.subr.bf16.mxu0 0
    %1022 = vmatpush2.bf16.msra.mxu0 0
    %1023 = vmatprep.mubr.bf16.mxu0 0
    %1024 = vmatmul.mubr.bf16.gmra.mxu0 %v989
    %v1025 = vpop.f32.mrf.mxu0
    %v1026 = vadd.f32 %v65, %v1025
    %v1027 = vpop.f32.mrf.mxu0
    %v1028 = vpop.f32.mrf.mxu0
    %v1029 = vpop.f32.mrf.mxu0
    %1030 = vdwg.mxu0
    %v1031 = vstv %s847
    %v1032 = vmul.f32 %v1031, %v1026
    %v1033 = vadd.f32 %v846, %v1032
    %v1034 = vsub.f32 %v1033, %v940
    %v1035 = vpack.c.bf16 %v1034, %v1034
    %v1037 = vsel %vm84, %v1035, 0
    %1039 = vmatprep.subr.bf16.mxu0 0
    %1040 = vmatpush1.bf16.msra.mxu0 0
    %1041 = vmatprep.subr.bf16.mxu0 0
    %1042 = vmatpush1.bf16.msra.mxu0 0
    %1043 = vmatprep.subr.bf16.mxu0 0
    %1044 = vmatpush1.bf16.msra.mxu0 0
    %1045 = vmatprep.subr.bf16.mxu0 0
    %1046 = vmatpush1.bf16.msra.mxu0 0
    %1047 = vmatprep.subr.bf16.mxu0 0
    %1048 = vmatpush1.bf16.msra.mxu0 0
    %1049 = vmatprep.subr.bf16.mxu0 0
    %1050 = vmatpush1.bf16.msra.mxu0 0
    %1051 = vmatprep.subr.bf16.mxu0 0
    %1052 = vmatpush1.bf16.msra.mxu0 %v81
    %1053 = vmatprep.subr.bf16.mxu0 0
    %1054 = vmatpush1.bf16.msra.mxu0 %v80
    %1055 = vmatprep.subr.bf16.mxu0 0
    %1056 = vmatpush2.bf16.msra.mxu0 0
    %1057 = vmatprep.subr.bf16.mxu0 0
    %1058 = vmatpush2.bf16.msra.mxu0 0
    %1059 = vmatprep.subr.bf16.mxu0 0
    %1060 = vmatpush2.bf16.msra.mxu0 0
    %1061 = vmatprep.subr.bf16.mxu0 0
    %1062 = vmatpush2.bf16.msra.mxu0 0
    %1063 = vmatprep.subr.bf16.mxu0 0
    %1064 = vmatpush2.bf16.msra.mxu0 0
    %1065 = vmatprep.subr.bf16.mxu0 0
    %1066 = vmatpush2.bf16.msra.mxu0 0
    %1067 = vmatprep.subr.bf16.mxu0 0
    %1068 = vmatpush2.bf16.msra.mxu0 0
    %1069 = vmatprep.subr.bf16.mxu0 0
    %1070 = vmatpush2.bf16.msra.mxu0 0
    %1071 = vmatprep.mubr.bf16.mxu0 0
    %1072 = vmatmul.mubr.bf16.gmra.mxu0 %v1037
    %v1073 = vpop.f32.mrf.mxu0
    %v1074 = vadd.f32 %v58, %v1073
    %v1075 = vpop.f32.mrf.mxu0
    %v1076 = vpop.f32.mrf.mxu0
    %v1077 = vpop.f32.mrf.mxu0
    %1078 = vdwg.mxu0
    %v1079 = vtanh.pop %v1074
    %v1080 = vpack.c.bf16 %v1079, %v1079
    %v1082 = vsel %vm84, %v1080, 0
    %1084 = vmatprep.subr.bf16.mxu0 0
    %1085 = vmatpush1.bf16.msra.mxu0 0
    %1086 = vmatprep.subr.bf16.mxu0 0
    %1087 = vmatpush1.bf16.msra.mxu0 0
    %1088 = vmatprep.subr.bf16.mxu0 0
    %1089 = vmatpush1.bf16.msra.mxu0 0
    %1090 = vmatprep.subr.bf16.mxu0 0
    %1091 = vmatpush1.bf16.msra.mxu0 0
    %1092 = vmatprep.subr.bf16.mxu0 0
    %1093 = vmatpush1.bf16.msra.mxu0 0
    %1094 = vmatprep.subr.bf16.mxu0 0
    %1095 = vmatpush1.bf16.msra.mxu0 0
    %1096 = vmatprep.subr.bf16.mxu0 0
    %1097 = vmatpush1.bf16.msra.mxu0 %v139
    %1098 = vmatprep.subr.bf16.mxu0 0
    %1099 = vmatpush1.bf16.msra.mxu0 %v138
    %1100 = vmatprep.subr.bf16.mxu0 0
    %1101 = vmatpush2.bf16.msra.mxu0 0
    %1102 = vmatprep.subr.bf16.mxu0 0
    %1103 = vmatpush2.bf16.msra.mxu0 0
    %1104 = vmatprep.subr.bf16.mxu0 0
    %1105 = vmatpush2.bf16.msra.mxu0 0
    %1106 = vmatprep.subr.bf16.mxu0 0
    %1107 = vmatpush2.bf16.msra.mxu0 0
    %1108 = vmatprep.subr.bf16.mxu0 0
    %1109 = vmatpush2.bf16.msra.mxu0 0
    %1110 = vmatprep.subr.bf16.mxu0 0
    %1111 = vmatpush2.bf16.msra.mxu0 0
    %1112 = vmatprep.subr.bf16.mxu0 0
    %1113 = vmatpush2.bf16.msra.mxu0 0
    %1114 = vmatprep.subr.bf16.mxu0 0
    %1115 = vmatpush2.bf16.msra.mxu0 0
    %1116 = vmatprep.mubr.bf16.mxu0 0
    %1117 = vmatmul.mubr.bf16.gmra.mxu0 %v1082
    %v1118 = vpop.f32.mrf.mxu0
    %v1119 = vadd.f32 %v65, %v1118
    %v1120 = vpop.f32.mrf.mxu0
    %v1121 = vpop.f32.mrf.mxu0
    %v1122 = vpop.f32.mrf.mxu0
    %1123 = vdwg.mxu0
    %v1124 = vsub.f32 %v934, %v1026
    %v1125 = vadd.f32 %v1124, %v1119
    %v1126 = vmul.f32 %v1031, %v1125
    %v1127 = vadd.f32 %v846, %v1126
    %v1128 = vpack.c.bf16 %v1127, %v1127
    %v1130 = vsel %vm84, %v1128, 0
    %1132 = vmatprep.subr.bf16.mxu0 0
    %1133 = vmatpush1.bf16.msra.mxu0 0
    %1134 = vmatprep.subr.bf16.mxu0 0
    %1135 = vmatpush1.bf16.msra.mxu0 0
    %1136 = vmatprep.subr.bf16.mxu0 0
    %1137 = vmatpush1.bf16.msra.mxu0 0
    %1138 = vmatprep.subr.bf16.mxu0 0
    %1139 = vmatpush1.bf16.msra.mxu0 0
    %1140 = vmatprep.subr.bf16.mxu0 0
    %1141 = vmatpush1.bf16.msra.mxu0 0
    %1142 = vmatprep.subr.bf16.mxu0 0
    %1143 = vmatpush1.bf16.msra.mxu0 0
    %1144 = vmatprep.subr.bf16.mxu0 0
    %1145 = vmatpush1.bf16.msra.mxu0 %v81
    %1146 = vmatprep.subr.bf16.mxu0 0
    %1147 = vmatpush1.bf16.msra.mxu0 %v80
    %1148 = vmatprep.subr.bf16.mxu0 0
    %1149 = vmatpush2.bf16.msra.mxu0 0
    %1150 = vmatprep.subr.bf16.mxu0 0
    %1151 = vmatpush2.bf16.msra.mxu0 0
    %1152 = vmatprep.subr.bf16.mxu0 0
    %1153 = vmatpush2.bf16.msra.mxu0 0
    %1154 = vmatprep.subr.bf16.mxu0 0
    %1155 = vmatpush2.bf16.msra.mxu0 0
    %1156 = vmatprep.subr.bf16.mxu0 0
    %1157 = vmatpush2.bf16.msra.mxu0 0
    %1158 = vmatprep.subr.bf16.mxu0 0
    %1159 = vmatpush2.bf16.msra.mxu0 0
    %1160 = vmatprep.subr.bf16.mxu0 0
    %1161 = vmatpush2.bf16.msra.mxu0 0
    %1162 = vmatprep.subr.bf16.mxu0 0
    %1163 = vmatpush2.bf16.msra.mxu0 0
    %1164 = vmatprep.mubr.bf16.mxu0 0
    %1165 = vmatmul.mubr.bf16.gmra.mxu0 %v1130
    %v1166 = vpop.f32.mrf.mxu0
    %v1167 = vadd.f32 %v58, %v1166
    %v1168 = vpop.f32.mrf.mxu0
    %v1169 = vpop.f32.mrf.mxu0
    %v1170 = vpop.f32.mrf.mxu0
    %1171 = vdwg.mxu0
    %v1172 = vtanh.pop %v1167
    %v1173 = vpack.c.bf16 %v1172, %v1172
    %v1175 = vsel %vm84, %v1173, 0
    %1177 = vmatprep.subr.bf16.mxu0 0
    %1178 = vmatpush1.bf16.msra.mxu0 0
    %1179 = vmatprep.subr.bf16.mxu0 0
    %1180 = vmatpush1.bf16.msra.mxu0 0
    %1181 = vmatprep.subr.bf16.mxu0 0
    %1182 = vmatpush1.bf16.msra.mxu0 0
    %1183 = vmatprep.subr.bf16.mxu0 0
    %1184 = vmatpush1.bf16.msra.mxu0 0
    %1185 = vmatprep.subr.bf16.mxu0 0
    %1186 = vmatpush1.bf16.msra.mxu0 0
    %1187 = vmatprep.subr.bf16.mxu0 0
    %1188 = vmatpush1.bf16.msra.mxu0 0
    %1189 = vmatprep.subr.bf16.mxu0 0
    %1190 = vmatpush1.bf16.msra.mxu0 %v139
    %1191 = vmatprep.subr.bf16.mxu0 0
    %1192 = vmatpush1.bf16.msra.mxu0 %v138
    %1193 = vmatprep.subr.bf16.mxu0 0
    %1194 = vmatpush2.bf16.msra.mxu0 0
    %1195 = vmatprep.subr.bf16.mxu0 0
    %1196 = vmatpush2.bf16.msra.mxu0 0
    %1197 = vmatprep.subr.bf16.mxu0 0
    %1198 = vmatpush2.bf16.msra.mxu0 0
    %1199 = vmatprep.subr.bf16.mxu0 0
    %1200 = vmatpush2.bf16.msra.mxu0 0
    %1201 = vmatprep.subr.bf16.mxu0 0
    %1202 = vmatpush2.bf16.msra.mxu0 0
    %1203 = vmatprep.subr.bf16.mxu0 0
    %1204 = vmatpush2.bf16.msra.mxu0 0
    %1205 = vmatprep.subr.bf16.mxu0 0
    %1206 = vmatpush2.bf16.msra.mxu0 0
    %1207 = vmatprep.subr.bf16.mxu0 0
    %1208 = vmatpush2.bf16.msra.mxu0 0
    %1209 = vmatprep.mubr.bf16.mxu0 0
    %1210 = vmatmul.mubr.bf16.gmra.mxu0 %v1175
    %v1211 = vpop.f32.mrf.mxu0
    %v1212 = vadd.f32 %v65, %v1211
    %v1213 = vpop.f32.mrf.mxu0
    %v1214 = vpop.f32.mrf.mxu0
    %v1215 = vpop.f32.mrf.mxu0
    %1216 = vdwg.mxu0
    %v1217 = vadd.f32 %v1026, %v1119
    %v1218 = vmul.f32 %v1217, 3.0
    %v1219 = vadd.f32 %v934, %v1218
    %v1220 = vadd.f32 %v1219, %v1212
    %v1221 = vstv %s849
    %v1222 = vmul.f32 %v1221, %v1220
    %v1223 = vadd.f32 %v846, %v1222
    %s1224 = sld [smem:[#allocation3 + $0x3]]
    %s1225 = sld [smem:[#allocation4 + $0x3]]
    %s1226 = sld [smem:[#allocation5 + $0x3]]
    %v1227 = vpack.c.bf16 %v1223, %v1223
    %v1229 = vsel %vm84, %v1227, 0
    %1231 = vmatprep.subr.bf16.mxu0 0
    %1232 = vmatpush1.bf16.msra.mxu0 0
    %1233 = vmatprep.subr.bf16.mxu0 0
    %1234 = vmatpush1.bf16.msra.mxu0 0
    %1235 = vmatprep.subr.bf16.mxu0 0
    %1236 = vmatpush1.bf16.msra.mxu0 0
    %1237 = vmatprep.subr.bf16.mxu0 0
    %1238 = vmatpush1.bf16.msra.mxu0 0
    %1239 = vmatprep.subr.bf16.mxu0 0
    %1240 = vmatpush1.bf16.msra.mxu0 0
    %1241 = vmatprep.subr.bf16.mxu0 0
    %1242 = vmatpush1.bf16.msra.mxu0 0
    %1243 = vmatprep.subr.bf16.mxu0 0
    %1244 = vmatpush1.bf16.msra.mxu0 %v81
    %1245 = vmatprep.subr.bf16.mxu0 0
    %1246 = vmatpush1.bf16.msra.mxu0 %v80
    %1247 = vmatprep.subr.bf16.mxu0 0
    %1248 = vmatpush2.bf16.msra.mxu0 0
    %1249 = vmatprep.subr.bf16.mxu0 0
    %1250 = vmatpush2.bf16.msra.mxu0 0
    %1251 = vmatprep.subr.bf16.mxu0 0
    %1252 = vmatpush2.bf16.msra.mxu0 0
    %1253 = vmatprep.subr.bf16.mxu0 0
    %1254 = vmatpush2.bf16.msra.mxu0 0
    %1255 = vmatprep.subr.bf16.mxu0 0
    %1256 = vmatpush2.bf16.msra.mxu0 0
    %1257 = vmatprep.subr.bf16.mxu0 0
    %1258 = vmatpush2.bf16.msra.mxu0 0
    %1259 = vmatprep.subr.bf16.mxu0 0
    %1260 = vmatpush2.bf16.msra.mxu0 0
    %1261 = vmatprep.subr.bf16.mxu0 0
    %1262 = vmatpush2.bf16.msra.mxu0 0
    %1263 = vmatprep.mubr.bf16.mxu0 0
    %1264 = vmatmul.mubr.bf16.gmra.mxu0 %v1229
    %v1265 = vpop.f32.mrf.mxu0
    %v1266 = vadd.f32 %v58, %v1265
    %v1267 = vpop.f32.mrf.mxu0
    %v1268 = vpop.f32.mrf.mxu0
    %v1269 = vpop.f32.mrf.mxu0
    %1270 = vdwg.mxu0
    %v1271 = vtanh.pop %v1266
    %v1272 = vpack.c.bf16 %v1271, %v1271
    %v1274 = vsel %vm84, %v1272, 0
    %1276 = vmatprep.subr.bf16.mxu0 0
    %1277 = vmatpush1.bf16.msra.mxu0 0
    %1278 = vmatprep.subr.bf16.mxu0 0
    %1279 = vmatpush1.bf16.msra.mxu0 0
    %1280 = vmatprep.subr.bf16.mxu0 0
    %1281 = vmatpush1.bf16.msra.mxu0 0
    %1282 = vmatprep.subr.bf16.mxu0 0
    %1283 = vmatpush1.bf16.msra.mxu0 0
    %1284 = vmatprep.subr.bf16.mxu0 0
    %1285 = vmatpush1.bf16.msra.mxu0 0
    %1286 = vmatprep.subr.bf16.mxu0 0
    %1287 = vmatpush1.bf16.msra.mxu0 0
    %1288 = vmatprep.subr.bf16.mxu0 0
    %1289 = vmatpush1.bf16.msra.mxu0 %v139
    %1290 = vmatprep.subr.bf16.mxu0 0
    %1291 = vmatpush1.bf16.msra.mxu0 %v138
    %1292 = vmatprep.subr.bf16.mxu0 0
    %1293 = vmatpush2.bf16.msra.mxu0 0
    %1294 = vmatprep.subr.bf16.mxu0 0
    %1295 = vmatpush2.bf16.msra.mxu0 0
    %1296 = vmatprep.subr.bf16.mxu0 0
    %1297 = vmatpush2.bf16.msra.mxu0 0
    %1298 = vmatprep.subr.bf16.mxu0 0
    %1299 = vmatpush2.bf16.msra.mxu0 0
    %1300 = vmatprep.subr.bf16.mxu0 0
    %1301 = vmatpush2.bf16.msra.mxu0 0
    %1302 = vmatprep.subr.bf16.mxu0 0
    %1303 = vmatpush2.bf16.msra.mxu0 0
    %1304 = vmatprep.subr.bf16.mxu0 0
    %1305 = vmatpush2.bf16.msra.mxu0 0
    %1306 = vmatprep.subr.bf16.mxu0 0
    %1307 = vmatpush2.bf16.msra.mxu0 0
    %1308 = vmatprep.mubr.bf16.mxu0 0
    %1309 = vmatmul.mubr.bf16.gmra.mxu0 %v1274
    %v1310 = vpop.f32.mrf.mxu0
    %v1311 = vadd.f32 %v65, %v1310
    %v1312 = vpop.f32.mrf.mxu0
    %v1313 = vpop.f32.mrf.mxu0
    %v1314 = vpop.f32.mrf.mxu0
    %1315 = vdwg.mxu0
    %v1316 = vstv %s1225
    %v1317 = vmul.f32 %v1316, %v1311
    %v1318 = vadd.f32 %v1223, %v1317
    %v1319 = vpack.c.bf16 %v1318, %v1318
    %v1321 = vsel %vm84, %v1319, 0
    %1323 = vmatprep.subr.bf16.mxu0 0
    %1324 = vmatpush1.bf16.msra.mxu0 0
    %1325 = vmatprep.subr.bf16.mxu0 0
    %1326 = vmatpush1.bf16.msra.mxu0 0
    %1327 = vmatprep.subr.bf16.mxu0 0
    %1328 = vmatpush1.bf16.msra.mxu0 0
    %1329 = vmatprep.subr.bf16.mxu0 0
    %1330 = vmatpush1.bf16.msra.mxu0 0
    %1331 = vmatprep.subr.bf16.mxu0 0
    %1332 = vmatpush1.bf16.msra.mxu0 0
    %1333 = vmatprep.subr.bf16.mxu0 0
    %1334 = vmatpush1.bf16.msra.mxu0 0
    %1335 = vmatprep.subr.bf16.mxu0 0
    %1336 = vmatpush1.bf16.msra.mxu0 %v81
    %1337 = vmatprep.subr.bf16.mxu0 0
    %1338 = vmatpush1.bf16.msra.mxu0 %v80
    %1339 = vmatprep.subr.bf16.mxu0 0
    %1340 = vmatpush2.bf16.msra.mxu0 0
    %1341 = vmatprep.subr.bf16.mxu0 0
    %1342 = vmatpush2.bf16.msra.mxu0 0
    %1343 = vmatprep.subr.bf16.mxu0 0
    %1344 = vmatpush2.bf16.msra.mxu0 0
    %1345 = vmatprep.subr.bf16.mxu0 0
    %1346 = vmatpush2.bf16.msra.mxu0 0
    %1347 = vmatprep.subr.bf16.mxu0 0
    %1348 = vmatpush2.bf16.msra.mxu0 0
    %1349 = vmatprep.subr.bf16.mxu0 0
    %1350 = vmatpush2.bf16.msra.mxu0 0
    %1351 = vmatprep.subr.bf16.mxu0 0
    %1352 = vmatpush2.bf16.msra.mxu0 0
    %1353 = vmatprep.subr.bf16.mxu0 0
    %1354 = vmatpush2.bf16.msra.mxu0 0
    %1355 = vmatprep.mubr.bf16.mxu0 0
    %1356 = vmatmul.mubr.bf16.gmra.mxu0 %v1321
    %v1357 = vpop.f32.mrf.mxu0
    %v1358 = vadd.f32 %v58, %v1357
    %v1359 = vpop.f32.mrf.mxu0
    %v1360 = vpop.f32.mrf.mxu0
    %v1361 = vpop.f32.mrf.mxu0
    %1362 = vdwg.mxu0
    %v1363 = vtanh.pop %v1358
    %v1364 = vpack.c.bf16 %v1363, %v1363
    %v1366 = vsel %vm84, %v1364, 0
    %1368 = vmatprep.subr.bf16.mxu0 0
    %1369 = vmatpush1.bf16.msra.mxu0 0
    %1370 = vmatprep.subr.bf16.mxu0 0
    %1371 = vmatpush1.bf16.msra.mxu0 0
    %1372 = vmatprep.subr.bf16.mxu0 0
    %1373 = vmatpush1.bf16.msra.mxu0 0
    %1374 = vmatprep.subr.bf16.mxu0 0
    %1375 = vmatpush1.bf16.msra.mxu0 0
    %1376 = vmatprep.subr.bf16.mxu0 0
    %1377 = vmatpush1.bf16.msra.mxu0 0
    %1378 = vmatprep.subr.bf16.mxu0 0
    %1379 = vmatpush1.bf16.msra.mxu0 0
    %1380 = vmatprep.subr.bf16.mxu0 0
    %1381 = vmatpush1.bf16.msra.mxu0 %v139
    %1382 = vmatprep.subr.bf16.mxu0 0
    %1383 = vmatpush1.bf16.msra.mxu0 %v138
    %1384 = vmatprep.subr.bf16.mxu0 0
    %1385 = vmatpush2.bf16.msra.mxu0 0
    %1386 = vmatprep.subr.bf16.mxu0 0
    %1387 = vmatpush2.bf16.msra.mxu0 0
    %1388 = vmatprep.subr.bf16.mxu0 0
    %1389 = vmatpush2.bf16.msra.mxu0 0
    %1390 = vmatprep.subr.bf16.mxu0 0
    %1391 = vmatpush2.bf16.msra.mxu0 0
    %1392 = vmatprep.subr.bf16.mxu0 0
    %1393 = vmatpush2.bf16.msra.mxu0 0
    %1394 = vmatprep.subr.bf16.mxu0 0
    %1395 = vmatpush2.bf16.msra.mxu0 0
    %1396 = vmatprep.subr.bf16.mxu0 0
    %1397 = vmatpush2.bf16.msra.mxu0 0
    %1398 = vmatprep.subr.bf16.mxu0 0
    %1399 = vmatpush2.bf16.msra.mxu0 0
    %1400 = vmatprep.mubr.bf16.mxu0 0
    %1401 = vmatmul.mubr.bf16.gmra.mxu0 %v1366
    %v1402 = vpop.f32.mrf.mxu0
    %v1403 = vadd.f32 %v65, %v1402
    %v1404 = vpop.f32.mrf.mxu0
    %v1405 = vpop.f32.mrf.mxu0
    %v1406 = vpop.f32.mrf.mxu0
    %1407 = vdwg.mxu0
    %v1408 = vstv %s1224
    %v1409 = vmul.f32 %v1408, %v1403
    %v1410 = vadd.f32 %v1223, %v1409
    %v1411 = vsub.f32 %v1410, %v1317
    %v1412 = vpack.c.bf16 %v1411, %v1411
    %v1414 = vsel %vm84, %v1412, 0
    %1416 = vmatprep.subr.bf16.mxu0 0
    %1417 = vmatpush1.bf16.msra.mxu0 0
    %1418 = vmatprep.subr.bf16.mxu0 0
    %1419 = vmatpush1.bf16.msra.mxu0 0
    %1420 = vmatprep.subr.bf16.mxu0 0
    %1421 = vmatpush1.bf16.msra.mxu0 0
    %1422 = vmatprep.subr.bf16.mxu0 0
    %1423 = vmatpush1.bf16.msra.mxu0 0
    %1424 = vmatprep.subr.bf16.mxu0 0
    %1425 = vmatpush1.bf16.msra.mxu0 0
    %1426 = vmatprep.subr.bf16.mxu0 0
    %1427 = vmatpush1.bf16.msra.mxu0 0
    %1428 = vmatprep.subr.bf16.mxu0 0
    %1429 = vmatpush1.bf16.msra.mxu0 %v81
    %1430 = vmatprep.subr.bf16.mxu0 0
    %1431 = vmatpush1.bf16.msra.mxu0 %v80
    %1432 = vmatprep.subr.bf16.mxu0 0
    %1433 = vmatpush2.bf16.msra.mxu0 0
    %1434 = vmatprep.subr.bf16.mxu0 0
    %1435 = vmatpush2.bf16.msra.mxu0 0
    %1436 = vmatprep.subr.bf16.mxu0 0
    %1437 = vmatpush2.bf16.msra.mxu0 0
    %1438 = vmatprep.subr.bf16.mxu0 0
    %1439 = vmatpush2.bf16.msra.mxu0 0
    %1440 = vmatprep.subr.bf16.mxu0 0
    %1441 = vmatpush2.bf16.msra.mxu0 0
    %1442 = vmatprep.subr.bf16.mxu0 0
    %1443 = vmatpush2.bf16.msra.mxu0 0
    %1444 = vmatprep.subr.bf16.mxu0 0
    %1445 = vmatpush2.bf16.msra.mxu0 0
    %1446 = vmatprep.subr.bf16.mxu0 0
    %1447 = vmatpush2.bf16.msra.mxu0 0
    %1448 = vmatprep.mubr.bf16.mxu0 0
    %1449 = vmatmul.mubr.bf16.gmra.mxu0 %v1414
    %v1450 = vpop.f32.mrf.mxu0
    %v1451 = vadd.f32 %v58, %v1450
    %v1452 = vpop.f32.mrf.mxu0
    %v1453 = vpop.f32.mrf.mxu0
    %v1454 = vpop.f32.mrf.mxu0
    %1455 = vdwg.mxu0
    %v1456 = vtanh.pop %v1451
    %v1457 = vpack.c.bf16 %v1456, %v1456
    %v1459 = vsel %vm84, %v1457, 0
    %1461 = vmatprep.subr.bf16.mxu0 0
    %1462 = vmatpush1.bf16.msra.mxu0 0
    %1463 = vmatprep.subr.bf16.mxu0 0
    %1464 = vmatpush1.bf16.msra.mxu0 0
    %1465 = vmatprep.subr.bf16.mxu0 0
    %1466 = vmatpush1.bf16.msra.mxu0 0
    %1467 = vmatprep.subr.bf16.mxu0 0
    %1468 = vmatpush1.bf16.msra.mxu0 0
    %1469 = vmatprep.subr.bf16.mxu0 0
    %1470 = vmatpush1.bf16.msra.mxu0 0
    %1471 = vmatprep.subr.bf16.mxu0 0
    %1472 = vmatpush1.bf16.msra.mxu0 0
    %1473 = vmatprep.subr.bf16.mxu0 0
    %1474 = vmatpush1.bf16.msra.mxu0 %v139
    %1475 = vmatprep.subr.bf16.mxu0 0
    %1476 = vmatpush1.bf16.msra.mxu0 %v138
    %1477 = vmatprep.subr.bf16.mxu0 0
    %1478 = vmatpush2.bf16.msra.mxu0 0
    %1479 = vmatprep.subr.bf16.mxu0 0
    %1480 = vmatpush2.bf16.msra.mxu0 0
    %1481 = vmatprep.subr.bf16.mxu0 0
    %1482 = vmatpush2.bf16.msra.mxu0 0
    %1483 = vmatprep.subr.bf16.mxu0 0
    %1484 = vmatpush2.bf16.msra.mxu0 0
    %1485 = vmatprep.subr.bf16.mxu0 0
    %1486 = vmatpush2.bf16.msra.mxu0 0
    %1487 = vmatprep.subr.bf16.mxu0 0
    %1488 = vmatpush2.bf16.msra.mxu0 0
    %1489 = vmatprep.subr.bf16.mxu0 0
    %1490 = vmatpush2.bf16.msra.mxu0 0
    %1491 = vmatprep.subr.bf16.mxu0 0
    %1492 = vmatpush2.bf16.msra.mxu0 0
    %1493 = vmatprep.mubr.bf16.mxu0 0
    %1494 = vmatmul.mubr.bf16.gmra.mxu0 %v1459
    %v1495 = vpop.f32.mrf.mxu0
    %v1496 = vadd.f32 %v65, %v1495
    %v1497 = vpop.f32.mrf.mxu0
    %v1498 = vpop.f32.mrf.mxu0
    %v1499 = vpop.f32.mrf.mxu0
    %1500 = vdwg.mxu0
    %v1501 = vsub.f32 %v1311, %v1403
    %v1502 = vadd.f32 %v1501, %v1496
    %v1503 = vmul.f32 %v1408, %v1502
    %v1504 = vadd.f32 %v1223, %v1503
    %v1505 = vpack.c.bf16 %v1504, %v1504
    %v1507 = vsel %vm84, %v1505, 0
    %1509 = vmatprep.subr.bf16.mxu0 0
    %1510 = vmatpush1.bf16.msra.mxu0 0
    %1511 = vmatprep.subr.bf16.mxu0 0
    %1512 = vmatpush1.bf16.msra.mxu0 0
    %1513 = vmatprep.subr.bf16.mxu0 0
    %1514 = vmatpush1.bf16.msra.mxu0 0
    %1515 = vmatprep.subr.bf16.mxu0 0
    %1516 = vmatpush1.bf16.msra.mxu0 0
    %1517 = vmatprep.subr.bf16.mxu0 0
    %1518 = vmatpush1.bf16.msra.mxu0 0
    %1519 = vmatprep.subr.bf16.mxu0 0
    %1520 = vmatpush1.bf16.msra.mxu0 0
    %1521 = vmatprep.subr.bf16.mxu0 0
    %1522 = vmatpush1.bf16.msra.mxu0 %v81
    %1523 = vmatprep.subr.bf16.mxu0 0
    %1524 = vmatpush1.bf16.msra.mxu0 %v80
    %1525 = vmatprep.subr.bf16.mxu0 0
    %1526 = vmatpush2.bf16.msra.mxu0 0
    %1527 = vmatprep.subr.bf16.mxu0 0
    %1528 = vmatpush2.bf16.msra.mxu0 0
    %1529 = vmatprep.subr.bf16.mxu0 0
    %1530 = vmatpush2.bf16.msra.mxu0 0
    %1531 = vmatprep.subr.bf16.mxu0 0
    %1532 = vmatpush2.bf16.msra.mxu0 0
    %1533 = vmatprep.subr.bf16.mxu0 0
    %1534 = vmatpush2.bf16.msra.mxu0 0
    %1535 = vmatprep.subr.bf16.mxu0 0
    %1536 = vmatpush2.bf16.msra.mxu0 0
    %1537 = vmatprep.subr.bf16.mxu0 0
    %1538 = vmatpush2.bf16.msra.mxu0 0
    %1539 = vmatprep.subr.bf16.mxu0 0
    %1540 = vmatpush2.bf16.msra.mxu0 0
    %1541 = vmatprep.mubr.bf16.mxu0 0
    %1542 = vmatmul.mubr.bf16.gmra.mxu0 %v1507
    %v1543 = vpop.f32.mrf.mxu0
    %v1544 = vadd.f32 %v58, %v1543
    %v1545 = vpop.f32.mrf.mxu0
    %v1546 = vpop.f32.mrf.mxu0
    %v1547 = vpop.f32.mrf.mxu0
    %1548 = vdwg.mxu0
    %v1549 = vtanh.pop %v1544
    %v1550 = vpack.c.bf16 %v1549, %v1549
    %v1552 = vsel %vm84, %v1550, 0
    %1554 = vmatprep.subr.bf16.mxu0 0
    %1555 = vmatpush1.bf16.msra.mxu0 0
    %1556 = vmatprep.subr.bf16.mxu0 0
    %1557 = vmatpush1.bf16.msra.mxu0 0
    %1558 = vmatprep.subr.bf16.mxu0 0
    %1559 = vmatpush1.bf16.msra.mxu0 0
    %1560 = vmatprep.subr.bf16.mxu0 0
    %1561 = vmatpush1.bf16.msra.mxu0 0
    %1562 = vmatprep.subr.bf16.mxu0 0
    %1563 = vmatpush1.bf16.msra.mxu0 0
    %1564 = vmatprep.subr.bf16.mxu0 0
    %1565 = vmatpush1.bf16.msra.mxu0 0
    %1566 = vmatprep.subr.bf16.mxu0 0
    %1567 = vmatpush1.bf16.msra.mxu0 %v139
    %1568 = vmatprep.subr.bf16.mxu0 0
    %1569 = vmatpush1.bf16.msra.mxu0 %v138
    %1570 = vmatprep.subr.bf16.mxu0 0
    %1571 = vmatpush2.bf16.msra.mxu0 0
    %1572 = vmatprep.subr.bf16.mxu0 0
    %1573 = vmatpush2.bf16.msra.mxu0 0
    %1574 = vmatprep.subr.bf16.mxu0 0
    %1575 = vmatpush2.bf16.msra.mxu0 0
    %1576 = vmatprep.subr.bf16.mxu0 0
    %1577 = vmatpush2.bf16.msra.mxu0 0
    %1578 = vmatprep.subr.bf16.mxu0 0
    %1579 = vmatpush2.bf16.msra.mxu0 0
    %1580 = vmatprep.subr.bf16.mxu0 0
    %1581 = vmatpush2.bf16.msra.mxu0 0
    %1582 = vmatprep.subr.bf16.mxu0 0
    %1583 = vmatpush2.bf16.msra.mxu0 0
    %1584 = vmatprep.subr.bf16.mxu0 0
    %1585 = vmatpush2.bf16.msra.mxu0 0
    %1586 = vmatprep.mubr.bf16.mxu0 0
    %1587 = vmatmul.mubr.bf16.gmra.mxu0 %v1552
    %v1588 = vpop.f32.mrf.mxu0
    %v1589 = vadd.f32 %v65, %v1588
    %v1590 = vpop.f32.mrf.mxu0
    %v1591 = vpop.f32.mrf.mxu0
    %v1592 = vpop.f32.mrf.mxu0
    %1593 = vdwg.mxu0
    %v1594 = vadd.f32 %v1403, %v1496
    %v1595 = vmul.f32 %v1594, 3.0
    %v1596 = vadd.f32 %v1311, %v1595
    %v1597 = vadd.f32 %v1596, %v1589
    %v1598 = vstv %s1226
    %v1599 = vmul.f32 %v1598, %v1597
    %v1600 = vadd.f32 %v1223, %v1599
    %s1601 = sld [smem:[#allocation3 + $0x4]]
    %s1602 = sld [smem:[#allocation4 + $0x4]]
    %s1603 = sld [smem:[#allocation5 + $0x4]]
    %v1604 = vpack.c.bf16 %v1600, %v1600
    %v1606 = vsel %vm84, %v1604, 0
    %1608 = vmatprep.subr.bf16.mxu0 0
    %1609 = vmatpush1.bf16.msra.mxu0 0
    %1610 = vmatprep.subr.bf16.mxu0 0
    %1611 = vmatpush1.bf16.msra.mxu0 0
    %1612 = vmatprep.subr.bf16.mxu0 0
    %1613 = vmatpush1.bf16.msra.mxu0 0
    %1614 = vmatprep.subr.bf16.mxu0 0
    %1615 = vmatpush1.bf16.msra.mxu0 0
    %1616 = vmatprep.subr.bf16.mxu0 0
    %1617 = vmatpush1.bf16.msra.mxu0 0
    %1618 = vmatprep.subr.bf16.mxu0 0
    %1619 = vmatpush1.bf16.msra.mxu0 0
    %1620 = vmatprep.subr.bf16.mxu0 0
    %1621 = vmatpush1.bf16.msra.mxu0 %v81
    %1622 = vmatprep.subr.bf16.mxu0 0
    %1623 = vmatpush1.bf16.msra.mxu0 %v80
    %1624 = vmatprep.subr.bf16.mxu0 0
    %1625 = vmatpush2.bf16.msra.mxu0 0
    %1626 = vmatprep.subr.bf16.mxu0 0
    %1627 = vmatpush2.bf16.msra.mxu0 0
    %1628 = vmatprep.subr.bf16.mxu0 0
    %1629 = vmatpush2.bf16.msra.mxu0 0
    %1630 = vmatprep.subr.bf16.mxu0 0
    %1631 = vmatpush2.bf16.msra.mxu0 0
    %1632 = vmatprep.subr.bf16.mxu0 0
    %1633 = vmatpush2.bf16.msra.mxu0 0
    %1634 = vmatprep.subr.bf16.mxu0 0
    %1635 = vmatpush2.bf16.msra.mxu0 0
    %1636 = vmatprep.subr.bf16.mxu0 0
    %1637 = vmatpush2.bf16.msra.mxu0 0
    %1638 = vmatprep.subr.bf16.mxu0 0
    %1639 = vmatpush2.bf16.msra.mxu0 0
    %1640 = vmatprep.mubr.bf16.mxu0 0
    %1641 = vmatmul.mubr.bf16.gmra.mxu0 %v1606
    %v1642 = vpop.f32.mrf.mxu0
    %v1643 = vadd.f32 %v58, %v1642
    %v1644 = vpop.f32.mrf.mxu0
    %v1645 = vpop.f32.mrf.mxu0
    %v1646 = vpop.f32.mrf.mxu0
    %1647 = vdwg.mxu0
    %v1648 = vtanh.pop %v1643
    %v1649 = vpack.c.bf16 %v1648, %v1648
    %v1651 = vsel %vm84, %v1649, 0
    %1653 = vmatprep.subr.bf16.mxu0 0
    %1654 = vmatpush1.bf16.msra.mxu0 0
    %1655 = vmatprep.subr.bf16.mxu0 0
    %1656 = vmatpush1.bf16.msra.mxu0 0
    %1657 = vmatprep.subr.bf16.mxu0 0
    %1658 = vmatpush1.bf16.msra.mxu0 0
    %1659 = vmatprep.subr.bf16.mxu0 0
    %1660 = vmatpush1.bf16.msra.mxu0 0
    %1661 = vmatprep.subr.bf16.mxu0 0
    %1662 = vmatpush1.bf16.msra.mxu0 0
    %1663 = vmatprep.subr.bf16.mxu0 0
    %1664 = vmatpush1.bf16.msra.mxu0 0
    %1665 = vmatprep.subr.bf16.mxu0 0
    %1666 = vmatpush1.bf16.msra.mxu0 %v139
    %1667 = vmatprep.subr.bf16.mxu0 0
    %1668 = vmatpush1.bf16.msra.mxu0 %v138
    %1669 = vmatprep.subr.bf16.mxu0 0
    %1670 = vmatpush2.bf16.msra.mxu0 0
    %1671 = vmatprep.subr.bf16.mxu0 0
    %1672 = vmatpush2.bf16.msra.mxu0 0
    %1673 = vmatprep.subr.bf16.mxu0 0
    %1674 = vmatpush2.bf16.msra.mxu0 0
    %1675 = vmatprep.subr.bf16.mxu0 0
    %1676 = vmatpush2.bf16.msra.mxu0 0
    %1677 = vmatprep.subr.bf16.mxu0 0
    %1678 = vmatpush2.bf16.msra.mxu0 0
    %1679 = vmatprep.subr.bf16.mxu0 0
    %1680 = vmatpush2.bf16.msra.mxu0 0
    %1681 = vmatprep.subr.bf16.mxu0 0
    %1682 = vmatpush2.bf16.msra.mxu0 0
    %1683 = vmatprep.subr.bf16.mxu0 0
    %1684 = vmatpush2.bf16.msra.mxu0 0
    %1685 = vmatprep.mubr.bf16.mxu0 0
    %1686 = vmatmul.mubr.bf16.gmra.mxu0 %v1651
    %v1687 = vpop.f32.mrf.mxu0
    %v1688 = vadd.f32 %v65, %v1687
    %v1689 = vpop.f32.mrf.mxu0
    %v1690 = vpop.f32.mrf.mxu0
    %v1691 = vpop.f32.mrf.mxu0
    %1692 = vdwg.mxu0
    %v1693 = vstv %s1602
    %v1694 = vmul.f32 %v1693, %v1688
    %v1695 = vadd.f32 %v1600, %v1694
    %v1696 = vpack.c.bf16 %v1695, %v1695
    %v1698 = vsel %vm84, %v1696, 0
    %1700 = vmatprep.subr.bf16.mxu0 0
    %1701 = vmatpush1.bf16.msra.mxu0 0
    %1702 = vmatprep.subr.bf16.mxu0 0
    %1703 = vmatpush1.bf16.msra.mxu0 0
    %1704 = vmatprep.subr.bf16.mxu0 0
    %1705 = vmatpush1.bf16.msra.mxu0 0
    %1706 = vmatprep.subr.bf16.mxu0 0
    %1707 = vmatpush1.bf16.msra.mxu0 0
    %1708 = vmatprep.subr.bf16.mxu0 0
    %1709 = vmatpush1.bf16.msra.mxu0 0
    %1710 = vmatprep.subr.bf16.mxu0 0
    %1711 = vmatpush1.bf16.msra.mxu0 0
    %1712 = vmatprep.subr.bf16.mxu0 0
    %1713 = vmatpush1.bf16.msra.mxu0 %v81
    %1714 = vmatprep.subr.bf16.mxu0 0
    %1715 = vmatpush1.bf16.msra.mxu0 %v80
    %1716 = vmatprep.subr.bf16.mxu0 0
    %1717 = vmatpush2.bf16.msra.mxu0 0
    %1718 = vmatprep.subr.bf16.mxu0 0
    %1719 = vmatpush2.bf16.msra.mxu0 0
    %1720 = vmatprep.subr.bf16.mxu0 0
    %1721 = vmatpush2.bf16.msra.mxu0 0
    %1722 = vmatprep.subr.bf16.mxu0 0
    %1723 = vmatpush2.bf16.msra.mxu0 0
    %1724 = vmatprep.subr.bf16.mxu0 0
    %1725 = vmatpush2.bf16.msra.mxu0 0
    %1726 = vmatprep.subr.bf16.mxu0 0
    %1727 = vmatpush2.bf16.msra.mxu0 0
    %1728 = vmatprep.subr.bf16.mxu0 0
    %1729 = vmatpush2.bf16.msra.mxu0 0
    %1730 = vmatprep.subr.bf16.mxu0 0
    %1731 = vmatpush2.bf16.msra.mxu0 0
    %1732 = vmatprep.mubr.bf16.mxu0 0
    %1733 = vmatmul.mubr.bf16.gmra.mxu0 %v1698
    %v1734 = vpop.f32.mrf.mxu0
    %v1735 = vadd.f32 %v58, %v1734
    %v1736 = vpop.f32.mrf.mxu0
    %v1737 = vpop.f32.mrf.mxu0
    %v1738 = vpop.f32.mrf.mxu0
    %1739 = vdwg.mxu0
    %v1740 = vtanh.pop %v1735
    %v1741 = vpack.c.bf16 %v1740, %v1740
    %v1743 = vsel %vm84, %v1741, 0
    %1745 = vmatprep.subr.bf16.mxu0 0
    %1746 = vmatpush1.bf16.msra.mxu0 0
    %1747 = vmatprep.subr.bf16.mxu0 0
    %1748 = vmatpush1.bf16.msra.mxu0 0
    %1749 = vmatprep.subr.bf16.mxu0 0
    %1750 = vmatpush1.bf16.msra.mxu0 0
    %1751 = vmatprep.subr.bf16.mxu0 0
    %1752 = vmatpush1.bf16.msra.mxu0 0
    %1753 = vmatprep.subr.bf16.mxu0 0
    %1754 = vmatpush1.bf16.msra.mxu0 0
    %1755 = vmatprep.subr.bf16.mxu0 0
    %1756 = vmatpush1.bf16.msra.mxu0 0
    %1757 = vmatprep.subr.bf16.mxu0 0
    %1758 = vmatpush1.bf16.msra.mxu0 %v139
    %1759 = vmatprep.subr.bf16.mxu0 0
    %1760 = vmatpush1.bf16.msra.mxu0 %v138
    %1761 = vmatprep.subr.bf16.mxu0 0
    %1762 = vmatpush2.bf16.msra.mxu0 0
    %1763 = vmatprep.subr.bf16.mxu0 0
    %1764 = vmatpush2.bf16.msra.mxu0 0
    %1765 = vmatprep.subr.bf16.mxu0 0
    %1766 = vmatpush2.bf16.msra.mxu0 0
    %1767 = vmatprep.subr.bf16.mxu0 0
    %1768 = vmatpush2.bf16.msra.mxu0 0
    %1769 = vmatprep.subr.bf16.mxu0 0
    %1770 = vmatpush2.bf16.msra.mxu0 0
    %1771 = vmatprep.subr.bf16.mxu0 0
    %1772 = vmatpush2.bf16.msra.mxu0 0
    %1773 = vmatprep.subr.bf16.mxu0 0
    %1774 = vmatpush2.bf16.msra.mxu0 0
    %1775 = vmatprep.subr.bf16.mxu0 0
    %1776 = vmatpush2.bf16.msra.mxu0 0
    %1777 = vmatprep.mubr.bf16.mxu0 0
    %1778 = vmatmul.mubr.bf16.gmra.mxu0 %v1743
    %v1779 = vpop.f32.mrf.mxu0
    %v1780 = vadd.f32 %v65, %v1779
    %v1781 = vpop.f32.mrf.mxu0
    %v1782 = vpop.f32.mrf.mxu0
    %v1783 = vpop.f32.mrf.mxu0
    %1784 = vdwg.mxu0
    %v1785 = vstv %s1601
    %v1786 = vmul.f32 %v1785, %v1780
    %v1787 = vadd.f32 %v1600, %v1786
    %v1788 = vsub.f32 %v1787, %v1694
    %v1789 = vpack.c.bf16 %v1788, %v1788
    %v1791 = vsel %vm84, %v1789, 0
    %1793 = vmatprep.subr.bf16.mxu0 0
    %1794 = vmatpush1.bf16.msra.mxu0 0
    %1795 = vmatprep.subr.bf16.mxu0 0
    %1796 = vmatpush1.bf16.msra.mxu0 0
    %1797 = vmatprep.subr.bf16.mxu0 0
    %1798 = vmatpush1.bf16.msra.mxu0 0
    %1799 = vmatprep.subr.bf16.mxu0 0
    %1800 = vmatpush1.bf16.msra.mxu0 0
    %1801 = vmatprep.subr.bf16.mxu0 0
    %1802 = vmatpush1.bf16.msra.mxu0 0
    %1803 = vmatprep.subr.bf16.mxu0 0
    %1804 = vmatpush1.bf16.msra.mxu0 0
    %1805 = vmatprep.subr.bf16.mxu0 0
    %1806 = vmatpush1.bf16.msra.mxu0 %v81
    %1807 = vmatprep.subr.bf16.mxu0 0
    %1808 = vmatpush1.bf16.msra.mxu0 %v80
    %1809 = vmatprep.subr.bf16.mxu0 0
    %1810 = vmatpush2.bf16.msra.mxu0 0
    %1811 = vmatprep.subr.bf16.mxu0 0
    %1812 = vmatpush2.bf16.msra.mxu0 0
    %1813 = vmatprep.subr.bf16.mxu0 0
    %1814 = vmatpush2.bf16.msra.mxu0 0
    %1815 = vmatprep.subr.bf16.mxu0 0
    %1816 = vmatpush2.bf16.msra.mxu0 0
    %1817 = vmatprep.subr.bf16.mxu0 0
    %1818 = vmatpush2.bf16.msra.mxu0 0
    %1819 = vmatprep.subr.bf16.mxu0 0
    %1820 = vmatpush2.bf16.msra.mxu0 0
    %1821 = vmatprep.subr.bf16.mxu0 0
    %1822 = vmatpush2.bf16.msra.mxu0 0
    %1823 = vmatprep.subr.bf16.mxu0 0
    %1824 = vmatpush2.bf16.msra.mxu0 0
    %1825 = vmatprep.mubr.bf16.mxu0 0
    %1826 = vmatmul.mubr.bf16.gmra.mxu0 %v1791
    %v1827 = vpop.f32.mrf.mxu0
    %v1828 = vadd.f32 %v58, %v1827
    %v1829 = vpop.f32.mrf.mxu0
    %v1830 = vpop.f32.mrf.mxu0
    %v1831 = vpop.f32.mrf.mxu0
    %1832 = vdwg.mxu0
    %v1833 = vtanh.pop %v1828
    %v1834 = vpack.c.bf16 %v1833, %v1833
    %v1836 = vsel %vm84, %v1834, 0
    %1838 = vmatprep.subr.bf16.mxu0 0
    %1839 = vmatpush1.bf16.msra.mxu0 0
    %1840 = vmatprep.subr.bf16.mxu0 0
    %1841 = vmatpush1.bf16.msra.mxu0 0
    %1842 = vmatprep.subr.bf16.mxu0 0
    %1843 = vmatpush1.bf16.msra.mxu0 0
    %1844 = vmatprep.subr.bf16.mxu0 0
    %1845 = vmatpush1.bf16.msra.mxu0 0
    %1846 = vmatprep.subr.bf16.mxu0 0
    %1847 = vmatpush1.bf16.msra.mxu0 0
    %1848 = vmatprep.subr.bf16.mxu0 0
    %1849 = vmatpush1.bf16.msra.mxu0 0
    %1850 = vmatprep.subr.bf16.mxu0 0
    %1851 = vmatpush1.bf16.msra.mxu0 %v139
    %1852 = vmatprep.subr.bf16.mxu0 0
    %1853 = vmatpush1.bf16.msra.mxu0 %v138
    %1854 = vmatprep.subr.bf16.mxu0 0
    %1855 = vmatpush2.bf16.msra.mxu0 0
    %1856 = vmatprep.subr.bf16.mxu0 0
    %1857 = vmatpush2.bf16.msra.mxu0 0
    %1858 = vmatprep.subr.bf16.mxu0 0
    %1859 = vmatpush2.bf16.msra.mxu0 0
    %1860 = vmatprep.subr.bf16.mxu0 0
    %1861 = vmatpush2.bf16.msra.mxu0 0
    %1862 = vmatprep.subr.bf16.mxu0 0
    %1863 = vmatpush2.bf16.msra.mxu0 0
    %1864 = vmatprep.subr.bf16.mxu0 0
    %1865 = vmatpush2.bf16.msra.mxu0 0
    %1866 = vmatprep.subr.bf16.mxu0 0
    %1867 = vmatpush2.bf16.msra.mxu0 0
    %1868 = vmatprep.subr.bf16.mxu0 0
    %1869 = vmatpush2.bf16.msra.mxu0 0
    %1870 = vmatprep.mubr.bf16.mxu0 0
    %1871 = vmatmul.mubr.bf16.gmra.mxu0 %v1836
    %v1872 = vpop.f32.mrf.mxu0
    %v1873 = vadd.f32 %v65, %v1872
    %v1874 = vpop.f32.mrf.mxu0
    %v1875 = vpop.f32.mrf.mxu0
    %v1876 = vpop.f32.mrf.mxu0
    %1877 = vdwg.mxu0
    %v1878 = vsub.f32 %v1688, %v1780
    %v1879 = vadd.f32 %v1878, %v1873
    %v1880 = vmul.f32 %v1785, %v1879
    %v1881 = vadd.f32 %v1600, %v1880
    %v1882 = vpack.c.bf16 %v1881, %v1881
    %v1884 = vsel %vm84, %v1882, 0
    %1886 = vmatprep.subr.bf16.mxu0 0
    %1887 = vmatpush1.bf16.msra.mxu0 0
    %1888 = vmatprep.subr.bf16.mxu0 0
    %1889 = vmatpush1.bf16.msra.mxu0 0
    %1890 = vmatprep.subr.bf16.mxu0 0
    %1891 = vmatpush1.bf16.msra.mxu0 0
    %1892 = vmatprep.subr.bf16.mxu0 0
    %1893 = vmatpush1.bf16.msra.mxu0 0
    %1894 = vmatprep.subr.bf16.mxu0 0
    %1895 = vmatpush1.bf16.msra.mxu0 0
    %1896 = vmatprep.subr.bf16.mxu0 0
    %1897 = vmatpush1.bf16.msra.mxu0 0
    %1898 = vmatprep.subr.bf16.mxu0 0
    %1899 = vmatpush1.bf16.msra.mxu0 %v81
    %1900 = vmatprep.subr.bf16.mxu0 0
    %1901 = vmatpush1.bf16.msra.mxu0 %v80
    %1902 = vmatprep.subr.bf16.mxu0 0
    %1903 = vmatpush2.bf16.msra.mxu0 0
    %1904 = vmatprep.subr.bf16.mxu0 0
    %1905 = vmatpush2.bf16.msra.mxu0 0
    %1906 = vmatprep.subr.bf16.mxu0 0
    %1907 = vmatpush2.bf16.msra.mxu0 0
    %1908 = vmatprep.subr.bf16.mxu0 0
    %1909 = vmatpush2.bf16.msra.mxu0 0
    %1910 = vmatprep.subr.bf16.mxu0 0
    %1911 = vmatpush2.bf16.msra.mxu0 0
    %1912 = vmatprep.subr.bf16.mxu0 0
    %1913 = vmatpush2.bf16.msra.mxu0 0
    %1914 = vmatprep.subr.bf16.mxu0 0
    %1915 = vmatpush2.bf16.msra.mxu0 0
    %1916 = vmatprep.subr.bf16.mxu0 0
    %1917 = vmatpush2.bf16.msra.mxu0 0
    %1918 = vmatprep.mubr.bf16.mxu0 0
    %1919 = vmatmul.mubr.bf16.gmra.mxu0 %v1884
    %v1920 = vpop.f32.mrf.mxu0
    %v1921 = vadd.f32 %v58, %v1920
    %v1922 = vpop.f32.mrf.mxu0
    %v1923 = vpop.f32.mrf.mxu0
    %v1924 = vpop.f32.mrf.mxu0
    %1925 = vdwg.mxu0
    %v1926 = vtanh.pop %v1921
    %v1927 = vpack.c.bf16 %v1926, %v1926
    %v1929 = vsel %vm84, %v1927, 0
    %1931 = vmatprep.subr.bf16.mxu0 0
    %1932 = vmatpush1.bf16.msra.mxu0 0
    %1933 = vmatprep.subr.bf16.mxu0 0
    %1934 = vmatpush1.bf16.msra.mxu0 0
    %1935 = vmatprep.subr.bf16.mxu0 0
    %1936 = vmatpush1.bf16.msra.mxu0 0
    %1937 = vmatprep.subr.bf16.mxu0 0
    %1938 = vmatpush1.bf16.msra.mxu0 0
    %1939 = vmatprep.subr.bf16.mxu0 0
    %1940 = vmatpush1.bf16.msra.mxu0 0
    %1941 = vmatprep.subr.bf16.mxu0 0
    %1942 = vmatpush1.bf16.msra.mxu0 0
    %1943 = vmatprep.subr.bf16.mxu0 0
    %1944 = vmatpush1.bf16.msra.mxu0 %v139
    %1945 = vmatprep.subr.bf16.mxu0 0
    %1946 = vmatpush1.bf16.msra.mxu0 %v138
    %1947 = vmatprep.subr.bf16.mxu0 0
    %1948 = vmatpush2.bf16.msra.mxu0 0
    %1949 = vmatprep.subr.bf16.mxu0 0
    %1950 = vmatpush2.bf16.msra.mxu0 0
    %1951 = vmatprep.subr.bf16.mxu0 0
    %1952 = vmatpush2.bf16.msra.mxu0 0
    %1953 = vmatprep.subr.bf16.mxu0 0
    %1954 = vmatpush2.bf16.msra.mxu0 0
    %1955 = vmatprep.subr.bf16.mxu0 0
    %1956 = vmatpush2.bf16.msra.mxu0 0
    %1957 = vmatprep.subr.bf16.mxu0 0
    %1958 = vmatpush2.bf16.msra.mxu0 0
    %1959 = vmatprep.subr.bf16.mxu0 0
    %1960 = vmatpush2.bf16.msra.mxu0 0
    %1961 = vmatprep.subr.bf16.mxu0 0
    %1962 = vmatpush2.bf16.msra.mxu0 0
    %1963 = vmatprep.mubr.bf16.mxu0 0
    %1964 = vmatmul.mubr.bf16.gmra.mxu0 %v1929
    %v1965 = vpop.f32.mrf.mxu0
    %v1966 = vadd.f32 %v65, %v1965
    %v1967 = vpop.f32.mrf.mxu0
    %v1968 = vpop.f32.mrf.mxu0
    %v1969 = vpop.f32.mrf.mxu0
    %1970 = vdwg.mxu0
    %v1971 = vadd.f32 %v1780, %v1873
    %v1972 = vmul.f32 %v1971, 3.0
    %v1973 = vadd.f32 %v1688, %v1972
    %v1974 = vadd.f32 %v1973, %v1966
    %v1975 = vstv %s1603
    %v1976 = vmul.f32 %v1975, %v1974
    %v1977 = vadd.f32 %v1600, %v1976
    %s1978 = sld [smem:[#allocation3 + $0x5]]
    %s1979 = sld [smem:[#allocation4 + $0x5]]
    %s1980 = sld [smem:[#allocation5 + $0x5]]
    %v1981 = vpack.c.bf16 %v1977, %v1977
    %v1983 = vsel %vm84, %v1981, 0
    %1985 = vmatprep.subr.bf16.mxu0 0
    %1986 = vmatpush1.bf16.msra.mxu0 0
    %1987 = vmatprep.subr.bf16.mxu0 0
    %1988 = vmatpush1.bf16.msra.mxu0 0
    %1989 = vmatprep.subr.bf16.mxu0 0
    %1990 = vmatpush1.bf16.msra.mxu0 0
    %1991 = vmatprep.subr.bf16.mxu0 0
    %1992 = vmatpush1.bf16.msra.mxu0 0
    %1993 = vmatprep.subr.bf16.mxu0 0
    %1994 = vmatpush1.bf16.msra.mxu0 0
    %1995 = vmatprep.subr.bf16.mxu0 0
    %1996 = vmatpush1.bf16.msra.mxu0 0
    %1997 = vmatprep.subr.bf16.mxu0 0
    %1998 = vmatpush1.bf16.msra.mxu0 %v81
    %1999 = vmatprep.subr.bf16.mxu0 0
    %2000 = vmatpush1.bf16.msra.mxu0 %v80
    %2001 = vmatprep.subr.bf16.mxu0 0
    %2002 = vmatpush2.bf16.msra.mxu0 0
    %2003 = vmatprep.subr.bf16.mxu0 0
    %2004 = vmatpush2.bf16.msra.mxu0 0
    %2005 = vmatprep.subr.bf16.mxu0 0
    %2006 = vmatpush2.bf16.msra.mxu0 0
    %2007 = vmatprep.subr.bf16.mxu0 0
    %2008 = vmatpush2.bf16.msra.mxu0 0
    %2009 = vmatprep.subr.bf16.mxu0 0
    %2010 = vmatpush2.bf16.msra.mxu0 0
    %2011 = vmatprep.subr.bf16.mxu0 0
    %2012 = vmatpush2.bf16.msra.mxu0 0
    %2013 = vmatprep.subr.bf16.mxu0 0
    %2014 = vmatpush2.bf16.msra.mxu0 0
    %2015 = vmatprep.subr.bf16.mxu0 0
    %2016 = vmatpush2.bf16.msra.mxu0 0
    %2017 = vmatprep.mubr.bf16.mxu0 0
    %2018 = vmatmul.mubr.bf16.gmra.mxu0 %v1983
    %v2019 = vpop.f32.mrf.mxu0
    %v2020 = vadd.f32 %v58, %v2019
    %v2021 = vpop.f32.mrf.mxu0
    %v2022 = vpop.f32.mrf.mxu0
    %v2023 = vpop.f32.mrf.mxu0
    %2024 = vdwg.mxu0
    %v2025 = vtanh.pop %v2020
    %v2026 = vpack.c.bf16 %v2025, %v2025
    %v2028 = vsel %vm84, %v2026, 0
    %2030 = vmatprep.subr.bf16.mxu0 0
    %2031 = vmatpush1.bf16.msra.mxu0 0
    %2032 = vmatprep.subr.bf16.mxu0 0
    %2033 = vmatpush1.bf16.msra.mxu0 0
    %2034 = vmatprep.subr.bf16.mxu0 0
    %2035 = vmatpush1.bf16.msra.mxu0 0
    %2036 = vmatprep.subr.bf16.mxu0 0
    %2037 = vmatpush1.bf16.msra.mxu0 0
    %2038 = vmatprep.subr.bf16.mxu0 0
    %2039 = vmatpush1.bf16.msra.mxu0 0
    %2040 = vmatprep.subr.bf16.mxu0 0
    %2041 = vmatpush1.bf16.msra.mxu0 0
    %2042 = vmatprep.subr.bf16.mxu0 0
    %2043 = vmatpush1.bf16.msra.mxu0 %v139
    %2044 = vmatprep.subr.bf16.mxu0 0
    %2045 = vmatpush1.bf16.msra.mxu0 %v138
    %2046 = vmatprep.subr.bf16.mxu0 0
    %2047 = vmatpush2.bf16.msra.mxu0 0
    %2048 = vmatprep.subr.bf16.mxu0 0
    %2049 = vmatpush2.bf16.msra.mxu0 0
    %2050 = vmatprep.subr.bf16.mxu0 0
    %2051 = vmatpush2.bf16.msra.mxu0 0
    %2052 = vmatprep.subr.bf16.mxu0 0
    %2053 = vmatpush2.bf16.msra.mxu0 0
    %2054 = vmatprep.subr.bf16.mxu0 0
    %2055 = vmatpush2.bf16.msra.mxu0 0
    %2056 = vmatprep.subr.bf16.mxu0 0
    %2057 = vmatpush2.bf16.msra.mxu0 0
    %2058 = vmatprep.subr.bf16.mxu0 0
    %2059 = vmatpush2.bf16.msra.mxu0 0
    %2060 = vmatprep.subr.bf16.mxu0 0
    %2061 = vmatpush2.bf16.msra.mxu0 0
    %2062 = vmatprep.mubr.bf16.mxu0 0
    %2063 = vmatmul.mubr.bf16.gmra.mxu0 %v2028
    %v2064 = vpop.f32.mrf.mxu0
    %v2065 = vadd.f32 %v65, %v2064
    %v2066 = vpop.f32.mrf.mxu0
    %v2067 = vpop.f32.mrf.mxu0
    %v2068 = vpop.f32.mrf.mxu0
    %2069 = vdwg.mxu0
    %v2070 = vstv %s1979
    %v2071 = vmul.f32 %v2070, %v2065
    %v2072 = vadd.f32 %v1977, %v2071
    %v2073 = vpack.c.bf16 %v2072, %v2072
    %v2075 = vsel %vm84, %v2073, 0
    %2077 = vmatprep.subr.bf16.mxu0 0
    %2078 = vmatpush1.bf16.msra.mxu0 0
    %2079 = vmatprep.subr.bf16.mxu0 0
    %2080 = vmatpush1.bf16.msra.mxu0 0
    %2081 = vmatprep.subr.bf16.mxu0 0
    %2082 = vmatpush1.bf16.msra.mxu0 0
    %2083 = vmatprep.subr.bf16.mxu0 0
    %2084 = vmatpush1.bf16.msra.mxu0 0
    %2085 = vmatprep.subr.bf16.mxu0 0
    %2086 = vmatpush1.bf16.msra.mxu0 0
    %2087 = vmatprep.subr.bf16.mxu0 0
    %2088 = vmatpush1.bf16.msra.mxu0 0
    %2089 = vmatprep.subr.bf16.mxu0 0
    %2090 = vmatpush1.bf16.msra.mxu0 %v81
    %2091 = vmatprep.subr.bf16.mxu0 0
    %2092 = vmatpush1.bf16.msra.mxu0 %v80
    %2093 = vmatprep.subr.bf16.mxu0 0
    %2094 = vmatpush2.bf16.msra.mxu0 0
    %2095 = vmatprep.subr.bf16.mxu0 0
    %2096 = vmatpush2.bf16.msra.mxu0 0
    %2097 = vmatprep.subr.bf16.mxu0 0
    %2098 = vmatpush2.bf16.msra.mxu0 0
    %2099 = vmatprep.subr.bf16.mxu0 0
    %2100 = vmatpush2.bf16.msra.mxu0 0
    %2101 = vmatprep.subr.bf16.mxu0 0
    %2102 = vmatpush2.bf16.msra.mxu0 0
    %2103 = vmatprep.subr.bf16.mxu0 0
    %2104 = vmatpush2.bf16.msra.mxu0 0
    %2105 = vmatprep.subr.bf16.mxu0 0
    %2106 = vmatpush2.bf16.msra.mxu0 0
    %2107 = vmatprep.subr.bf16.mxu0 0
    %2108 = vmatpush2.bf16.msra.mxu0 0
    %2109 = vmatprep.mubr.bf16.mxu0 0
    %2110 = vmatmul.mubr.bf16.gmra.mxu0 %v2075
    %v2111 = vpop.f32.mrf.mxu0
    %v2112 = vadd.f32 %v58, %v2111
    %v2113 = vpop.f32.mrf.mxu0
    %v2114 = vpop.f32.mrf.mxu0
    %v2115 = vpop.f32.mrf.mxu0
    %2116 = vdwg.mxu0
    %v2117 = vtanh.pop %v2112
    %v2118 = vpack.c.bf16 %v2117, %v2117
    %v2120 = vsel %vm84, %v2118, 0
    %2122 = vmatprep.subr.bf16.mxu0 0
    %2123 = vmatpush1.bf16.msra.mxu0 0
    %2124 = vmatprep.subr.bf16.mxu0 0
    %2125 = vmatpush1.bf16.msra.mxu0 0
    %2126 = vmatprep.subr.bf16.mxu0 0
    %2127 = vmatpush1.bf16.msra.mxu0 0
    %2128 = vmatprep.subr.bf16.mxu0 0
    %2129 = vmatpush1.bf16.msra.mxu0 0
    %2130 = vmatprep.subr.bf16.mxu0 0
    %2131 = vmatpush1.bf16.msra.mxu0 0
    %2132 = vmatprep.subr.bf16.mxu0 0
    %2133 = vmatpush1.bf16.msra.mxu0 0
    %2134 = vmatprep.subr.bf16.mxu0 0
    %2135 = vmatpush1.bf16.msra.mxu0 %v139
    %2136 = vmatprep.subr.bf16.mxu0 0
    %2137 = vmatpush1.bf16.msra.mxu0 %v138
    %2138 = vmatprep.subr.bf16.mxu0 0
    %2139 = vmatpush2.bf16.msra.mxu0 0
    %2140 = vmatprep.subr.bf16.mxu0 0
    %2141 = vmatpush2.bf16.msra.mxu0 0
    %2142 = vmatprep.subr.bf16.mxu0 0
    %2143 = vmatpush2.bf16.msra.mxu0 0
    %2144 = vmatprep.subr.bf16.mxu0 0
    %2145 = vmatpush2.bf16.msra.mxu0 0
    %2146 = vmatprep.subr.bf16.mxu0 0
    %2147 = vmatpush2.bf16.msra.mxu0 0
    %2148 = vmatprep.subr.bf16.mxu0 0
    %2149 = vmatpush2.bf16.msra.mxu0 0
    %2150 = vmatprep.subr.bf16.mxu0 0
    %2151 = vmatpush2.bf16.msra.mxu0 0
    %2152 = vmatprep.subr.bf16.mxu0 0
    %2153 = vmatpush2.bf16.msra.mxu0 0
    %2154 = vmatprep.mubr.bf16.mxu0 0
    %2155 = vmatmul.mubr.bf16.gmra.mxu0 %v2120
    %v2156 = vpop.f32.mrf.mxu0
    %v2157 = vadd.f32 %v65, %v2156
    %v2158 = vpop.f32.mrf.mxu0
    %v2159 = vpop.f32.mrf.mxu0
    %v2160 = vpop.f32.mrf.mxu0
    %2161 = vdwg.mxu0
    %v2162 = vstv %s1978
    %v2163 = vmul.f32 %v2162, %v2157
    %v2164 = vadd.f32 %v1977, %v2163
    %v2165 = vsub.f32 %v2164, %v2071
    %v2166 = vpack.c.bf16 %v2165, %v2165
    %v2168 = vsel %vm84, %v2166, 0
    %2170 = vmatprep.subr.bf16.mxu0 0
    %2171 = vmatpush1.bf16.msra.mxu0 0
    %2172 = vmatprep.subr.bf16.mxu0 0
    %2173 = vmatpush1.bf16.msra.mxu0 0
    %2174 = vmatprep.subr.bf16.mxu0 0
    %2175 = vmatpush1.bf16.msra.mxu0 0
    %2176 = vmatprep.subr.bf16.mxu0 0
    %2177 = vmatpush1.bf16.msra.mxu0 0
    %2178 = vmatprep.subr.bf16.mxu0 0
    %2179 = vmatpush1.bf16.msra.mxu0 0
    %2180 = vmatprep.subr.bf16.mxu0 0
    %2181 = vmatpush1.bf16.msra.mxu0 0
    %2182 = vmatprep.subr.bf16.mxu0 0
    %2183 = vmatpush1.bf16.msra.mxu0 %v81
    %2184 = vmatprep.subr.bf16.mxu0 0
    %2185 = vmatpush1.bf16.msra.mxu0 %v80
    %2186 = vmatprep.subr.bf16.mxu0 0
    %2187 = vmatpush2.bf16.msra.mxu0 0
    %2188 = vmatprep.subr.bf16.mxu0 0
    %2189 = vmatpush2.bf16.msra.mxu0 0
    %2190 = vmatprep.subr.bf16.mxu0 0
    %2191 = vmatpush2.bf16.msra.mxu0 0
    %2192 = vmatprep.subr.bf16.mxu0 0
    %2193 = vmatpush2.bf16.msra.mxu0 0
    %2194 = vmatprep.subr.bf16.mxu0 0
    %2195 = vmatpush2.bf16.msra.mxu0 0
    %2196 = vmatprep.subr.bf16.mxu0 0
    %2197 = vmatpush2.bf16.msra.mxu0 0
    %2198 = vmatprep.subr.bf16.mxu0 0
    %2199 = vmatpush2.bf16.msra.mxu0 0
    %2200 = vmatprep.subr.bf16.mxu0 0
    %2201 = vmatpush2.bf16.msra.mxu0 0
    %2202 = vmatprep.mubr.bf16.mxu0 0
    %2203 = vmatmul.mubr.bf16.gmra.mxu0 %v2168
    %v2204 = vpop.f32.mrf.mxu0
    %v2205 = vadd.f32 %v58, %v2204
    %v2206 = vpop.f32.mrf.mxu0
    %v2207 = vpop.f32.mrf.mxu0
    %v2208 = vpop.f32.mrf.mxu0
    %2209 = vdwg.mxu0
    %v2210 = vtanh.pop %v2205
    %v2211 = vpack.c.bf16 %v2210, %v2210
    %v2213 = vsel %vm84, %v2211, 0
    %2215 = vmatprep.subr.bf16.mxu0 0
    %2216 = vmatpush1.bf16.msra.mxu0 0
    %2217 = vmatprep.subr.bf16.mxu0 0
    %2218 = vmatpush1.bf16.msra.mxu0 0
    %2219 = vmatprep.subr.bf16.mxu0 0
    %2220 = vmatpush1.bf16.msra.mxu0 0
    %2221 = vmatprep.subr.bf16.mxu0 0
    %2222 = vmatpush1.bf16.msra.mxu0 0
    %2223 = vmatprep.subr.bf16.mxu0 0
    %2224 = vmatpush1.bf16.msra.mxu0 0
    %2225 = vmatprep.subr.bf16.mxu0 0
    %2226 = vmatpush1.bf16.msra.mxu0 0
    %2227 = vmatprep.subr.bf16.mxu0 0
    %2228 = vmatpush1.bf16.msra.mxu0 %v139
    %2229 = vmatprep.subr.bf16.mxu0 0
    %2230 = vmatpush1.bf16.msra.mxu0 %v138
    %2231 = vmatprep.subr.bf16.mxu0 0
    %2232 = vmatpush2.bf16.msra.mxu0 0
    %2233 = vmatprep.subr.bf16.mxu0 0
    %2234 = vmatpush2.bf16.msra.mxu0 0
    %2235 = vmatprep.subr.bf16.mxu0 0
    %2236 = vmatpush2.bf16.msra.mxu0 0
    %2237 = vmatprep.subr.bf16.mxu0 0
    %2238 = vmatpush2.bf16.msra.mxu0 0
    %2239 = vmatprep.subr.bf16.mxu0 0
    %2240 = vmatpush2.bf16.msra.mxu0 0
    %2241 = vmatprep.subr.bf16.mxu0 0
    %2242 = vmatpush2.bf16.msra.mxu0 0
    %2243 = vmatprep.subr.bf16.mxu0 0
    %2244 = vmatpush2.bf16.msra.mxu0 0
    %2245 = vmatprep.subr.bf16.mxu0 0
    %2246 = vmatpush2.bf16.msra.mxu0 0
    %2247 = vmatprep.mubr.bf16.mxu0 0
    %2248 = vmatmul.mubr.bf16.gmra.mxu0 %v2213
    %v2249 = vpop.f32.mrf.mxu0
    %v2250 = vadd.f32 %v65, %v2249
    %v2251 = vpop.f32.mrf.mxu0
    %v2252 = vpop.f32.mrf.mxu0
    %v2253 = vpop.f32.mrf.mxu0
    %2254 = vdwg.mxu0
    %v2255 = vsub.f32 %v2065, %v2157
    %v2256 = vadd.f32 %v2255, %v2250
    %v2257 = vmul.f32 %v2162, %v2256
    %v2258 = vadd.f32 %v1977, %v2257
    %v2259 = vpack.c.bf16 %v2258, %v2258
    %v2261 = vsel %vm84, %v2259, 0
    %2263 = vmatprep.subr.bf16.mxu0 0
    %2264 = vmatpush1.bf16.msra.mxu0 0
    %2265 = vmatprep.subr.bf16.mxu0 0
    %2266 = vmatpush1.bf16.msra.mxu0 0
    %2267 = vmatprep.subr.bf16.mxu0 0
    %2268 = vmatpush1.bf16.msra.mxu0 0
    %2269 = vmatprep.subr.bf16.mxu0 0
    %2270 = vmatpush1.bf16.msra.mxu0 0
    %2271 = vmatprep.subr.bf16.mxu0 0
    %2272 = vmatpush1.bf16.msra.mxu0 0
    %2273 = vmatprep.subr.bf16.mxu0 0
    %2274 = vmatpush1.bf16.msra.mxu0 0
    %2275 = vmatprep.subr.bf16.mxu0 0
    %2276 = vmatpush1.bf16.msra.mxu0 %v81
    %2277 = vmatprep.subr.bf16.mxu0 0
    %2278 = vmatpush1.bf16.msra.mxu0 %v80
    %2279 = vmatprep.subr.bf16.mxu0 0
    %2280 = vmatpush2.bf16.msra.mxu0 0
    %2281 = vmatprep.subr.bf16.mxu0 0
    %2282 = vmatpush2.bf16.msra.mxu0 0
    %2283 = vmatprep.subr.bf16.mxu0 0
    %2284 = vmatpush2.bf16.msra.mxu0 0
    %2285 = vmatprep.subr.bf16.mxu0 0
    %2286 = vmatpush2.bf16.msra.mxu0 0
    %2287 = vmatprep.subr.bf16.mxu0 0
    %2288 = vmatpush2.bf16.msra.mxu0 0
    %2289 = vmatprep.subr.bf16.mxu0 0
    %2290 = vmatpush2.bf16.msra.mxu0 0
    %2291 = vmatprep.subr.bf16.mxu0 0
    %2292 = vmatpush2.bf16.msra.mxu0 0
    %2293 = vmatprep.subr.bf16.mxu0 0
    %2294 = vmatpush2.bf16.msra.mxu0 0
    %2295 = vmatprep.mubr.bf16.mxu0 0
    %2296 = vmatmul.mubr.bf16.gmra.mxu0 %v2261
    %v2297 = vpop.f32.mrf.mxu0
    %v2298 = vadd.f32 %v58, %v2297
    %v2299 = vpop.f32.mrf.mxu0
    %v2300 = vpop.f32.mrf.mxu0
    %v2301 = vpop.f32.mrf.mxu0
    %2302 = vdwg.mxu0
    %v2303 = vtanh.pop %v2298
    %v2304 = vpack.c.bf16 %v2303, %v2303
    %v2306 = vsel %vm84, %v2304, 0
    %2308 = vmatprep.subr.bf16.mxu0 0
    %2309 = vmatpush1.bf16.msra.mxu0 0
    %2310 = vmatprep.subr.bf16.mxu0 0
    %2311 = vmatpush1.bf16.msra.mxu0 0
    %2312 = vmatprep.subr.bf16.mxu0 0
    %2313 = vmatpush1.bf16.msra.mxu0 0
    %2314 = vmatprep.subr.bf16.mxu0 0
    %2315 = vmatpush1.bf16.msra.mxu0 0
    %2316 = vmatprep.subr.bf16.mxu0 0
    %2317 = vmatpush1.bf16.msra.mxu0 0
    %2318 = vmatprep.subr.bf16.mxu0 0
    %2319 = vmatpush1.bf16.msra.mxu0 0
    %2320 = vmatprep.subr.bf16.mxu0 0
    %2321 = vmatpush1.bf16.msra.mxu0 %v139
    %2322 = vmatprep.subr.bf16.mxu0 0
    %2323 = vmatpush1.bf16.msra.mxu0 %v138
    %2324 = vmatprep.subr.bf16.mxu0 0
    %2325 = vmatpush2.bf16.msra.mxu0 0
    %2326 = vmatprep.subr.bf16.mxu0 0
    %2327 = vmatpush2.bf16.msra.mxu0 0
    %2328 = vmatprep.subr.bf16.mxu0 0
    %2329 = vmatpush2.bf16.msra.mxu0 0
    %2330 = vmatprep.subr.bf16.mxu0 0
    %2331 = vmatpush2.bf16.msra.mxu0 0
    %2332 = vmatprep.subr.bf16.mxu0 0
    %2333 = vmatpush2.bf16.msra.mxu0 0
    %2334 = vmatprep.subr.bf16.mxu0 0
    %2335 = vmatpush2.bf16.msra.mxu0 0
    %2336 = vmatprep.subr.bf16.mxu0 0
    %2337 = vmatpush2.bf16.msra.mxu0 0
    %2338 = vmatprep.subr.bf16.mxu0 0
    %2339 = vmatpush2.bf16.msra.mxu0 0
    %2340 = vmatprep.mubr.bf16.mxu0 0
    %2341 = vmatmul.mubr.bf16.gmra.mxu0 %v2306
    %v2342 = vpop.f32.mrf.mxu0
    %v2343 = vadd.f32 %v65, %v2342
    %v2344 = vpop.f32.mrf.mxu0
    %v2345 = vpop.f32.mrf.mxu0
    %v2346 = vpop.f32.mrf.mxu0
    %2347 = vdwg.mxu0
    %v2348 = vadd.f32 %v2157, %v2250
    %v2349 = vmul.f32 %v2348, 3.0
    %v2350 = vadd.f32 %v2065, %v2349
    %v2351 = vadd.f32 %v2350, %v2343
    %v2352 = vstv %s1980
    %v2353 = vmul.f32 %v2352, %v2351
    %v2354 = vadd.f32 %v1977, %v2353
    %s2355 = sld [smem:[#allocation3 + $0x6]]
    %s2356 = sld [smem:[#allocation4 + $0x6]]
    %s2357 = sld [smem:[#allocation5 + $0x6]]
    %v2358 = vpack.c.bf16 %v2354, %v2354
    %v2360 = vsel %vm84, %v2358, 0
    %2362 = vmatprep.subr.bf16.mxu0 0
    %2363 = vmatpush1.bf16.msra.mxu0 0
    %2364 = vmatprep.subr.bf16.mxu0 0
    %2365 = vmatpush1.bf16.msra.mxu0 0
    %2366 = vmatprep.subr.bf16.mxu0 0
    %2367 = vmatpush1.bf16.msra.mxu0 0
    %2368 = vmatprep.subr.bf16.mxu0 0
    %2369 = vmatpush1.bf16.msra.mxu0 0
    %2370 = vmatprep.subr.bf16.mxu0 0
    %2371 = vmatpush1.bf16.msra.mxu0 0
    %2372 = vmatprep.subr.bf16.mxu0 0
    %2373 = vmatpush1.bf16.msra.mxu0 0
    %2374 = vmatprep.subr.bf16.mxu0 0
    %2375 = vmatpush1.bf16.msra.mxu0 %v81
    %2376 = vmatprep.subr.bf16.mxu0 0
    %2377 = vmatpush1.bf16.msra.mxu0 %v80
    %2378 = vmatprep.subr.bf16.mxu0 0
    %2379 = vmatpush2.bf16.msra.mxu0 0
    %2380 = vmatprep.subr.bf16.mxu0 0
    %2381 = vmatpush2.bf16.msra.mxu0 0
    %2382 = vmatprep.subr.bf16.mxu0 0
    %2383 = vmatpush2.bf16.msra.mxu0 0
    %2384 = vmatprep.subr.bf16.mxu0 0
    %2385 = vmatpush2.bf16.msra.mxu0 0
    %2386 = vmatprep.subr.bf16.mxu0 0
    %2387 = vmatpush2.bf16.msra.mxu0 0
    %2388 = vmatprep.subr.bf16.mxu0 0
    %2389 = vmatpush2.bf16.msra.mxu0 0
    %2390 = vmatprep.subr.bf16.mxu0 0
    %2391 = vmatpush2.bf16.msra.mxu0 0
    %2392 = vmatprep.subr.bf16.mxu0 0
    %2393 = vmatpush2.bf16.msra.mxu0 0
    %2394 = vmatprep.mubr.bf16.mxu0 0
    %2395 = vmatmul.mubr.bf16.gmra.mxu0 %v2360
    %v2396 = vpop.f32.mrf.mxu0
    %v2397 = vadd.f32 %v58, %v2396
    %v2398 = vpop.f32.mrf.mxu0
    %v2399 = vpop.f32.mrf.mxu0
    %v2400 = vpop.f32.mrf.mxu0
    %2401 = vdwg.mxu0
    %v2402 = vtanh.pop %v2397
    %v2403 = vpack.c.bf16 %v2402, %v2402
    %v2405 = vsel %vm84, %v2403, 0
    %2407 = vmatprep.subr.bf16.mxu0 0
    %2408 = vmatpush1.bf16.msra.mxu0 0
    %2409 = vmatprep.subr.bf16.mxu0 0
    %2410 = vmatpush1.bf16.msra.mxu0 0
    %2411 = vmatprep.subr.bf16.mxu0 0
    %2412 = vmatpush1.bf16.msra.mxu0 0
    %2413 = vmatprep.subr.bf16.mxu0 0
    %2414 = vmatpush1.bf16.msra.mxu0 0
    %2415 = vmatprep.subr.bf16.mxu0 0
    %2416 = vmatpush1.bf16.msra.mxu0 0
    %2417 = vmatprep.subr.bf16.mxu0 0
    %2418 = vmatpush1.bf16.msra.mxu0 0
    %2419 = vmatprep.subr.bf16.mxu0 0
    %2420 = vmatpush1.bf16.msra.mxu0 %v139
    %2421 = vmatprep.subr.bf16.mxu0 0
    %2422 = vmatpush1.bf16.msra.mxu0 %v138
    %2423 = vmatprep.subr.bf16.mxu0 0
    %2424 = vmatpush2.bf16.msra.mxu0 0
    %2425 = vmatprep.subr.bf16.mxu0 0
    %2426 = vmatpush2.bf16.msra.mxu0 0
    %2427 = vmatprep.subr.bf16.mxu0 0
    %2428 = vmatpush2.bf16.msra.mxu0 0
    %2429 = vmatprep.subr.bf16.mxu0 0
    %2430 = vmatpush2.bf16.msra.mxu0 0
    %2431 = vmatprep.subr.bf16.mxu0 0
    %2432 = vmatpush2.bf16.msra.mxu0 0
    %2433 = vmatprep.subr.bf16.mxu0 0
    %2434 = vmatpush2.bf16.msra.mxu0 0
    %2435 = vmatprep.subr.bf16.mxu0 0
    %2436 = vmatpush2.bf16.msra.mxu0 0
    %2437 = vmatprep.subr.bf16.mxu0 0
    %2438 = vmatpush2.bf16.msra.mxu0 0
    %2439 = vmatprep.mubr.bf16.mxu0 0
    %2440 = vmatmul.mubr.bf16.gmra.mxu0 %v2405
    %v2441 = vpop.f32.mrf.mxu0
    %v2442 = vadd.f32 %v65, %v2441
    %v2443 = vpop.f32.mrf.mxu0
    %v2444 = vpop.f32.mrf.mxu0
    %v2445 = vpop.f32.mrf.mxu0
    %2446 = vdwg.mxu0
    %v2447 = vstv %s2356
    %v2448 = vmul.f32 %v2447, %v2442
    %v2449 = vadd.f32 %v2354, %v2448
    %v2450 = vpack.c.bf16 %v2449, %v2449
    %v2452 = vsel %vm84, %v2450, 0
    %2454 = vmatprep.subr.bf16.mxu0 0
    %2455 = vmatpush1.bf16.msra.mxu0 0
    %2456 = vmatprep.subr.bf16.mxu0 0
    %2457 = vmatpush1.bf16.msra.mxu0 0
    %2458 = vmatprep.subr.bf16.mxu0 0
    %2459 = vmatpush1.bf16.msra.mxu0 0
    %2460 = vmatprep.subr.bf16.mxu0 0
    %2461 = vmatpush1.bf16.msra.mxu0 0
    %2462 = vmatprep.subr.bf16.mxu0 0
    %2463 = vmatpush1.bf16.msra.mxu0 0
    %2464 = vmatprep.subr.bf16.mxu0 0
    %2465 = vmatpush1.bf16.msra.mxu0 0
    %2466 = vmatprep.subr.bf16.mxu0 0
    %2467 = vmatpush1.bf16.msra.mxu0 %v81
    %2468 = vmatprep.subr.bf16.mxu0 0
    %2469 = vmatpush1.bf16.msra.mxu0 %v80
    %2470 = vmatprep.subr.bf16.mxu0 0
    %2471 = vmatpush2.bf16.msra.mxu0 0
    %2472 = vmatprep.subr.bf16.mxu0 0
    %2473 = vmatpush2.bf16.msra.mxu0 0
    %2474 = vmatprep.subr.bf16.mxu0 0
    %2475 = vmatpush2.bf16.msra.mxu0 0
    %2476 = vmatprep.subr.bf16.mxu0 0
    %2477 = vmatpush2.bf16.msra.mxu0 0
    %2478 = vmatprep.subr.bf16.mxu0 0
    %2479 = vmatpush2.bf16.msra.mxu0 0
    %2480 = vmatprep.subr.bf16.mxu0 0
    %2481 = vmatpush2.bf16.msra.mxu0 0
    %2482 = vmatprep.subr.bf16.mxu0 0
    %2483 = vmatpush2.bf16.msra.mxu0 0
    %2484 = vmatprep.subr.bf16.mxu0 0
    %2485 = vmatpush2.bf16.msra.mxu0 0
    %2486 = vmatprep.mubr.bf16.mxu0 0
    %2487 = vmatmul.mubr.bf16.gmra.mxu0 %v2452
    %v2488 = vpop.f32.mrf.mxu0
    %v2489 = vadd.f32 %v58, %v2488
    %v2490 = vpop.f32.mrf.mxu0
    %v2491 = vpop.f32.mrf.mxu0
    %v2492 = vpop.f32.mrf.mxu0
    %2493 = vdwg.mxu0
    %v2494 = vtanh.pop %v2489
    %v2495 = vpack.c.bf16 %v2494, %v2494
    %v2497 = vsel %vm84, %v2495, 0
    %2499 = vmatprep.subr.bf16.mxu0 0
    %2500 = vmatpush1.bf16.msra.mxu0 0
    %2501 = vmatprep.subr.bf16.mxu0 0
    %2502 = vmatpush1.bf16.msra.mxu0 0
    %2503 = vmatprep.subr.bf16.mxu0 0
    %2504 = vmatpush1.bf16.msra.mxu0 0
    %2505 = vmatprep.subr.bf16.mxu0 0
    %2506 = vmatpush1.bf16.msra.mxu0 0
    %2507 = vmatprep.subr.bf16.mxu0 0
    %2508 = vmatpush1.bf16.msra.mxu0 0
    %2509 = vmatprep.subr.bf16.mxu0 0
    %2510 = vmatpush1.bf16.msra.mxu0 0
    %2511 = vmatprep.subr.bf16.mxu0 0
    %2512 = vmatpush1.bf16.msra.mxu0 %v139
    %2513 = vmatprep.subr.bf16.mxu0 0
    %2514 = vmatpush1.bf16.msra.mxu0 %v138
    %2515 = vmatprep.subr.bf16.mxu0 0
    %2516 = vmatpush2.bf16.msra.mxu0 0
    %2517 = vmatprep.subr.bf16.mxu0 0
    %2518 = vmatpush2.bf16.msra.mxu0 0
    %2519 = vmatprep.subr.bf16.mxu0 0
    %2520 = vmatpush2.bf16.msra.mxu0 0
    %2521 = vmatprep.subr.bf16.mxu0 0
    %2522 = vmatpush2.bf16.msra.mxu0 0
    %2523 = vmatprep.subr.bf16.mxu0 0
    %2524 = vmatpush2.bf16.msra.mxu0 0
    %2525 = vmatprep.subr.bf16.mxu0 0
    %2526 = vmatpush2.bf16.msra.mxu0 0
    %2527 = vmatprep.subr.bf16.mxu0 0
    %2528 = vmatpush2.bf16.msra.mxu0 0
    %2529 = vmatprep.subr.bf16.mxu0 0
    %2530 = vmatpush2.bf16.msra.mxu0 0
    %2531 = vmatprep.mubr.bf16.mxu0 0
    %2532 = vmatmul.mubr.bf16.gmra.mxu0 %v2497
    %v2533 = vpop.f32.mrf.mxu0
    %v2534 = vadd.f32 %v65, %v2533
    %v2535 = vpop.f32.mrf.mxu0
    %v2536 = vpop.f32.mrf.mxu0
    %v2537 = vpop.f32.mrf.mxu0
    %2538 = vdwg.mxu0
    %v2539 = vstv %s2355
    %v2540 = vmul.f32 %v2539, %v2534
    %v2541 = vadd.f32 %v2354, %v2540
    %v2542 = vsub.f32 %v2541, %v2448
    %v2543 = vpack.c.bf16 %v2542, %v2542
    %v2545 = vsel %vm84, %v2543, 0
    %2547 = vmatprep.subr.bf16.mxu0 0
    %2548 = vmatpush1.bf16.msra.mxu0 0
    %2549 = vmatprep.subr.bf16.mxu0 0
    %2550 = vmatpush1.bf16.msra.mxu0 0
    %2551 = vmatprep.subr.bf16.mxu0 0
    %2552 = vmatpush1.bf16.msra.mxu0 0
    %2553 = vmatprep.subr.bf16.mxu0 0
    %2554 = vmatpush1.bf16.msra.mxu0 0
    %2555 = vmatprep.subr.bf16.mxu0 0
    %2556 = vmatpush1.bf16.msra.mxu0 0
    %2557 = vmatprep.subr.bf16.mxu0 0
    %2558 = vmatpush1.bf16.msra.mxu0 0
    %2559 = vmatprep.subr.bf16.mxu0 0
    %2560 = vmatpush1.bf16.msra.mxu0 %v81
    %2561 = vmatprep.subr.bf16.mxu0 0
    %2562 = vmatpush1.bf16.msra.mxu0 %v80
    %2563 = vmatprep.subr.bf16.mxu0 0
    %2564 = vmatpush2.bf16.msra.mxu0 0
    %2565 = vmatprep.subr.bf16.mxu0 0
    %2566 = vmatpush2.bf16.msra.mxu0 0
    %2567 = vmatprep.subr.bf16.mxu0 0
    %2568 = vmatpush2.bf16.msra.mxu0 0
    %2569 = vmatprep.subr.bf16.mxu0 0
    %2570 = vmatpush2.bf16.msra.mxu0 0
    %2571 = vmatprep.subr.bf16.mxu0 0
    %2572 = vmatpush2.bf16.msra.mxu0 0
    %2573 = vmatprep.subr.bf16.mxu0 0
    %2574 = vmatpush2.bf16.msra.mxu0 0
    %2575 = vmatprep.subr.bf16.mxu0 0
    %2576 = vmatpush2.bf16.msra.mxu0 0
    %2577 = vmatprep.subr.bf16.mxu0 0
    %2578 = vmatpush2.bf16.msra.mxu0 0
    %2579 = vmatprep.mubr.bf16.mxu0 0
    %2580 = vmatmul.mubr.bf16.gmra.mxu0 %v2545
    %v2581 = vpop.f32.mrf.mxu0
    %v2582 = vadd.f32 %v58, %v2581
    %v2583 = vpop.f32.mrf.mxu0
    %v2584 = vpop.f32.mrf.mxu0
    %v2585 = vpop.f32.mrf.mxu0
    %2586 = vdwg.mxu0
    %v2587 = vtanh.pop %v2582
    %v2588 = vpack.c.bf16 %v2587, %v2587
    %v2590 = vsel %vm84, %v2588, 0
    %2592 = vmatprep.subr.bf16.mxu0 0
    %2593 = vmatpush1.bf16.msra.mxu0 0
    %2594 = vmatprep.subr.bf16.mxu0 0
    %2595 = vmatpush1.bf16.msra.mxu0 0
    %2596 = vmatprep.subr.bf16.mxu0 0
    %2597 = vmatpush1.bf16.msra.mxu0 0
    %2598 = vmatprep.subr.bf16.mxu0 0
    %2599 = vmatpush1.bf16.msra.mxu0 0
    %2600 = vmatprep.subr.bf16.mxu0 0
    %2601 = vmatpush1.bf16.msra.mxu0 0
    %2602 = vmatprep.subr.bf16.mxu0 0
    %2603 = vmatpush1.bf16.msra.mxu0 0
    %2604 = vmatprep.subr.bf16.mxu0 0
    %2605 = vmatpush1.bf16.msra.mxu0 %v139
    %2606 = vmatprep.subr.bf16.mxu0 0
    %2607 = vmatpush1.bf16.msra.mxu0 %v138
    %2608 = vmatprep.subr.bf16.mxu0 0
    %2609 = vmatpush2.bf16.msra.mxu0 0
    %2610 = vmatprep.subr.bf16.mxu0 0
    %2611 = vmatpush2.bf16.msra.mxu0 0
    %2612 = vmatprep.subr.bf16.mxu0 0
    %2613 = vmatpush2.bf16.msra.mxu0 0
    %2614 = vmatprep.subr.bf16.mxu0 0
    %2615 = vmatpush2.bf16.msra.mxu0 0
    %2616 = vmatprep.subr.bf16.mxu0 0
    %2617 = vmatpush2.bf16.msra.mxu0 0
    %2618 = vmatprep.subr.bf16.mxu0 0
    %2619 = vmatpush2.bf16.msra.mxu0 0
    %2620 = vmatprep.subr.bf16.mxu0 0
    %2621 = vmatpush2.bf16.msra.mxu0 0
    %2622 = vmatprep.subr.bf16.mxu0 0
    %2623 = vmatpush2.bf16.msra.mxu0 0
    %2624 = vmatprep.mubr.bf16.mxu0 0
    %2625 = vmatmul.mubr.bf16.gmra.mxu0 %v2590
    %v2626 = vpop.f32.mrf.mxu0
    %v2627 = vadd.f32 %v65, %v2626
    %v2628 = vpop.f32.mrf.mxu0
    %v2629 = vpop.f32.mrf.mxu0
    %v2630 = vpop.f32.mrf.mxu0
    %2631 = vdwg.mxu0
    %v2632 = vsub.f32 %v2442, %v2534
    %v2633 = vadd.f32 %v2632, %v2627
    %v2634 = vmul.f32 %v2539, %v2633
    %v2635 = vadd.f32 %v2354, %v2634
    %v2636 = vpack.c.bf16 %v2635, %v2635
    %v2638 = vsel %vm84, %v2636, 0
    %2640 = vmatprep.subr.bf16.mxu0 0
    %2641 = vmatpush1.bf16.msra.mxu0 0
    %2642 = vmatprep.subr.bf16.mxu0 0
    %2643 = vmatpush1.bf16.msra.mxu0 0
    %2644 = vmatprep.subr.bf16.mxu0 0
    %2645 = vmatpush1.bf16.msra.mxu0 0
    %2646 = vmatprep.subr.bf16.mxu0 0
    %2647 = vmatpush1.bf16.msra.mxu0 0
    %2648 = vmatprep.subr.bf16.mxu0 0
    %2649 = vmatpush1.bf16.msra.mxu0 0
    %2650 = vmatprep.subr.bf16.mxu0 0
    %2651 = vmatpush1.bf16.msra.mxu0 0
    %2652 = vmatprep.subr.bf16.mxu0 0
    %2653 = vmatpush1.bf16.msra.mxu0 %v81
    %2654 = vmatprep.subr.bf16.mxu0 0
    %2655 = vmatpush1.bf16.msra.mxu0 %v80
    %2656 = vmatprep.subr.bf16.mxu0 0
    %2657 = vmatpush2.bf16.msra.mxu0 0
    %2658 = vmatprep.subr.bf16.mxu0 0
    %2659 = vmatpush2.bf16.msra.mxu0 0
    %2660 = vmatprep.subr.bf16.mxu0 0
    %2661 = vmatpush2.bf16.msra.mxu0 0
    %2662 = vmatprep.subr.bf16.mxu0 0
    %2663 = vmatpush2.bf16.msra.mxu0 0
    %2664 = vmatprep.subr.bf16.mxu0 0
    %2665 = vmatpush2.bf16.msra.mxu0 0
    %2666 = vmatprep.subr.bf16.mxu0 0
    %2667 = vmatpush2.bf16.msra.mxu0 0
    %2668 = vmatprep.subr.bf16.mxu0 0
    %2669 = vmatpush2.bf16.msra.mxu0 0
    %2670 = vmatprep.subr.bf16.mxu0 0
    %2671 = vmatpush2.bf16.msra.mxu0 0
    %2672 = vmatprep.mubr.bf16.mxu0 0
    %2673 = vmatmul.mubr.bf16.gmra.mxu0 %v2638
    %v2674 = vpop.f32.mrf.mxu0
    %v2675 = vadd.f32 %v58, %v2674
    %v2676 = vpop.f32.mrf.mxu0
    %v2677 = vpop.f32.mrf.mxu0
    %v2678 = vpop.f32.mrf.mxu0
    %2679 = vdwg.mxu0
    %v2680 = vtanh.pop %v2675
    %v2681 = vpack.c.bf16 %v2680, %v2680
    %v2683 = vsel %vm84, %v2681, 0
    %2685 = vmatprep.subr.bf16.mxu0 0
    %2686 = vmatpush1.bf16.msra.mxu0 0
    %2687 = vmatprep.subr.bf16.mxu0 0
    %2688 = vmatpush1.bf16.msra.mxu0 0
    %2689 = vmatprep.subr.bf16.mxu0 0
    %2690 = vmatpush1.bf16.msra.mxu0 0
    %2691 = vmatprep.subr.bf16.mxu0 0
    %2692 = vmatpush1.bf16.msra.mxu0 0
    %2693 = vmatprep.subr.bf16.mxu0 0
    %2694 = vmatpush1.bf16.msra.mxu0 0
    %2695 = vmatprep.subr.bf16.mxu0 0
    %2696 = vmatpush1.bf16.msra.mxu0 0
    %2697 = vmatprep.subr.bf16.mxu0 0
    %2698 = vmatpush1.bf16.msra.mxu0 %v139
    %2699 = vmatprep.subr.bf16.mxu0 0
    %2700 = vmatpush1.bf16.msra.mxu0 %v138
    %2701 = vmatprep.subr.bf16.mxu0 0
    %2702 = vmatpush2.bf16.msra.mxu0 0
    %2703 = vmatprep.subr.bf16.mxu0 0
    %2704 = vmatpush2.bf16.msra.mxu0 0
    %2705 = vmatprep.subr.bf16.mxu0 0
    %2706 = vmatpush2.bf16.msra.mxu0 0
    %2707 = vmatprep.subr.bf16.mxu0 0
    %2708 = vmatpush2.bf16.msra.mxu0 0
    %2709 = vmatprep.subr.bf16.mxu0 0
    %2710 = vmatpush2.bf16.msra.mxu0 0
    %2711 = vmatprep.subr.bf16.mxu0 0
    %2712 = vmatpush2.bf16.msra.mxu0 0
    %2713 = vmatprep.subr.bf16.mxu0 0
    %2714 = vmatpush2.bf16.msra.mxu0 0
    %2715 = vmatprep.subr.bf16.mxu0 0
    %2716 = vmatpush2.bf16.msra.mxu0 0
    %2717 = vmatprep.mubr.bf16.mxu0 0
    %2718 = vmatmul.mubr.bf16.gmra.mxu0 %v2683
    %v2719 = vpop.f32.mrf.mxu0
    %v2720 = vadd.f32 %v65, %v2719
    %v2721 = vpop.f32.mrf.mxu0
    %v2722 = vpop.f32.mrf.mxu0
    %v2723 = vpop.f32.mrf.mxu0
    %2724 = vdwg.mxu0
    %v2725 = vadd.f32 %v2534, %v2627
    %v2726 = vmul.f32 %v2725, 3.0
    %v2727 = vadd.f32 %v2442, %v2726
    %v2728 = vadd.f32 %v2727, %v2720
    %v2729 = vstv %s2357
    %v2730 = vmul.f32 %v2729, %v2728
    %v2731 = vadd.f32 %v2354, %v2730
    %v2732 = vld [vmem:[%s8] sm:$0xff]
    %v2733 = vld [vmem:[%s8 + $0x8] sm:$0xff]
    %v2734 = vld [vmem:[%s8 + $0x10] sm:$0xff]
    %v2735 = vld [vmem:[%s8 + $0x18] sm:$0xff]
    %v2736 = vld [vmem:[%s9] sm:$0x1]
    %v2738 = vlaneseq
    %v2739 = vshrl.u32 %v2738, 7
    %v2740 = vsub.s32 0, %v2739
    %v2741 = vrot.slane %v2736, %v2740
    %v2744 = vsel %vm84, %v2731, 0
    %2746 = vmatprep.subr.mxu0 0.0
    %2747 = vmatpush1.msra.mxu0 0.0
    %2748 = vmatprep.subr.mxu0 0.0
    %2749 = vmatpush1.msra.mxu0 0.0
    %2750 = vmatprep.subr.mxu0 0.0
    %2751 = vmatpush1.msra.mxu0 0.0
    %2752 = vmatprep.subr.mxu0 0.0
    %2753 = vmatpush1.msra.mxu0 0.0
    %2754 = vmatprep.subr.mxu0 0.0
    %2755 = vmatpush1.msra.mxu0 0.0
    %2756 = vmatprep.subr.mxu0 0.0
    %2757 = vmatpush1.msra.mxu0 0.0
    %2758 = vmatprep.subr.mxu0 0.0
    %2759 = vmatpush1.msra.mxu0 0.0
    %2760 = vmatprep.subr.mxu0 0.0
    %2761 = vmatpush1.msra.mxu0 0.0
    %2762 = vmatprep.subr.mxu0 0.0
    %2763 = vmatpush1.msra.mxu0 0.0
    %2764 = vmatprep.subr.mxu0 0.0
    %2765 = vmatpush1.msra.mxu0 0.0
    %2766 = vmatprep.subr.mxu0 0.0
    %2767 = vmatpush1.msra.mxu0 0.0
    %2768 = vmatprep.subr.mxu0 0.0
    %2769 = vmatpush1.msra.mxu0 0.0
    %2770 = vmatprep.subr.mxu0 0.0
    %2771 = vmatpush1.msra.mxu0 %v2735
    %2772 = vmatprep.subr.mxu0 0.0
    %2773 = vmatpush1.msra.mxu0 %v2734
    %2774 = vmatprep.subr.mxu0 0.0
    %2775 = vmatpush1.msra.mxu0 %v2733
    %2776 = vmatprep.subr.mxu0 0.0
    %2777 = vmatpush1.msra.mxu0 %v2732
    %2778 = vmatprep.subr.mxu0 0.0
    %2779 = vmatpush2.msra.mxu0 0.0
    %2780 = vmatprep.subr.mxu0 0.0
    %2781 = vmatpush2.msra.mxu0 0.0
    %2782 = vmatprep.subr.mxu0 0.0
    %2783 = vmatpush2.msra.mxu0 0.0
    %2784 = vmatprep.subr.mxu0 0.0
    %2785 = vmatpush2.msra.mxu0 0.0
    %2786 = vmatprep.subr.mxu0 0.0
    %2787 = vmatpush2.msra.mxu0 0.0
    %2788 = vmatprep.subr.mxu0 0.0
    %2789 = vmatpush2.msra.mxu0 0.0
    %2790 = vmatprep.subr.mxu0 0.0
    %2791 = vmatpush2.msra.mxu0 0.0
    %2792 = vmatprep.subr.mxu0 0.0
    %2793 = vmatpush2.msra.mxu0 0.0
    %2794 = vmatprep.subr.mxu0 0.0
    %2795 = vmatpush2.msra.mxu0 0.0
    %2796 = vmatprep.subr.mxu0 0.0
    %2797 = vmatpush2.msra.mxu0 0.0
    %2798 = vmatprep.subr.mxu0 0.0
    %2799 = vmatpush2.msra.mxu0 0.0
    %2800 = vmatprep.subr.mxu0 0.0
    %2801 = vmatpush2.msra.mxu0 0.0
    %2802 = vmatprep.subr.mxu0 0.0
    %2803 = vmatpush2.msra.mxu0 0.0
    %2804 = vmatprep.subr.mxu0 0.0
    %2805 = vmatpush2.msra.mxu0 0.0
    %2806 = vmatprep.subr.mxu0 0.0
    %2807 = vmatpush2.msra.mxu0 0.0
    %2808 = vmatprep.subr.mxu0 0.0
    %2809 = vmatpush2.msra.mxu0 0.0
    %2810 = vmatprep.mubr.f32.mxu0 0.0
    %2811 = vmatmul.mubr.f32.gmra.mxu0 %v2744
    %v2812 = vpop.f32.mrf.mxu0
    %v2813 = vadd.f32 %v2741, %v2812
    %v2814 = vpop.f32.mrf.mxu0
    %2815 = vdwg.mxu0
    %vm2816 = vcmask 60416
    %2817 = vst.msk [vmem:[#allocation6] sm:$0xf] %vm2816, %v2813
    // Predicated region
    $region30: #{tpu_custom_call.1} parent=1 // pred_check
      _
    $region31: #{tpu_custom_call.1} parent=1 // pred_check_branch
      %2819 = sbr.rel (0) target = $region33
    $region32: #{tpu_custom_call.1} parent=1 // pred_region
      %s2821 = ssub.s32 64, 64
      %2822 = vsyncadd [#allocation7], %s2821
      %s2824 = sshll.u32 [#allocation6], 4
      %s2825 = int_to_ptr.vmem [resolvable:$true] %s2824
      %2827 = dma.vmem_to_hbm [thread:$0]  %s2825, 64, %s10, [#allocation7]
    $region33: #{tpu_custom_call.1} parent=1 // pred_fallthru
      _
    // Predicated region
    $region34: #{tpu_custom_call.1} parent=1 // pred_check
      _
    $region35: #{tpu_custom_call.1} parent=1 // pred_check_branch
      %2829 = sbr.rel (0) target = $region37
    $region36: #{tpu_custom_call.1} parent=1 // pred_region
      %2830 = dma.done [#allocation7], 64
    $region37: #{tpu_custom_call.1} parent=1 // pred_fallthru
      _
    %2831 = vsyncpa [#allocation7], 1

</llo_original>
